<compile_context>
chip_gen: v7x
topology: tpu7x:2x2x1
jax: 0.10.0
libtpu: 0.0.40
codegen_flags: <defaults>
</compile_context>

<pallas_src>
import jax
import jax.numpy as jnp
from jax import lax
from jax.experimental import pallas as pl
from jax.experimental.pallas import tpu as pltpu


# ----------------------------------------------------------------------------
# Pallas kernel 1: per-batch transposed conv GEMM  relu(W @ P[b] + bias)
#   W: (C_out, K) bf16   P[b]: (K, M) bf16   bias: (C_out, 1) f32
#   out[b]: (C_out, M)   -- M = OH*OW is lane-dense, output is channel-major.
# ----------------------------------------------------------------------------
def _conv_gemm_kernel(w_ref, p_ref, b_ref, o_ref):
    acc = jnp.dot(w_ref[...], p_ref[...], preferred_element_type=jnp.float32)
    acc = jnp.maximum(acc + b_ref[...], 0.0)          # bias + ReLU in f32 (VPU)
    o_ref[...] = acc.astype(o_ref.dtype)


def conv_gemm(w, p, b, *, out_dtype=jnp.bfloat16):
    """relu(w @ p[i] + bias) for every batch element i.

    w: (C_out, K) bf16, p: (B, K, M) bf16, b: (C_out, 1) f32 -> (B, C_out, M).
    """
    c_out, k = w.shape
    batch, k2, m = p.shape
    assert k == k2 and b.shape == (c_out, 1)

    flops = 2 * batch * c_out * k * m
    bytes_accessed = (w.size * w.dtype.itemsize
                      + p.size * p.dtype.itemsize
                      + b.size * b.dtype.itemsize
                      + batch * c_out * m * jnp.dtype(out_dtype).itemsize)

    return pl.pallas_call(
        _conv_gemm_kernel,
        out_shape=jax.ShapeDtypeStruct((batch, c_out, m), out_dtype),
        grid=(batch,),
        in_specs=[
            pl.BlockSpec((c_out, k), lambda i: (0, 0)),        # weights, resident
            pl.BlockSpec((None, k, m), lambda i: (i, 0, 0)),   # patches of batch i
            pl.BlockSpec((c_out, 1), lambda i: (0, 0)),        # bias
        ],
        out_specs=pl.BlockSpec((None, c_out, m), lambda i: (i, 0, 0)),
        compiler_params=pltpu.CompilerParams(
            dimension_semantics=("parallel",)),
        cost_estimate=pl.CostEstimate(
            flops=flops, transcendentals=0, bytes_accessed=bytes_accessed),
    )(w, p, b)


# ----------------------------------------------------------------------------
# Pallas kernel 2: fused head  q = relu(x @ W_fc + b_fc) @ W_out + b_out
#   The (tile_b, 256) intermediate stays on-chip; output N is padded to 128.
# ----------------------------------------------------------------------------
def _head_kernel(x_ref, w1_ref, b1_ref, w2_ref, b2_ref, o_ref):
    h = jnp.dot(x_ref[...], w1_ref[...], preferred_element_type=jnp.float32)
    h = jnp.maximum(h + b1_ref[...], 0.0)              # fc bias + ReLU in f32
    o = jnp.dot(h.astype(jnp.bfloat16), w2_ref[...],
                preferred_element_type=jnp.float32)
    o_ref[...] = (o + b2_ref[...]).astype(o_ref.dtype)


def fused_head(x, w1, b1, w2, b2):
    """x:(B,K) bf16, w1:(K,H) bf16, b1:(1,H) f32, w2:(H,N) bf16, b2:(1,N) f32."""
    batch, k = x.shape
    k2, hdim = w1.shape
    h2, n = w2.shape
    assert k == k2 and hdim == h2

    tile_b = batch if batch <= 128 else 128
    grid = (pl.cdiv(batch, tile_b),)

    return pl.pallas_call(
        _head_kernel,
        out_shape=jax.ShapeDtypeStruct((batch, n), jnp.float32),
        grid=grid,
        in_specs=[
            pl.BlockSpec((tile_b, k), lambda i: (i, 0)),
            pl.BlockSpec((k, hdim), lambda i: (0, 0)),
            pl.BlockSpec((1, hdim), lambda i: (0, 0)),
            pl.BlockSpec((hdim, n), lambda i: (0, 0)),
            pl.BlockSpec((1, n), lambda i: (0, 0)),
        ],
        out_specs=pl.BlockSpec((tile_b, n), lambda i: (i, 0)),
        compiler_params=pltpu.CompilerParams(
            dimension_semantics=("parallel",)),
        cost_estimate=pl.CostEstimate(
            flops=2 * batch * k * hdim + 2 * batch * hdim * n,
            transcendentals=0,
            bytes_accessed=(x.size * x.dtype.itemsize
                            + w1.size * w1.dtype.itemsize
                            + w2.size * w2.dtype.itemsize
                            + b1.size * 4 + b2.size * 4 + batch * n * 4)),
    )(x, w1, b1, w2, b2)


# ----------------------------------------------------------------------------
# DDQN forward (host-side tensors follow PyTorch conventions: NCHW input,
# (out_c, in_c, kh, kw) conv weights, (out_f, in_f) linear weights).
# ----------------------------------------------------------------------------
def ddqn_forward(x, params):
    B, c_in, H, W = x.shape

    # ---- conv1: 8x8 stride 4, 16 channels, ReLU ----
    xb = x.astype(jnp.bfloat16)
    p1 = lax.conv_general_dilated_patches(
        xb, (8, 8), (4, 4), 'VALID',
        dimension_numbers=('NCHW', 'OIHW', 'NCHW'))       # (B, c_in*64, 20, 20)
    oh1 = (H - 8) // 4 + 1
    ow1 = (W - 8) // 4 + 1
    k1 = c_in * 64
    p1 = p1.reshape(B, k1, oh1 * ow1)
    w1 = params["conv1_w"].reshape(16, k1).astype(jnp.bfloat16)
    b1 = params["conv1_b"].reshape(16, 1).astype(jnp.float32)
    h1 = conv_gemm(w1, p1, b1)                             # (B, 16, 400) bf16
    h1 = h1.reshape(B, 16, oh1, ow1)                       # NCHW, no transpose

    # ---- conv2: 4x4 stride 2, 32 channels, ReLU ----
    p2 = lax.conv_general_dilated_patches(
        h1, (4, 4), (2, 2), 'VALID',
        dimension_numbers=('NCHW', 'OIHW', 'NCHW'))        # (B, 16*16, 9, 9)
    oh2 = (oh1 - 4) // 2 + 1
    ow2 = (ow1 - 4) // 2 + 1
    k2 = 16 * 16
    p2 = p2.reshape(B, k2, oh2 * ow2)
    w2 = params["conv2_w"].reshape(32, k2).astype(jnp.bfloat16)
    b2 = params["conv2_b"].reshape(32, 1).astype(jnp.float32)
    h2 = conv_gemm(w2, p2, b2)                             # (B, 32, 81) bf16

    # ---- t.view(B, -1): PyTorch NCHW flatten order (C, H, W) ----
    flat = h2.reshape(B, 32 * oh2 * ow2)                   # (B, 2592) bf16

    # ---- fused head: fc(2592->256, ReLU) + output(256->num_actions) ----
    num_actions = params["out_w"].shape[0]
    n_pad = ((num_actions + 127) // 128) * 128
    fc_wT = params["fc_w"].T.astype(jnp.bfloat16)                      # (2592, 256)
    fc_b = params["fc_b"].reshape(1, -1).astype(jnp.float32)           # (1, 256)
    out_wT = jnp.pad(params["out_w"].T, ((0, 0), (0, n_pad - num_actions)))
    out_wT = out_wT.astype(jnp.bfloat16)                               # (256, n_pad)
    out_b = jnp.pad(params["out_b"], (0, n_pad - num_actions))
    out_b = out_b.reshape(1, n_pad).astype(jnp.float32)                # (1, n_pad)

    q = fused_head(flat, fc_wT, fc_b, out_wT, out_b)                   # (B, n_pad)
    return q[:, :num_actions]


# ----------------------------------------------------------------------------
# Deterministic parameter init (PyTorch-style shapes, uniform +-1/sqrt(fan_in))
# ----------------------------------------------------------------------------
def init_params(num_frames, num_actions, key):
    def uni(k, shape, fan_in):
        bound = 1.0 / jnp.sqrt(fan_in)
        return jax.random.uniform(k, shape, jnp.float32, -bound, bound)

    ks = jax.random.split(key, 8)
    return {
        "conv1_w": uni(ks[0], (16, num_frames, 8, 8), num_frames * 8 * 8),
        "conv1_b": uni(ks[1], (16,), num_frames * 8 * 8),
        "conv2_w": uni(ks[2], (32, 16, 4, 4), 16 * 4 * 4),
        "conv2_b": uni(ks[3], (32,), 16 * 4 * 4),
        "fc_w":    uni(ks[4], (256, 32 * 9 * 9), 32 * 9 * 9),
        "fc_b":    uni(ks[5], (256,), 32 * 9 * 9),
        "out_w":   uni(ks[6], (num_actions, 256), 256),
        "out_b":   uni(ks[7], (num_actions,), 256),
    }


if __name__ == "__main__":
    num_frames = 4
    num_actions = 6
    batch = 2

    key = jax.random.PRNGKey(0)
    k_x, k_p = jax.random.split(key)

    # fc expects 32*9*9 features -> spatial input must be 84x84 (Atari frame).
    x = jax.random.normal(k_x, (batch, num_frames, 84, 84), jnp.float32)
    params = init_params(num_frames, num_actions, k_p)

    fwd = jax.jit(ddqn_forward)
    out = jax.block_until_ready(fwd(x, params))

    assert out.shape == (batch, num_actions)
    assert out.dtype == jnp.float32
    print("KERNEL_OK")
</pallas_src>

<mosaic_0001>
module attributes {stable_mosaic.version = 11 : i64} {
  func.func @_conv_gemm_kernel(%arg0: i32, %arg1: memref<16x256xbf16, #tpu.memory_space<vmem>>, %arg2: memref<1x256x400xbf16, #tpu.memory_space<vmem>>, %arg3: memref<16x1xf32, #tpu.memory_space<vmem>>, %arg4: memref<1x16x400xbf16, #tpu.memory_space<vmem>>) attributes {dimension_semantics = [#tpu.dimension_semantics<parallel>], iteration_bounds = array<i64: 2>, scalar_prefetch = 0 : i64, scratch_operands = 0 : i64, tpu.core_type = #tpu.core_type<tc>, window_params = [{pipeline_mode = #tpu.pipeline_mode<synchronous>, transform_indices = @transform_0, window_bounds = array<i64: 16, 256>}, {transform_indices = @transform_1, window_bounds = array<i64: 1, 256, 400>}, {pipeline_mode = #tpu.pipeline_mode<synchronous>, transform_indices = @transform_2, window_bounds = array<i64: 16, 1>}, {transform_indices = @transform_3, window_bounds = array<i64: 1, 16, 400>}]} {
    %c0 = arith.constant 0 : index
    %c0_0 = arith.constant 0 : index
    %0 = vector.load %arg1[%c0, %c0_0] : memref<16x256xbf16, #tpu.memory_space<vmem>>, vector<16x256xbf16>
    %c0_1 = arith.constant 0 : index
    %c0_2 = arith.constant 0 : index
    %c0_3 = arith.constant 0 : index
    %1 = vector.load %arg2[%c0_1, %c0_2, %c0_3] : memref<1x256x400xbf16, #tpu.memory_space<vmem>>, vector<1x256x400xbf16>
    %2 = vector.shape_cast %1 : vector<1x256x400xbf16> to vector<256x400xbf16>
    %cst = arith.constant dense<0.000000e+00> : vector<16x400xf32>
    %3 = tpu.matmul %0, %2, %cst {dimension_numbers = #tpu.dot_dimension_numbers<[1], [0], [0], [1], [0, 0, 1, 1], [], []>} : vector<16x256xbf16>, vector<256x400xbf16>, vector<16x400xf32> -> vector<16x400xf32>
    %c0_4 = arith.constant 0 : index
    %c0_5 = arith.constant 0 : index
    %4 = vector.load %arg3[%c0_4, %c0_5] : memref<16x1xf32, #tpu.memory_space<vmem>>, vector<16x1xf32>
    %5 = vector.broadcast %4 : vector<16x1xf32> to vector<16x400xf32>
    %6 = arith.addf %3, %5 : vector<16x400xf32>
    %cst_6 = arith.constant 0.000000e+00 : f32
    %7 = vector.broadcast %cst_6 : f32 to vector<16x400xf32>
    %8 = arith.maximumf %6, %7 : vector<16x400xf32>
    %9 = arith.truncf %8 : vector<16x400xf32> to vector<16x400xbf16>
    %c0_7 = arith.constant 0 : index
    %c0_8 = arith.constant 0 : index
    %c0_9 = arith.constant 0 : index
    %10 = vector.load %arg4[%c0_7, %c0_8, %c0_9] : memref<1x16x400xbf16, #tpu.memory_space<vmem>>, vector<1x16x400xbf16>
    %11 = vector.shape_cast %10 : vector<1x16x400xbf16> to vector<16x400xbf16>
    %12 = vector.shape_cast %9 : vector<16x400xbf16> to vector<1x16x400xbf16>
    tpu.vector_store %arg4[%c0_7, %c0_8, %c0_9], %12 {strides = array<i32>} : memref<1x16x400xbf16, #tpu.memory_space<vmem>>, vector<1x16x400xbf16>,
    return
  }
  func.func @transform_0(%arg0: i32) -> (i32, i32) {
    %c0_i32 = arith.constant 0 : i32
    %c0_i32_0 = arith.constant 0 : i32
    %c0_i32_1 = arith.constant 0 : i32
    return %c0_i32, %c0_i32_0 : i32, i32
  }
  func.func @transform_1(%arg0: i32) -> (i32, i32, i32) {
    %c0_i32 = arith.constant 0 : i32
    %c0_i32_0 = arith.constant 0 : i32
    %c0_i32_1 = arith.constant 0 : i32
    return %arg0, %c0_i32, %c0_i32_0 : i32, i32, i32
  }
  func.func @transform_2(%arg0: i32) -> (i32, i32) {
    %c0_i32 = arith.constant 0 : i32
    %c0_i32_0 = arith.constant 0 : i32
    %c0_i32_1 = arith.constant 0 : i32
    return %c0_i32, %c0_i32_0 : i32, i32
  }
  func.func @transform_3(%arg0: i32) -> (i32, i32, i32) {
    %c0_i32 = arith.constant 0 : i32
    %c0_i32_0 = arith.constant 0 : i32
    %c0_i32_1 = arith.constant 0 : i32
    return %arg0, %c0_i32, %c0_i32_0 : i32, i32, i32
  }
}

module attributes {stable_mosaic.version = 11 : i64} {
  func.func @_conv_gemm_kernel(%arg0: i32, %arg1: memref<32x256xbf16, #tpu.memory_space<vmem>>, %arg2: memref<1x256x81xbf16, #tpu.memory_space<vmem>>, %arg3: memref<32x1xf32, #tpu.memory_space<vmem>>, %arg4: memref<1x32x81xbf16, #tpu.memory_space<vmem>>) attributes {dimension_semantics = [#tpu.dimension_semantics<parallel>], iteration_bounds = array<i64: 2>, scalar_prefetch = 0 : i64, scratch_operands = 0 : i64, tpu.core_type = #tpu.core_type<tc>, window_params = [{pipeline_mode = #tpu.pipeline_mode<synchronous>, transform_indices = @transform_0, window_bounds = array<i64: 32, 256>}, {transform_indices = @transform_1, window_bounds = array<i64: 1, 256, 81>}, {pipeline_mode = #tpu.pipeline_mode<synchronous>, transform_indices = @transform_2, window_bounds = array<i64: 32, 1>}, {transform_indices = @transform_3, window_bounds = array<i64: 1, 32, 81>}]} {
    %c0 = arith.constant 0 : index
    %c0_0 = arith.constant 0 : index
    %0 = vector.load %arg1[%c0, %c0_0] : memref<32x256xbf16, #tpu.memory_space<vmem>>, vector<32x256xbf16>
    %c0_1 = arith.constant 0 : index
    %c0_2 = arith.constant 0 : index
    %c0_3 = arith.constant 0 : index
    %1 = vector.load %arg2[%c0_1, %c0_2, %c0_3] : memref<1x256x81xbf16, #tpu.memory_space<vmem>>, vector<1x256x81xbf16>
    %2 = vector.shape_cast %1 : vector<1x256x81xbf16> to vector<256x81xbf16>
    %cst = arith.constant dense<0.000000e+00> : vector<32x81xf32>
    %3 = tpu.matmul %0, %2, %cst {dimension_numbers = #tpu.dot_dimension_numbers<[1], [0], [0], [1], [0, 0, 1, 1], [], []>} : vector<32x256xbf16>, vector<256x81xbf16>, vector<32x81xf32> -> vector<32x81xf32>
    %c0_4 = arith.constant 0 : index
    %c0_5 = arith.constant 0 : index
    %4 = vector.load %arg3[%c0_4, %c0_5] : memref<32x1xf32, #tpu.memory_space<vmem>>, vector<32x1xf32>
    %5 = vector.broadcast %4 : vector<32x1xf32> to vector<32x81xf32>
    %6 = arith.addf %3, %5 : vector<32x81xf32>
    %cst_6 = arith.constant 0.000000e+00 : f32
    %7 = vector.broadcast %cst_6 : f32 to vector<32x81xf32>
    %8 = arith.maximumf %6, %7 : vector<32x81xf32>
    %9 = arith.truncf %8 : vector<32x81xf32> to vector<32x81xbf16>
    %c0_7 = arith.constant 0 : index
    %c0_8 = arith.constant 0 : index
    %c0_9 = arith.constant 0 : index
    %10 = vector.load %arg4[%c0_7, %c0_8, %c0_9] : memref<1x32x81xbf16, #tpu.memory_space<vmem>>, vector<1x32x81xbf16>
    %11 = vector.shape_cast %10 : vector<1x32x81xbf16> to vector<32x81xbf16>
    %12 = vector.shape_cast %9 : vector<32x81xbf16> to vector<1x32x81xbf16>
    tpu.vector_store %arg4[%c0_7, %c0_8, %c0_9], %12 {strides = array<i32>} : memref<1x32x81xbf16, #tpu.memory_space<vmem>>, vector<1x32x81xbf16>,
    return
  }
  func.func @transform_0(%arg0: i32) -> (i32, i32) {
    %c0_i32 = arith.constant 0 : i32
    %c0_i32_0 = arith.constant 0 : i32
    %c0_i32_1 = arith.constant 0 : i32
    return %c0_i32, %c0_i32_0 : i32, i32
  }
  func.func @transform_1(%arg0: i32) -> (i32, i32, i32) {
    %c0_i32 = arith.constant 0 : i32
    %c0_i32_0 = arith.constant 0 : i32
    %c0_i32_1 = arith.constant 0 : i32
    return %arg0, %c0_i32, %c0_i32_0 : i32, i32, i32
  }
  func.func @transform_2(%arg0: i32) -> (i32, i32) {
    %c0_i32 = arith.constant 0 : i32
    %c0_i32_0 = arith.constant 0 : i32
    %c0_i32_1 = arith.constant 0 : i32
    return %c0_i32, %c0_i32_0 : i32, i32
  }
  func.func @transform_3(%arg0: i32) -> (i32, i32, i32) {
    %c0_i32 = arith.constant 0 : i32
    %c0_i32_0 = arith.constant 0 : i32
    %c0_i32_1 = arith.constant 0 : i32
    return %arg0, %c0_i32, %c0_i32_0 : i32, i32, i32
  }
}

module attributes {stable_mosaic.version = 11 : i64} {
  func.func @_head_kernel(%arg0: i32, %arg1: memref<2x2592xbf16, #tpu.memory_space<vmem>>, %arg2: memref<2592x256xbf16, #tpu.memory_space<vmem>>, %arg3: memref<1x256xf32, #tpu.memory_space<vmem>>, %arg4: memref<256x128xbf16, #tpu.memory_space<vmem>>, %arg5: memref<1x128xf32, #tpu.memory_space<vmem>>, %arg6: memref<2x128xf32, #tpu.memory_space<vmem>>) attributes {dimension_semantics = [#tpu.dimension_semantics<parallel>], iteration_bounds = array<i64: 1>, scalar_prefetch = 0 : i64, scratch_operands = 0 : i64, tpu.core_type = #tpu.core_type<tc>, window_params = [{transform_indices = @transform_0, window_bounds = array<i64: 2, 2592>}, {pipeline_mode = #tpu.pipeline_mode<synchronous>, transform_indices = @transform_1, window_bounds = array<i64: 2592, 256>}, {pipeline_mode = #tpu.pipeline_mode<synchronous>, transform_indices = @transform_2, window_bounds = array<i64: 1, 256>}, {pipeline_mode = #tpu.pipeline_mode<synchronous>, transform_indices = @transform_3, window_bounds = array<i64: 256, 128>}, {pipeline_mode = #tpu.pipeline_mode<synchronous>, transform_indices = @transform_4, window_bounds = array<i64: 1, 128>}, {transform_indices = @transform_5, window_bounds = array<i64: 2, 128>}]} {
    %c0 = arith.constant 0 : index
    %c0_0 = arith.constant 0 : index
    %0 = vector.load %arg1[%c0, %c0_0] : memref<2x2592xbf16, #tpu.memory_space<vmem>>, vector<2x2592xbf16>
    %c0_1 = arith.constant 0 : index
    %c0_2 = arith.constant 0 : index
    %1 = vector.load %arg2[%c0_1, %c0_2] : memref<2592x256xbf16, #tpu.memory_space<vmem>>, vector<2592x256xbf16>
    %cst = arith.constant dense<0.000000e+00> : vector<2x256xf32>
    %2 = tpu.matmul %0, %1, %cst {dimension_numbers = #tpu.dot_dimension_numbers<[1], [0], [0], [1], [0, 0, 1, 1], [], []>} : vector<2x2592xbf16>, vector<2592x256xbf16>, vector<2x256xf32> -> vector<2x256xf32>
    %c0_3 = arith.constant 0 : index
    %c0_4 = arith.constant 0 : index
    %3 = vector.load %arg3[%c0_3, %c0_4] : memref<1x256xf32, #tpu.memory_space<vmem>>, vector<1x256xf32>
    %4 = vector.broadcast %3 : vector<1x256xf32> to vector<2x256xf32>
    %5 = arith.addf %2, %4 : vector<2x256xf32>
    %cst_5 = arith.constant 0.000000e+00 : f32
    %6 = vector.broadcast %cst_5 : f32 to vector<2x256xf32>
    %7 = arith.maximumf %5, %6 : vector<2x256xf32>
    %8 = arith.truncf %7 : vector<2x256xf32> to vector<2x256xbf16>
    %c0_6 = arith.constant 0 : index
    %c0_7 = arith.constant 0 : index
    %9 = vector.load %arg4[%c0_6, %c0_7] : memref<256x128xbf16, #tpu.memory_space<vmem>>, vector<256x128xbf16>
    %cst_8 = arith.constant dense<0.000000e+00> : vector<2x128xf32>
    %10 = tpu.matmul %8, %9, %cst_8 {dimension_numbers = #tpu.dot_dimension_numbers<[1], [0], [0], [1], [0, 0, 1, 1], [], []>} : vector<2x256xbf16>, vector<256x128xbf16>, vector<2x128xf32> -> vector<2x128xf32>
    %c0_9 = arith.constant 0 : index
    %c0_10 = arith.constant 0 : index
    %11 = vector.load %arg5[%c0_9, %c0_10] : memref<1x128xf32, #tpu.memory_space<vmem>>, vector<1x128xf32>
    %12 = vector.broadcast %11 : vector<1x128xf32> to vector<2x128xf32>
    %13 = arith.addf %10, %12 : vector<2x128xf32>
    %c0_11 = arith.constant 0 : index
    %c0_12 = arith.constant 0 : index
    %14 = vector.load %arg6[%c0_11, %c0_12] : memref<2x128xf32, #tpu.memory_space<vmem>>, vector<2x128xf32>
    tpu.vector_store %arg6[%c0_11, %c0_12], %13 {strides = array<i32>} : memref<2x128xf32, #tpu.memory_space<vmem>>, vector<2x128xf32>,
    return
  }
  func.func @transform_0(%arg0: i32) -> (i32, i32) {
    %c0_i32 = arith.constant 0 : i32
    %c0_i32_0 = arith.constant 0 : i32
    return %arg0, %c0_i32 : i32, i32
  }
  func.func @transform_1(%arg0: i32) -> (i32, i32) {
    %c0_i32 = arith.constant 0 : i32
    %c0_i32_0 = arith.constant 0 : i32
    %c0_i32_1 = arith.constant 0 : i32
    return %c0_i32, %c0_i32_0 : i32, i32
  }
  func.func @transform_2(%arg0: i32) -> (i32, i32) {
    %c0_i32 = arith.constant 0 : i32
    %c0_i32_0 = arith.constant 0 : i32
    %c0_i32_1 = arith.constant 0 : i32
    return %c0_i32, %c0_i32_0 : i32, i32
  }
  func.func @transform_3(%arg0: i32) -> (i32, i32) {
    %c0_i32 = arith.constant 0 : i32
    %c0_i32_0 = arith.constant 0 : i32
    %c0_i32_1 = arith.constant 0 : i32
    return %c0_i32, %c0_i32_0 : i32, i32
  }
  func.func @transform_4(%arg0: i32) -> (i32, i32) {
    %c0_i32 = arith.constant 0 : i32
    %c0_i32_0 = arith.constant 0 : i32
    %c0_i32_1 = arith.constant 0 : i32
    return %c0_i32, %c0_i32_0 : i32, i32
  }
  func.func @transform_5(%arg0: i32) -> (i32, i32) {
    %c0_i32 = arith.constant 0 : i32
    %c0_i32_0 = arith.constant 0 : i32
    return %arg0, %c0_i32 : i32, i32
  }
}

</mosaic_0001>

<llo_original>
// kernel: ddqn_forward.3
$region0: #{ddqn_forward.3}
  #allocation0 [shape = 'u32[]', space=smem, size = 0x4, offset = 0x4, fixed_abs, tag = 'smem constant byte address 0x4 - core index']
  #allocation1 [shape = 'u32[144,128]{1,0:T(1,128)}', space=vmem, size = 0x12000, scoped, tag = 'internal scratch']
  %s0 = inlined_call_operand.vmem [shape: bf16[16,256], index: 0, kind: input, shape index: {}]
  %s1 = inlined_call_operand.vmem [shape: bf16[2,256,400], index: 1, kind: input, shape index: {}]
  %s2 = inlined_call_operand.vmem [shape: f32[16,1], index: 2, kind: input, shape index: {}]
  %s3 = inlined_call_operand.vmem [shape: bf16[2,16,400], index: 3, kind: output, shape index: {}]
  %s4 = sld [smem:[#allocation0]]
  $region45: #{ddqn_forward.3} parent=0
    _
  %s6 = ssub.s32 1, %s4
  %s7 = scalar_select 0, %s6, %s4
  loop: start=0, step=1, limit=4
  $region2: #{ddqn_forward.3} parent=0 // loop_pre_header
    _
  $region3: #{ddqn_forward.3} parent=0 // loop_header
    %s9 = sphi 0, %s13
    %p10 = scmp.ge.s32.totalorder %s9, 4
    %s17 = sphi 0, %s17
    %s19 = sphi 0, %s17
    %s20 = sphi 0, %s19
    %s34 = sphi 0, %s20
    %s40 = sphi 0, %s42
    %s43 = sphi 0, %s40
    %s44 = sphi 0, %s43
    %s60 = sphi 0, %s44
    %s64 = sphi 0, %s64
    %s66 = sphi 0, %s64
    %s67 = sphi 0, %s66
    %s81 = sphi 0, %s67
    %s87 = sphi 0, %s89
    %s90 = sphi 0, %s87
    %s91 = sphi 0, %s90
    %s107 = sphi 0, %s91
  $region4: #{ddqn_forward.3} parent=0 // loop_header_branch
    %12 = sbr.rel (%p10) target = $region8
  $region5: #{ddqn_forward.3} parent=0 // loop_body
    %s14 = ssub.s32 %s9, 1
    %s15 = ssub.s32 %s9, 2
    %s16 = sadd.s32 %s9, 1
    %s18 = sadd.s32 %s17, 1
    %p21 = scmp.eq.s32.totalorder %s9, 1
    %p22 = scmp.ne.s32.totalorder %s17, %s19
    %p23 = scmp.eq.s32.totalorder %s9, 0
    %p24 = por %p22, %p23
    %p25 = scmp.ne.s32.totalorder %s17, %s19
    %p26 = scmp.eq.s32.totalorder %s14, 1
    %p27 = por %p25, %p26
    %p28 = scmp.ne.s32.totalorder %s19, %s20
    %p29 = scmp.eq.s32.totalorder %s14, 0
    %p30 = por %p28, %p29
    %p31 = scmp.ne.s32.totalorder %s19, %s20
    %p32 = scmp.eq.s32.totalorder %s15, 1
    %p33 = por %p31, %p32
    %p35 = scmp.ne.s32.totalorder %s20, %s34
    %p36 = scmp.eq.s32.totalorder %s15, 0
    %p37 = por %p35, %p36
    %s38 = ssub.s32 %s9, %s16
    %p39 = scmp.eq.s32.totalorder %s38, 0
    %s41 = sadd.s32 %s40, 1
    %s42 = scalar_select %p39, %s40, %s41
    %p45 = pneg %p39
    %p46 = scmp.eq.s32.totalorder %s9, 1
    %p47 = por %p45, %p46
    %p48 = scmp.ne.s32.totalorder %s40, %s43
    %p49 = scmp.eq.s32.totalorder %s9, 0
    %p50 = por %p48, %p49
    %p51 = scmp.ne.s32.totalorder %s40, %s43
    %p52 = scmp.eq.s32.totalorder %s14, 1
    %p53 = por %p51, %p52
    %p54 = scmp.ne.s32.totalorder %s43, %s44
    %p55 = scmp.eq.s32.totalorder %s14, 0
    %p56 = por %p54, %p55
    %p57 = scmp.ne.s32.totalorder %s43, %s44
    %p58 = scmp.eq.s32.totalorder %s15, 1
    %p59 = por %p57, %p58
    %p61 = scmp.ne.s32.totalorder %s44, %s60
    %p62 = scmp.eq.s32.totalorder %s15, 0
    %p63 = por %p61, %p62
    %s65 = sadd.s32 %s64, 1
    %p68 = scmp.eq.s32.totalorder %s9, 1
    %p69 = scmp.ne.s32.totalorder %s64, %s66
    %p70 = scmp.eq.s32.totalorder %s9, 0
    %p71 = por %p69, %p70
    %p72 = scmp.ne.s32.totalorder %s64, %s66
    %p73 = scmp.eq.s32.totalorder %s14, 1
    %p74 = por %p72, %p73
    %p75 = scmp.ne.s32.totalorder %s66, %s67
    %p76 = scmp.eq.s32.totalorder %s14, 0
    %p77 = por %p75, %p76
    %p78 = scmp.ne.s32.totalorder %s66, %s67
    %p79 = scmp.eq.s32.totalorder %s15, 1
    %p80 = por %p78, %p79
    %p82 = scmp.ne.s32.totalorder %s67, %s81
    %p83 = scmp.eq.s32.totalorder %s15, 0
    %p84 = por %p82, %p83
    %s85 = ssub.s32 %s9, %s16
    %p86 = scmp.eq.s32.totalorder %s85, 0
    %s88 = sadd.s32 %s87, 1
    %s89 = scalar_select %p86, %s87, %s88
    %p92 = pneg %p86
    %p93 = scmp.eq.s32.totalorder %s9, 1
    %p94 = por %p92, %p93
    %p95 = scmp.ne.s32.totalorder %s87, %s90
    %p96 = scmp.eq.s32.totalorder %s9, 0
    %p97 = por %p95, %p96
    %p98 = scmp.ne.s32.totalorder %s87, %s90
    %p99 = scmp.eq.s32.totalorder %s14, 1
    %p100 = por %p98, %p99
    %p101 = scmp.ne.s32.totalorder %s90, %s91
    %p102 = scmp.eq.s32.totalorder %s14, 0
    %p103 = por %p101, %p102
    %p104 = scmp.ne.s32.totalorder %s90, %s91
    %p105 = scmp.eq.s32.totalorder %s15, 1
    %p106 = por %p104, %p105
    %p108 = scmp.ne.s32.totalorder %s91, %s107
    %p109 = scmp.eq.s32.totalorder %s15, 0
    %p110 = por %p108, %p109
    %p111 = scmp.le.s32.totalorder 1, %s9
    %p112 = scmp.lt.s32.totalorder %s9, 3
    %p113 = pnand %p111, %p112
    %p114 = pneg %p113
    // Predicated region
    $region9: #{ddqn_forward.3} parent=5 // pred_check
      _
    $region10: #{ddqn_forward.3} parent=5 // pred_check_branch
      %116 = sbr.rel (%p113) target = $region12
    $region11: #{ddqn_forward.3} parent=5 // pred_region
      %s117 = ssub.s32 %s9, 1
      // Predicated region
      $region13: #{ddqn_forward.3} parent=11 // pred_check
        %p118 = pneg %p30
      $region14: #{ddqn_forward.3} parent=11 // pred_check_branch
        %120 = sbr.rel (%p118) target = $region16
      $region15: #{ddqn_forward.3} parent=11 // pred_region
        _
      $region16: #{ddqn_forward.3} parent=11 // pred_fallthru
        _
      // Predicated region
      $region17: #{ddqn_forward.3} parent=11 // pred_check
        %p121 = pneg %p77
      $region18: #{ddqn_forward.3} parent=11 // pred_check_branch
        %123 = sbr.rel (%p121) target = $region20
      $region19: #{ddqn_forward.3} parent=11 // pred_region
        _
      $region20: #{ddqn_forward.3} parent=11 // pred_fallthru
        _
    $region12: #{ddqn_forward.3} parent=5 // pred_fallthru
      _
    %p124 = scmp.lt.s32.totalorder %s9, 2
    // Predicated region
    $region21: #{ddqn_forward.3} parent=5 // pred_check
      %p125 = pneg %p124
    $region22: #{ddqn_forward.3} parent=5 // pred_check_branch
      %127 = sbr.rel (%p125) target = $region24
    $region23: #{ddqn_forward.3} parent=5 // pred_region
      // Predicated region
      $region25: #{ddqn_forward.3} parent=23 // pred_check
        %p128 = pneg %p50
      $region26: #{ddqn_forward.3} parent=23 // pred_check_branch
        %130 = sbr.rel (%p128) target = $region28
      $region27: #{ddqn_forward.3} parent=23 // pred_region
        %p131 = scmp.lt.s32.totalorder %s9, 1
        %s132 = scalar_select %p131, %s9, 1
        %s133 = smul.addr %s132, 128
        %s134 = smul.addr %s133, 4
        %s135 = scalar_lea.vmem %s1, %s134
      $region28: #{ddqn_forward.3} parent=23 // pred_fallthru
        _
    $region24: #{ddqn_forward.3} parent=5 // pred_fallthru
      _
    %p136 = scmp.le.s32.totalorder 1, %s9
    %p137 = scmp.lt.s32.totalorder %s9, 3
    %p138 = pnand %p136, %p137
    %p139 = pneg %p138
    // Predicated region
    $region29: #{ddqn_forward.3} parent=5 // pred_check
      _
    $region30: #{ddqn_forward.3} parent=5 // pred_check_branch
      %141 = sbr.rel (%p138) target = $region32
    $region31: #{ddqn_forward.3} parent=5 // pred_region
      %s142 = ssub.s32 %s9, 1
      %p143 = pneg %p30
      %p144 = pneg %p27
      %p145 = scmp.lt.s32.totalorder %s14, 1
      %s146 = scalar_select %p145, %s14, 1
      %s147 = smul.addr %s146, 128
      %s148 = smul.addr %s147, 4
      %s149 = scalar_lea.vmem %s1, %s148
      %p150 = pneg %p56
      %p151 = pneg %p53
      %p152 = pneg %p77
      %p153 = pneg %p74
      %p154 = pneg %p103
      %p155 = pneg %p100
      %p156 = scmp.lt.s32.totalorder %s14, 1
      %s157 = scalar_select %p156, %s14, 1
      %s158 = smul.addr %s157, 8
      %s159 = smul.addr %s158, 4
      %s160 = scalar_lea.vmem %s3, %s159
      %p161 = scmp.lt.s32.totalorder %s14, 1
      %s162 = scalar_select %p161, %s14, 1
      %s163 = smul.addr %s162, 128
      %s164 = smul.addr %s163, 4
      %s165 = scalar_lea.vmem %s1, %s164
      %p166 = scmp.lt.s32.totalorder %s14, 1
      %s167 = scalar_select %p166, %s14, 1
      %s168 = smul.addr %s167, 8
      %s169 = smul.addr %s168, 4
      %s170 = scalar_lea.vmem %s3, %s169
      %v171 = vld [vmem:[%s0] sm:$0xff]
      %v172 = vld [vmem:[%s0 + $0x8] sm:$0xff]
      %v173 = vld [vmem:[%s165] sm:$0xff]
      %v174 = vld [vmem:[%s165 + $0x8] sm:$0xff]
      %v175 = vld [vmem:[%s165 + $0x10] sm:$0xff]
      %v176 = vld [vmem:[%s165 + $0x18] sm:$0xff]
      %v177 = vld [vmem:[%s165 + $0x20] sm:$0xff]
      %v178 = vld [vmem:[%s165 + $0x28] sm:$0xff]
      %v179 = vld [vmem:[%s165 + $0x30] sm:$0xff]
      %v180 = vld [vmem:[%s165 + $0x38] sm:$0xff]
      %v181 = vld [vmem:[%s165 + $0x40] sm:$0xff]
      %v182 = vld [vmem:[%s165 + $0x48] sm:$0xff]
      %v183 = vld [vmem:[%s165 + $0x50] sm:$0xff]
      %v184 = vld [vmem:[%s165 + $0x58] sm:$0xff]
      %v185 = vld [vmem:[%s165 + $0x60] sm:$0xff]
      %v186 = vld [vmem:[%s165 + $0x68] sm:$0xff]
      %v187 = vld [vmem:[%s165 + $0x70] sm:$0xff]
      %v188 = vld [vmem:[%s165 + $0x78] sm:$0xff]
      %v189 = vld [vmem:[%s165 + $0x80] sm:$0xff]
      %v190 = vld [vmem:[%s165 + $0x88] sm:$0xff]
      %v191 = vld [vmem:[%s165 + $0x90] sm:$0xff]
      %v192 = vld [vmem:[%s165 + $0x98] sm:$0xff]
      %v193 = vld [vmem:[%s165 + $0xa0] sm:$0xff]
      %v194 = vld [vmem:[%s165 + $0xa8] sm:$0xff]
      %v195 = vld [vmem:[%s165 + $0xb0] sm:$0xff]
      %v196 = vld [vmem:[%s165 + $0xb8] sm:$0xff]
      %v197 = vld [vmem:[%s165 + $0xc0] sm:$0xff]
      %v198 = vld [vmem:[%s165 + $0xc8] sm:$0xff]
      %v199 = vld [vmem:[%s165 + $0xd0] sm:$0xff]
      %v200 = vld [vmem:[%s165 + $0xd8] sm:$0xff]
      %v201 = vld [vmem:[%s165 + $0xe0] sm:$0xff]
      %v202 = vld [vmem:[%s165 + $0xe8] sm:$0xff]
      %v203 = vld [vmem:[%s165 + $0xf0] sm:$0xff]
      %v204 = vld [vmem:[%s165 + $0xf8] sm:$0xff]
      %v205 = vld [vmem:[%s165 + $0x100] sm:$0xff]
      %v206 = vld [vmem:[%s165 + $0x108] sm:$0xff]
      %v207 = vld [vmem:[%s165 + $0x110] sm:$0xff]
      %v208 = vld [vmem:[%s165 + $0x118] sm:$0xff]
      %v209 = vld [vmem:[%s165 + $0x120] sm:$0xff]
      %v210 = vld [vmem:[%s165 + $0x128] sm:$0xff]
      %v211 = vld [vmem:[%s165 + $0x130] sm:$0xff]
      %v212 = vld [vmem:[%s165 + $0x138] sm:$0xff]
      %v213 = vld [vmem:[%s165 + $0x140] sm:$0xff]
      %v214 = vld [vmem:[%s165 + $0x148] sm:$0xff]
      %v215 = vld [vmem:[%s165 + $0x150] sm:$0xff]
      %v216 = vld [vmem:[%s165 + $0x158] sm:$0xff]
      %v217 = vld [vmem:[%s165 + $0x160] sm:$0xff]
      %v218 = vld [vmem:[%s165 + $0x168] sm:$0xff]
      %v219 = vld [vmem:[%s165 + $0x170] sm:$0xff]
      %v220 = vld [vmem:[%s165 + $0x178] sm:$0xff]
      %v221 = vld [vmem:[%s165 + $0x180] sm:$0xff]
      %v222 = vld [vmem:[%s165 + $0x188] sm:$0xff]
      %v223 = vld [vmem:[%s165 + $0x190] sm:$0xff]
      %v224 = vld [vmem:[%s165 + $0x198] sm:$0xff]
      %v225 = vld [vmem:[%s165 + $0x1a0] sm:$0xff]
      %v226 = vld [vmem:[%s165 + $0x1a8] sm:$0xff]
      %v227 = vld [vmem:[%s165 + $0x1b0] sm:$0xff]
      %v228 = vld [vmem:[%s165 + $0x1b8] sm:$0xff]
      %v229 = vld [vmem:[%s165 + $0x1c0] sm:$0xff]
      %v230 = vld [vmem:[%s165 + $0x1c8] sm:$0xff]
      %v231 = vld [vmem:[%s165 + $0x1d0] sm:$0xff]
      %v232 = vld [vmem:[%s165 + $0x1d8] sm:$0xff]
      %v233 = vld [vmem:[%s165 + $0x1e0] sm:$0xff]
      %v234 = vld [vmem:[%s165 + $0x1e8] sm:$0xff]
      %v235 = vld [vmem:[%s165 + $0x1f0] sm:$0xff]
      %v236 = vld [vmem:[%s165 + $0x1f8] sm:$0xff]
      %v237 = vld [vmem:[%s2] sm:$0xff]
      %v238 = vld [vmem:[%s2 + $0x8] sm:$0xff]
      %240 = vset.pattern.permute.xlu0 0
      %241 = vperm.xlu0 %240, %v237
      %v242 = vpop.permute.xlu0 %241
      %245 = vset.pattern.permute.xlu0 0
      %246 = vperm.xlu0 %245, %v238
      %v247 = vpop.permute.xlu0 %246
      %v251 = vunpack.c.l.b16 %v171
      %v252 = vunpack.c.h.b16 %v171
      %v253 = vunpack.c.l.b16 %v172
      %v254 = vunpack.c.h.b16 %v172
      %v255 = vpack.c.b16 %v253, %v251
      %v256 = vpack.c.b16 %v254, %v252
      %v323 = vunpack.c.l.b16 %v173
      %v324 = vunpack.c.h.b16 %v173
      %v325 = vunpack.c.l.b16 %v174
      %v326 = vunpack.c.h.b16 %v174
      %v327 = vunpack.c.l.b16 %v175
      %v328 = vunpack.c.h.b16 %v175
      %v329 = vunpack.c.l.b16 %v176
      %v330 = vunpack.c.h.b16 %v176
      %v331 = vunpack.c.l.b16 %v177
      %v332 = vunpack.c.h.b16 %v177
      %v333 = vunpack.c.l.b16 %v178
      %v334 = vunpack.c.h.b16 %v178
      %v335 = vunpack.c.l.b16 %v179
      %v336 = vunpack.c.h.b16 %v179
      %v337 = vunpack.c.l.b16 %v180
      %v338 = vunpack.c.h.b16 %v180
      %v339 = vunpack.c.l.b16 %v181
      %v340 = vunpack.c.h.b16 %v181
      %v341 = vunpack.c.l.b16 %v182
      %v342 = vunpack.c.h.b16 %v182
      %v343 = vunpack.c.l.b16 %v183
      %v344 = vunpack.c.h.b16 %v183
      %v345 = vunpack.c.l.b16 %v184
      %v346 = vunpack.c.h.b16 %v184
      %v347 = vunpack.c.l.b16 %v185
      %v348 = vunpack.c.h.b16 %v185
      %v349 = vunpack.c.l.b16 %v186
      %v350 = vunpack.c.h.b16 %v186
      %v351 = vunpack.c.l.b16 %v187
      %v352 = vunpack.c.h.b16 %v187
      %v353 = vunpack.c.l.b16 %v188
      %v354 = vunpack.c.h.b16 %v188
      %v355 = vunpack.c.l.b16 %v189
      %v356 = vunpack.c.h.b16 %v189
      %v357 = vunpack.c.l.b16 %v190
      %v358 = vunpack.c.h.b16 %v190
      %v359 = vunpack.c.l.b16 %v191
      %v360 = vunpack.c.h.b16 %v191
      %v361 = vunpack.c.l.b16 %v192
      %v362 = vunpack.c.h.b16 %v192
      %v363 = vunpack.c.l.b16 %v193
      %v364 = vunpack.c.h.b16 %v193
      %v365 = vunpack.c.l.b16 %v194
      %v366 = vunpack.c.h.b16 %v194
      %v367 = vunpack.c.l.b16 %v195
      %v368 = vunpack.c.h.b16 %v195
      %v369 = vunpack.c.l.b16 %v196
      %v370 = vunpack.c.h.b16 %v196
      %v371 = vunpack.c.l.b16 %v197
      %v372 = vunpack.c.h.b16 %v197
      %v373 = vunpack.c.l.b16 %v198
      %v374 = vunpack.c.h.b16 %v198
      %v375 = vunpack.c.l.b16 %v199
      %v376 = vunpack.c.h.b16 %v199
      %v377 = vunpack.c.l.b16 %v200
      %v378 = vunpack.c.h.b16 %v200
      %v379 = vunpack.c.l.b16 %v201
      %v380 = vunpack.c.h.b16 %v201
      %v381 = vunpack.c.l.b16 %v202
      %v382 = vunpack.c.h.b16 %v202
      %v383 = vunpack.c.l.b16 %v203
      %v384 = vunpack.c.h.b16 %v203
      %v385 = vunpack.c.l.b16 %v204
      %v386 = vunpack.c.h.b16 %v204
      %v387 = vunpack.c.l.b16 %v205
      %v388 = vunpack.c.h.b16 %v205
      %v389 = vunpack.c.l.b16 %v206
      %v390 = vunpack.c.h.b16 %v206
      %v391 = vunpack.c.l.b16 %v207
      %v392 = vunpack.c.h.b16 %v207
      %v393 = vunpack.c.l.b16 %v208
      %v394 = vunpack.c.h.b16 %v208
      %v395 = vunpack.c.l.b16 %v209
      %v396 = vunpack.c.h.b16 %v209
      %v397 = vunpack.c.l.b16 %v210
      %v398 = vunpack.c.h.b16 %v210
      %v399 = vunpack.c.l.b16 %v211
      %v400 = vunpack.c.h.b16 %v211
      %v401 = vunpack.c.l.b16 %v212
      %v402 = vunpack.c.h.b16 %v212
      %v403 = vunpack.c.l.b16 %v213
      %v404 = vunpack.c.h.b16 %v213
      %v405 = vunpack.c.l.b16 %v214
      %v406 = vunpack.c.h.b16 %v214
      %v407 = vunpack.c.l.b16 %v215
      %v408 = vunpack.c.h.b16 %v215
      %v409 = vunpack.c.l.b16 %v216
      %v410 = vunpack.c.h.b16 %v216
      %v411 = vunpack.c.l.b16 %v217
      %v412 = vunpack.c.h.b16 %v217
      %v413 = vunpack.c.l.b16 %v218
      %v414 = vunpack.c.h.b16 %v218
      %v415 = vunpack.c.l.b16 %v219
      %v416 = vunpack.c.h.b16 %v219
      %v417 = vunpack.c.l.b16 %v220
      %v418 = vunpack.c.h.b16 %v220
      %v419 = vunpack.c.l.b16 %v221
      %v420 = vunpack.c.h.b16 %v221
      %v421 = vunpack.c.l.b16 %v222
      %v422 = vunpack.c.h.b16 %v222
      %v423 = vunpack.c.l.b16 %v223
      %v424 = vunpack.c.h.b16 %v223
      %v425 = vunpack.c.l.b16 %v224
      %v426 = vunpack.c.h.b16 %v224
      %v427 = vunpack.c.l.b16 %v225
      %v428 = vunpack.c.h.b16 %v225
      %v429 = vunpack.c.l.b16 %v226
      %v430 = vunpack.c.h.b16 %v226
      %v431 = vunpack.c.l.b16 %v227
      %v432 = vunpack.c.h.b16 %v227
      %v433 = vunpack.c.l.b16 %v228
      %v434 = vunpack.c.h.b16 %v228
      %v435 = vunpack.c.l.b16 %v229
      %v436 = vunpack.c.h.b16 %v229
      %v437 = vunpack.c.l.b16 %v230
      %v438 = vunpack.c.h.b16 %v230
      %v439 = vunpack.c.l.b16 %v231
      %v440 = vunpack.c.h.b16 %v231
      %v441 = vunpack.c.l.b16 %v232
      %v442 = vunpack.c.h.b16 %v232
      %v443 = vunpack.c.l.b16 %v233
      %v444 = vunpack.c.h.b16 %v233
      %v445 = vunpack.c.l.b16 %v234
      %v446 = vunpack.c.h.b16 %v234
      %v447 = vunpack.c.l.b16 %v235
      %v448 = vunpack.c.h.b16 %v235
      %v449 = vunpack.c.l.b16 %v236
      %v450 = vunpack.c.h.b16 %v236
      %v451 = vpack.c.b16 %v327, %v323
      %v452 = vpack.c.b16 %v328, %v324
      %v453 = vpack.c.b16 %v329, %v325
      %v454 = vpack.c.b16 %v330, %v326
      %v455 = vpack.c.b16 %v335, %v331
      %v456 = vpack.c.b16 %v336, %v332
      %v457 = vpack.c.b16 %v337, %v333
      %v458 = vpack.c.b16 %v338, %v334
      %v459 = vpack.c.b16 %v343, %v339
      %v460 = vpack.c.b16 %v344, %v340
      %v461 = vpack.c.b16 %v345, %v341
      %v462 = vpack.c.b16 %v346, %v342
      %v463 = vpack.c.b16 %v351, %v347
      %v464 = vpack.c.b16 %v352, %v348
      %v465 = vpack.c.b16 %v353, %v349
      %v466 = vpack.c.b16 %v354, %v350
      %v467 = vpack.c.b16 %v359, %v355
      %v468 = vpack.c.b16 %v360, %v356
      %v469 = vpack.c.b16 %v361, %v357
      %v470 = vpack.c.b16 %v362, %v358
      %v471 = vpack.c.b16 %v367, %v363
      %v472 = vpack.c.b16 %v368, %v364
      %v473 = vpack.c.b16 %v369, %v365
      %v474 = vpack.c.b16 %v370, %v366
      %v475 = vpack.c.b16 %v375, %v371
      %v476 = vpack.c.b16 %v376, %v372
      %v477 = vpack.c.b16 %v377, %v373
      %v478 = vpack.c.b16 %v378, %v374
      %v479 = vpack.c.b16 %v383, %v379
      %v480 = vpack.c.b16 %v384, %v380
      %v481 = vpack.c.b16 %v385, %v381
      %v482 = vpack.c.b16 %v386, %v382
      %v483 = vpack.c.b16 %v391, %v387
      %v484 = vpack.c.b16 %v392, %v388
      %v485 = vpack.c.b16 %v393, %v389
      %v486 = vpack.c.b16 %v394, %v390
      %v487 = vpack.c.b16 %v399, %v395
      %v488 = vpack.c.b16 %v400, %v396
      %v489 = vpack.c.b16 %v401, %v397
      %v490 = vpack.c.b16 %v402, %v398
      %v491 = vpack.c.b16 %v407, %v403
      %v492 = vpack.c.b16 %v408, %v404
      %v493 = vpack.c.b16 %v409, %v405
      %v494 = vpack.c.b16 %v410, %v406
      %v495 = vpack.c.b16 %v415, %v411
      %v496 = vpack.c.b16 %v416, %v412
      %v497 = vpack.c.b16 %v417, %v413
      %v498 = vpack.c.b16 %v418, %v414
      %v499 = vpack.c.b16 %v423, %v419
      %v500 = vpack.c.b16 %v424, %v420
      %v501 = vpack.c.b16 %v425, %v421
      %v502 = vpack.c.b16 %v426, %v422
      %v503 = vpack.c.b16 %v431, %v427
      %v504 = vpack.c.b16 %v432, %v428
      %v505 = vpack.c.b16 %v433, %v429
      %v506 = vpack.c.b16 %v434, %v430
      %v507 = vpack.c.b16 %v439, %v435
      %v508 = vpack.c.b16 %v440, %v436
      %v509 = vpack.c.b16 %v441, %v437
      %v510 = vpack.c.b16 %v442, %v438
      %v511 = vpack.c.b16 %v447, %v443
      %v512 = vpack.c.b16 %v448, %v444
      %v513 = vpack.c.b16 %v449, %v445
      %v514 = vpack.c.b16 %v450, %v446
      %579 = vmatprep.subr.bf16.mxu0 %v452
      %580 = vmatpush1.bf16.msra.mxu0 %v451
      %581 = vmatprep.subr.bf16.mxu0 %v456
      %582 = vmatpush1.bf16.msra.mxu0 %v455
      %583 = vmatprep.subr.bf16.mxu0 %v460
      %584 = vmatpush1.bf16.msra.mxu0 %v459
      %585 = vmatprep.subr.bf16.mxu0 %v464
      %586 = vmatpush1.bf16.msra.mxu0 %v463
      %587 = vmatprep.subr.bf16.mxu0 %v468
      %588 = vmatpush1.bf16.msra.mxu0 %v467
      %589 = vmatprep.subr.bf16.mxu0 %v472
      %590 = vmatpush1.bf16.msra.mxu0 %v471
      %591 = vmatprep.subr.bf16.mxu0 %v476
      %592 = vmatpush1.bf16.msra.mxu0 %v475
      %593 = vmatprep.subr.bf16.mxu0 %v480
      %594 = vmatpush1.bf16.msra.mxu0 %v479
      %595 = vmatprep.subr.bf16.mxu0 %v484
      %596 = vmatpush1.bf16.msra.mxu0 %v483
      %597 = vmatprep.subr.bf16.mxu0 %v488
      %598 = vmatpush1.bf16.msra.mxu0 %v487
      %599 = vmatprep.subr.bf16.mxu0 %v492
      %600 = vmatpush1.bf16.msra.mxu0 %v491
      %601 = vmatprep.subr.bf16.mxu0 %v496
      %602 = vmatpush1.bf16.msra.mxu0 %v495
      %603 = vmatprep.subr.bf16.mxu0 %v500
      %604 = vmatpush1.bf16.msra.mxu0 %v499
      %605 = vmatprep.subr.bf16.mxu0 %v504
      %606 = vmatpush1.bf16.msra.mxu0 %v503
      %607 = vmatprep.subr.bf16.mxu0 %v508
      %608 = vmatpush1.bf16.msra.mxu0 %v507
      %609 = vmatprep.subr.bf16.mxu0 %v512
      %610 = vmatpush1.bf16.msra.mxu0 %v511
      %611 = vmatprep.mubr.bf16.mxu0 %v256
      %612 = vmatmul.mubr.bf16.gmra.mrb[0].mxu0 %v255
      %v613 = vpop.f32.mrb[0].mxu0
      %v614 = vadd.f32 %v242, %v613
      %v615 = vpop.f32.mrb[0].mxu0
      %v616 = vadd.f32 %v242, %v615
      %v617 = vpop.f32.mrb[0].mxu0
      %v618 = vadd.f32 %v247, %v617
      %v619 = vpop.f32.mrb[0].mxu0
      %v620 = vadd.f32 %v247, %v619
      %621 = vdwg.mxu0
      %622 = vmatprep.subr.bf16.mxu0 %v454
      %623 = vmatpush1.bf16.msra.mxu0 %v453
      %624 = vmatprep.subr.bf16.mxu0 %v458
      %625 = vmatpush1.bf16.msra.mxu0 %v457
      %626 = vmatprep.subr.bf16.mxu0 %v462
      %627 = vmatpush1.bf16.msra.mxu0 %v461
      %628 = vmatprep.subr.bf16.mxu0 %v466
      %629 = vmatpush1.bf16.msra.mxu0 %v465
      %630 = vmatprep.subr.bf16.mxu0 %v470
      %631 = vmatpush1.bf16.msra.mxu0 %v469
      %632 = vmatprep.subr.bf16.mxu0 %v474
      %633 = vmatpush1.bf16.msra.mxu0 %v473
      %634 = vmatprep.subr.bf16.mxu0 %v478
      %635 = vmatpush1.bf16.msra.mxu0 %v477
      %636 = vmatprep.subr.bf16.mxu0 %v482
      %637 = vmatpush1.bf16.msra.mxu0 %v481
      %638 = vmatprep.subr.bf16.mxu0 %v486
      %639 = vmatpush1.bf16.msra.mxu0 %v485
      %640 = vmatprep.subr.bf16.mxu0 %v490
      %641 = vmatpush1.bf16.msra.mxu0 %v489
      %642 = vmatprep.subr.bf16.mxu0 %v494
      %643 = vmatpush1.bf16.msra.mxu0 %v493
      %644 = vmatprep.subr.bf16.mxu0 %v498
      %645 = vmatpush1.bf16.msra.mxu0 %v497
      %646 = vmatprep.subr.bf16.mxu0 %v502
      %647 = vmatpush1.bf16.msra.mxu0 %v501
      %648 = vmatprep.subr.bf16.mxu0 %v506
      %649 = vmatpush1.bf16.msra.mxu0 %v505
      %650 = vmatprep.subr.bf16.mxu0 %v510
      %651 = vmatpush1.bf16.msra.mxu0 %v509
      %652 = vmatprep.subr.bf16.mxu0 %v514
      %653 = vmatpush1.bf16.msra.mxu0 %v513
      %654 = vmatprep.mubr.bf16.mxu0 %v256
      %655 = vmatmul.mubr.bf16.gmra.mrb[0].mxu0 %v255
      %v656 = vpop.f32.mrb[0].mxu0
      %v657 = vadd.f32 %v242, %v656
      %v658 = vpop.f32.mrb[0].mxu0
      %v659 = vadd.f32 %v242, %v658
      %v660 = vpop.f32.mrb[0].mxu0
      %v661 = vadd.f32 %v247, %v660
      %v662 = vpop.f32.mrb[0].mxu0
      %v663 = vadd.f32 %v247, %v662
      %664 = vdwg.mxu0
      %v665 = vmax.f32 %v614, 0.0
      %v666 = vmax.f32 %v616, 0.0
      %v667 = vmax.f32 %v657, 0.0
      %v668 = vmax.f32 %v659, 0.0
      %v669 = vmax.f32 %v618, 0.0
      %v670 = vmax.f32 %v620, 0.0
      %v671 = vmax.f32 %v661, 0.0
      %v672 = vmax.f32 %v663, 0.0
      %v673 = vpack.c.bf16 %v669, %v665
      %v674 = vpack.c.bf16 %v670, %v666
      %v675 = vpack.c.bf16 %v671, %v667
      %v676 = vpack.c.bf16 %v672, %v668
      %v681 = vunpack.c.l.b16 %v673
      %v682 = vunpack.c.l.b16 %v674
      %v683 = vunpack.c.l.b16 %v675
      %v684 = vunpack.c.l.b16 %v676
      %v685 = vunpack.c.h.b16 %v673
      %v686 = vunpack.c.h.b16 %v674
      %v687 = vunpack.c.h.b16 %v675
      %v688 = vunpack.c.h.b16 %v676
      %v689 = vpack.c.b16 %v682, %v681
      %v690 = vpack.c.b16 %v684, %v683
      %v691 = vpack.c.b16 %v686, %v685
      %v692 = vpack.c.b16 %v688, %v687
      %697 = vst [vmem:[%s170] sm:$0xff] %v689
      %vm698 = vcmask 1043456
      %vm699 = vcmask 130052
      %vm700 = vmor %vm699, %vm698
      %701 = vst.msk [vmem:[%s170 + $0x8] sm:$0xff] %vm700, %v690
      %702 = vst [vmem:[%s170 + $0x10] sm:$0xff] %v691
      %703 = vst.msk [vmem:[%s170 + $0x18] sm:$0xff] %vm700, %v692
      %p704 = scmp.lt.s32.totalorder %s14, 1
      %s705 = scalar_select %p704, %s14, 1
      %s706 = smul.addr %s705, 8
      %s707 = smul.addr %s706, 4
      %s708 = scalar_lea.vmem %s3, %s707
      // Predicated region
      $region33: #{ddqn_forward.3} parent=31 // pred_check
        %p709 = pneg %p100
      $region34: #{ddqn_forward.3} parent=31 // pred_check_branch
        %711 = sbr.rel (%p709) target = $region36
      $region35: #{ddqn_forward.3} parent=31 // pred_region
        _
      $region36: #{ddqn_forward.3} parent=31 // pred_fallthru
        _
    $region32: #{ddqn_forward.3} parent=5 // pred_fallthru
      _
    %p712 = scmp.le.s32.totalorder 2, %s9
    // Predicated region
    $region37: #{ddqn_forward.3} parent=5 // pred_check
      %p713 = pneg %p712
    $region38: #{ddqn_forward.3} parent=5 // pred_check_branch
      %715 = sbr.rel (%p713) target = $region40
    $region39: #{ddqn_forward.3} parent=5 // pred_region
      %s716 = ssub.s32 %s9, 2
      // Predicated region
      $region41: #{ddqn_forward.3} parent=39 // pred_check
        %p717 = pneg %p106
      $region42: #{ddqn_forward.3} parent=39 // pred_check_branch
        %719 = sbr.rel (%p717) target = $region44
      $region43: #{ddqn_forward.3} parent=39 // pred_region
        %p720 = scmp.lt.s32.totalorder %s15, 1
        %s721 = scalar_select %p720, %s15, 1
        %s722 = smul.addr %s721, 8
        %s723 = smul.addr %s722, 4
        %s724 = scalar_lea.vmem %s3, %s723
      $region44: #{ddqn_forward.3} parent=39 // pred_fallthru
        _
    $region40: #{ddqn_forward.3} parent=5 // pred_fallthru
      _
  $region6: #{ddqn_forward.3} parent=0 // loop_footer
    %s13 = sadd.s32 1, %s9
  $region7: #{ddqn_forward.3} parent=0 // loop_footer_branch
    %8 = sbr.rel target = $region3
  $region8: #{ddqn_forward.3} parent=0 // loop_exit
    _

// kernel: ddqn_forward.4
$region0: #{ddqn_forward.4}
  #allocation0 [shape = 'u32[]', space=smem, size = 0x4, offset = 0x4, fixed_abs, tag = 'smem constant byte address 0x4 - core index']
  #allocation1 [shape = 'u32[144,128]{1,0:T(1,128)}', space=vmem, size = 0x12000, scoped, tag = 'internal scratch']
  %s0 = inlined_call_operand.vmem [shape: bf16[32,256], index: 0, kind: input, shape index: {}]
  %s1 = inlined_call_operand.vmem [shape: bf16[2,256,81], index: 1, kind: input, shape index: {}]
  %s2 = inlined_call_operand.vmem [shape: f32[32,1], index: 2, kind: input, shape index: {}]
  %s3 = inlined_call_operand.vmem [shape: bf16[2,32,81], index: 3, kind: output, shape index: {}]
  %s4 = sld [smem:[#allocation0]]
  $region45: #{ddqn_forward.4} parent=0
    _
  %s6 = ssub.s32 1, %s4
  %s7 = scalar_select 0, %s6, %s4
  loop: start=0, step=1, limit=4
  $region2: #{ddqn_forward.4} parent=0 // loop_pre_header
    _
  $region3: #{ddqn_forward.4} parent=0 // loop_header
    %s9 = sphi 0, %s13
    %p10 = scmp.ge.s32.totalorder %s9, 4
    %s17 = sphi 0, %s17
    %s19 = sphi 0, %s17
    %s20 = sphi 0, %s19
    %s34 = sphi 0, %s20
    %s40 = sphi 0, %s42
    %s43 = sphi 0, %s40
    %s44 = sphi 0, %s43
    %s60 = sphi 0, %s44
    %s64 = sphi 0, %s64
    %s66 = sphi 0, %s64
    %s67 = sphi 0, %s66
    %s81 = sphi 0, %s67
    %s87 = sphi 0, %s89
    %s90 = sphi 0, %s87
    %s91 = sphi 0, %s90
    %s107 = sphi 0, %s91
  $region4: #{ddqn_forward.4} parent=0 // loop_header_branch
    %12 = sbr.rel (%p10) target = $region8
  $region5: #{ddqn_forward.4} parent=0 // loop_body
    %s14 = ssub.s32 %s9, 1
    %s15 = ssub.s32 %s9, 2
    %s16 = sadd.s32 %s9, 1
    %s18 = sadd.s32 %s17, 1
    %p21 = scmp.eq.s32.totalorder %s9, 1
    %p22 = scmp.ne.s32.totalorder %s17, %s19
    %p23 = scmp.eq.s32.totalorder %s9, 0
    %p24 = por %p22, %p23
    %p25 = scmp.ne.s32.totalorder %s17, %s19
    %p26 = scmp.eq.s32.totalorder %s14, 1
    %p27 = por %p25, %p26
    %p28 = scmp.ne.s32.totalorder %s19, %s20
    %p29 = scmp.eq.s32.totalorder %s14, 0
    %p30 = por %p28, %p29
    %p31 = scmp.ne.s32.totalorder %s19, %s20
    %p32 = scmp.eq.s32.totalorder %s15, 1
    %p33 = por %p31, %p32
    %p35 = scmp.ne.s32.totalorder %s20, %s34
    %p36 = scmp.eq.s32.totalorder %s15, 0
    %p37 = por %p35, %p36
    %s38 = ssub.s32 %s9, %s16
    %p39 = scmp.eq.s32.totalorder %s38, 0
    %s41 = sadd.s32 %s40, 1
    %s42 = scalar_select %p39, %s40, %s41
    %p45 = pneg %p39
    %p46 = scmp.eq.s32.totalorder %s9, 1
    %p47 = por %p45, %p46
    %p48 = scmp.ne.s32.totalorder %s40, %s43
    %p49 = scmp.eq.s32.totalorder %s9, 0
    %p50 = por %p48, %p49
    %p51 = scmp.ne.s32.totalorder %s40, %s43
    %p52 = scmp.eq.s32.totalorder %s14, 1
    %p53 = por %p51, %p52
    %p54 = scmp.ne.s32.totalorder %s43, %s44
    %p55 = scmp.eq.s32.totalorder %s14, 0
    %p56 = por %p54, %p55
    %p57 = scmp.ne.s32.totalorder %s43, %s44
    %p58 = scmp.eq.s32.totalorder %s15, 1
    %p59 = por %p57, %p58
    %p61 = scmp.ne.s32.totalorder %s44, %s60
    %p62 = scmp.eq.s32.totalorder %s15, 0
    %p63 = por %p61, %p62
    %s65 = sadd.s32 %s64, 1
    %p68 = scmp.eq.s32.totalorder %s9, 1
    %p69 = scmp.ne.s32.totalorder %s64, %s66
    %p70 = scmp.eq.s32.totalorder %s9, 0
    %p71 = por %p69, %p70
    %p72 = scmp.ne.s32.totalorder %s64, %s66
    %p73 = scmp.eq.s32.totalorder %s14, 1
    %p74 = por %p72, %p73
    %p75 = scmp.ne.s32.totalorder %s66, %s67
    %p76 = scmp.eq.s32.totalorder %s14, 0
    %p77 = por %p75, %p76
    %p78 = scmp.ne.s32.totalorder %s66, %s67
    %p79 = scmp.eq.s32.totalorder %s15, 1
    %p80 = por %p78, %p79
    %p82 = scmp.ne.s32.totalorder %s67, %s81
    %p83 = scmp.eq.s32.totalorder %s15, 0
    %p84 = por %p82, %p83
    %s85 = ssub.s32 %s9, %s16
    %p86 = scmp.eq.s32.totalorder %s85, 0
    %s88 = sadd.s32 %s87, 1
    %s89 = scalar_select %p86, %s87, %s88
    %p92 = pneg %p86
    %p93 = scmp.eq.s32.totalorder %s9, 1
    %p94 = por %p92, %p93
    %p95 = scmp.ne.s32.totalorder %s87, %s90
    %p96 = scmp.eq.s32.totalorder %s9, 0
    %p97 = por %p95, %p96
    %p98 = scmp.ne.s32.totalorder %s87, %s90
    %p99 = scmp.eq.s32.totalorder %s14, 1
    %p100 = por %p98, %p99
    %p101 = scmp.ne.s32.totalorder %s90, %s91
    %p102 = scmp.eq.s32.totalorder %s14, 0
    %p103 = por %p101, %p102
    %p104 = scmp.ne.s32.totalorder %s90, %s91
    %p105 = scmp.eq.s32.totalorder %s15, 1
    %p106 = por %p104, %p105
    %p108 = scmp.ne.s32.totalorder %s91, %s107
    %p109 = scmp.eq.s32.totalorder %s15, 0
    %p110 = por %p108, %p109
    %p111 = scmp.le.s32.totalorder 1, %s9
    %p112 = scmp.lt.s32.totalorder %s9, 3
    %p113 = pnand %p111, %p112
    %p114 = pneg %p113
    // Predicated region
    $region9: #{ddqn_forward.4} parent=5 // pred_check
      _
    $region10: #{ddqn_forward.4} parent=5 // pred_check_branch
      %116 = sbr.rel (%p113) target = $region12
    $region11: #{ddqn_forward.4} parent=5 // pred_region
      %s117 = ssub.s32 %s9, 1
      // Predicated region
      $region13: #{ddqn_forward.4} parent=11 // pred_check
        %p118 = pneg %p30
      $region14: #{ddqn_forward.4} parent=11 // pred_check_branch
        %120 = sbr.rel (%p118) target = $region16
      $region15: #{ddqn_forward.4} parent=11 // pred_region
        _
      $region16: #{ddqn_forward.4} parent=11 // pred_fallthru
        _
      // Predicated region
      $region17: #{ddqn_forward.4} parent=11 // pred_check
        %p121 = pneg %p77
      $region18: #{ddqn_forward.4} parent=11 // pred_check_branch
        %123 = sbr.rel (%p121) target = $region20
      $region19: #{ddqn_forward.4} parent=11 // pred_region
        _
      $region20: #{ddqn_forward.4} parent=11 // pred_fallthru
        _
    $region12: #{ddqn_forward.4} parent=5 // pred_fallthru
      _
    %p124 = scmp.lt.s32.totalorder %s9, 2
    // Predicated region
    $region21: #{ddqn_forward.4} parent=5 // pred_check
      %p125 = pneg %p124
    $region22: #{ddqn_forward.4} parent=5 // pred_check_branch
      %127 = sbr.rel (%p125) target = $region24
    $region23: #{ddqn_forward.4} parent=5 // pred_region
      // Predicated region
      $region25: #{ddqn_forward.4} parent=23 // pred_check
        %p128 = pneg %p50
      $region26: #{ddqn_forward.4} parent=23 // pred_check_branch
        %130 = sbr.rel (%p128) target = $region28
      $region27: #{ddqn_forward.4} parent=23 // pred_region
        %p131 = scmp.lt.s32.totalorder %s9, 1
        %s132 = scalar_select %p131, %s9, 1
        %s133 = smul.addr %s132, 32
        %s134 = smul.addr %s133, 4
        %s135 = scalar_lea.vmem %s1, %s134
      $region28: #{ddqn_forward.4} parent=23 // pred_fallthru
        _
    $region24: #{ddqn_forward.4} parent=5 // pred_fallthru
      _
    %p136 = scmp.le.s32.totalorder 1, %s9
    %p137 = scmp.lt.s32.totalorder %s9, 3
    %p138 = pnand %p136, %p137
    %p139 = pneg %p138
    // Predicated region
    $region29: #{ddqn_forward.4} parent=5 // pred_check
      _
    $region30: #{ddqn_forward.4} parent=5 // pred_check_branch
      %141 = sbr.rel (%p138) target = $region32
    $region31: #{ddqn_forward.4} parent=5 // pred_region
      %s142 = ssub.s32 %s9, 1
      %p143 = pneg %p30
      %p144 = pneg %p27
      %p145 = scmp.lt.s32.totalorder %s14, 1
      %s146 = scalar_select %p145, %s14, 1
      %s147 = smul.addr %s146, 32
      %s148 = smul.addr %s147, 4
      %s149 = scalar_lea.vmem %s1, %s148
      %p150 = pneg %p56
      %p151 = pneg %p53
      %p152 = pneg %p77
      %p153 = pneg %p74
      %p154 = pneg %p103
      %p155 = pneg %p100
      %p156 = scmp.lt.s32.totalorder %s14, 1
      %s157 = scalar_select %p156, %s14, 1
      %s158 = smul.addr %s157, 4
      %s159 = smul.addr %s158, 4
      %s160 = scalar_lea.vmem %s3, %s159
      %p161 = scmp.lt.s32.totalorder %s14, 1
      %s162 = scalar_select %p161, %s14, 1
      %s163 = smul.addr %s162, 32
      %s164 = smul.addr %s163, 4
      %s165 = scalar_lea.vmem %s1, %s164
      %p166 = scmp.lt.s32.totalorder %s14, 1
      %s167 = scalar_select %p166, %s14, 1
      %s168 = smul.addr %s167, 4
      %s169 = smul.addr %s168, 4
      %s170 = scalar_lea.vmem %s3, %s169
      %v172 = vld [vmem:[%s0] sm:$0xff]
      %v173 = vld [vmem:[%s0 + $0x8] sm:$0xff]
      %v174 = vld [vmem:[%s0 + $0x10] sm:$0xff]
      %v175 = vld [vmem:[%s0 + $0x18] sm:$0xff]
      %v176 = vld [vmem:[%s165] sm:$0xf]
      %v177 = vld [vmem:[%s165 + $0x4] sm:$0xf]
      %v178 = vld [vmem:[%s165 + $0x8] sm:$0xf]
      %v179 = vld [vmem:[%s165 + $0xc] sm:$0xf]
      %v180 = vld [vmem:[%s165 + $0x10] sm:$0xf]
      %v181 = vld [vmem:[%s165 + $0x14] sm:$0xf]
      %v182 = vld [vmem:[%s165 + $0x18] sm:$0xf]
      %v183 = vld [vmem:[%s165 + $0x1c] sm:$0xf]
      %v184 = vld [vmem:[%s165 + $0x20] sm:$0xf]
      %v185 = vld [vmem:[%s165 + $0x24] sm:$0xf]
      %v186 = vld [vmem:[%s165 + $0x28] sm:$0xf]
      %v187 = vld [vmem:[%s165 + $0x2c] sm:$0xf]
      %v188 = vld [vmem:[%s165 + $0x30] sm:$0xf]
      %v189 = vld [vmem:[%s165 + $0x34] sm:$0xf]
      %v190 = vld [vmem:[%s165 + $0x38] sm:$0xf]
      %v191 = vld [vmem:[%s165 + $0x3c] sm:$0xf]
      %v192 = vld [vmem:[%s165 + $0x40] sm:$0xf]
      %v193 = vld [vmem:[%s165 + $0x44] sm:$0xf]
      %v194 = vld [vmem:[%s165 + $0x48] sm:$0xf]
      %v195 = vld [vmem:[%s165 + $0x4c] sm:$0xf]
      %v196 = vld [vmem:[%s165 + $0x50] sm:$0xf]
      %v197 = vld [vmem:[%s165 + $0x54] sm:$0xf]
      %v198 = vld [vmem:[%s165 + $0x58] sm:$0xf]
      %v199 = vld [vmem:[%s165 + $0x5c] sm:$0xf]
      %v200 = vld [vmem:[%s165 + $0x60] sm:$0xf]
      %v201 = vld [vmem:[%s165 + $0x64] sm:$0xf]
      %v202 = vld [vmem:[%s165 + $0x68] sm:$0xf]
      %v203 = vld [vmem:[%s165 + $0x6c] sm:$0xf]
      %v204 = vld [vmem:[%s165 + $0x70] sm:$0xf]
      %v205 = vld [vmem:[%s165 + $0x74] sm:$0xf]
      %v206 = vld [vmem:[%s165 + $0x78] sm:$0xf]
      %v207 = vld [vmem:[%s165 + $0x7c] sm:$0xf]
      %v208 = vld [vmem:[%s2] sm:$0xff]
      %v209 = vld [vmem:[%s2 + $0x8] sm:$0xff]
      %v210 = vld [vmem:[%s2 + $0x10] sm:$0xff]
      %v211 = vld [vmem:[%s2 + $0x18] sm:$0xff]
      %213 = vset.pattern.permute.xlu0 0
      %214 = vperm.xlu0 %213, %v208
      %v215 = vpop.permute.xlu0 %214
      %218 = vset.pattern.permute.xlu0 0
      %219 = vperm.xlu0 %218, %v209
      %v220 = vpop.permute.xlu0 %219
      %223 = vset.pattern.permute.xlu0 0
      %224 = vperm.xlu0 %223, %v210
      %v225 = vpop.permute.xlu0 %224
      %228 = vset.pattern.permute.xlu0 0
      %229 = vperm.xlu0 %228, %v211
      %v230 = vpop.permute.xlu0 %229
      %v236 = vunpack.c.l.b16 %v172
      %v237 = vunpack.c.h.b16 %v172
      %v238 = vunpack.c.l.b16 %v173
      %v239 = vunpack.c.h.b16 %v173
      %v240 = vunpack.c.l.b16 %v174
      %v241 = vunpack.c.h.b16 %v174
      %v242 = vunpack.c.l.b16 %v175
      %v243 = vunpack.c.h.b16 %v175
      %v244 = vpack.c.b16 %v238, %v236
      %v245 = vpack.c.b16 %v239, %v237
      %v246 = vpack.c.b16 %v242, %v240
      %v247 = vpack.c.b16 %v243, %v241
      %v284 = vunpack.c.l.b16 %v176
      %v285 = vunpack.c.l.b16 %v177
      %v286 = vunpack.c.l.b16 %v178
      %v287 = vunpack.c.l.b16 %v179
      %v288 = vunpack.c.l.b16 %v180
      %v289 = vunpack.c.l.b16 %v181
      %v290 = vunpack.c.l.b16 %v182
      %v291 = vunpack.c.l.b16 %v183
      %v292 = vunpack.c.l.b16 %v184
      %v293 = vunpack.c.l.b16 %v185
      %v294 = vunpack.c.l.b16 %v186
      %v295 = vunpack.c.l.b16 %v187
      %v296 = vunpack.c.l.b16 %v188
      %v297 = vunpack.c.l.b16 %v189
      %v298 = vunpack.c.l.b16 %v190
      %v299 = vunpack.c.l.b16 %v191
      %v300 = vunpack.c.l.b16 %v192
      %v301 = vunpack.c.l.b16 %v193
      %v302 = vunpack.c.l.b16 %v194
      %v303 = vunpack.c.l.b16 %v195
      %v304 = vunpack.c.l.b16 %v196
      %v305 = vunpack.c.l.b16 %v197
      %v306 = vunpack.c.l.b16 %v198
      %v307 = vunpack.c.l.b16 %v199
      %v308 = vunpack.c.l.b16 %v200
      %v309 = vunpack.c.l.b16 %v201
      %v310 = vunpack.c.l.b16 %v202
      %v311 = vunpack.c.l.b16 %v203
      %v312 = vunpack.c.l.b16 %v204
      %v313 = vunpack.c.l.b16 %v205
      %v314 = vunpack.c.l.b16 %v206
      %v315 = vunpack.c.l.b16 %v207
      %v316 = vpack.c.b16 %v285, %v284
      %v317 = vpack.c.b16 %v287, %v286
      %v318 = vpack.c.b16 %v289, %v288
      %v319 = vpack.c.b16 %v291, %v290
      %v320 = vpack.c.b16 %v293, %v292
      %v321 = vpack.c.b16 %v295, %v294
      %v322 = vpack.c.b16 %v297, %v296
      %v323 = vpack.c.b16 %v299, %v298
      %v324 = vpack.c.b16 %v301, %v300
      %v325 = vpack.c.b16 %v303, %v302
      %v326 = vpack.c.b16 %v305, %v304
      %v327 = vpack.c.b16 %v307, %v306
      %v328 = vpack.c.b16 %v309, %v308
      %v329 = vpack.c.b16 %v311, %v310
      %v330 = vpack.c.b16 %v313, %v312
      %v331 = vpack.c.b16 %v315, %v314
      %348 = vmatprep.subr.bf16.mxu0 0
      %349 = vmatpush1.bf16.msra.mxu0 %v316
      %350 = vmatprep.subr.bf16.mxu0 0
      %351 = vmatpush1.bf16.msra.mxu0 %v317
      %352 = vmatprep.subr.bf16.mxu0 0
      %353 = vmatpush1.bf16.msra.mxu0 %v318
      %354 = vmatprep.subr.bf16.mxu0 0
      %355 = vmatpush1.bf16.msra.mxu0 %v319
      %356 = vmatprep.subr.bf16.mxu0 0
      %357 = vmatpush1.bf16.msra.mxu0 %v320
      %358 = vmatprep.subr.bf16.mxu0 0
      %359 = vmatpush1.bf16.msra.mxu0 %v321
      %360 = vmatprep.subr.bf16.mxu0 0
      %361 = vmatpush1.bf16.msra.mxu0 %v322
      %362 = vmatprep.subr.bf16.mxu0 0
      %363 = vmatpush1.bf16.msra.mxu0 %v323
      %364 = vmatprep.subr.bf16.mxu0 0
      %365 = vmatpush1.bf16.msra.mxu0 %v324
      %366 = vmatprep.subr.bf16.mxu0 0
      %367 = vmatpush1.bf16.msra.mxu0 %v325
      %368 = vmatprep.subr.bf16.mxu0 0
      %369 = vmatpush1.bf16.msra.mxu0 %v326
      %370 = vmatprep.subr.bf16.mxu0 0
      %371 = vmatpush1.bf16.msra.mxu0 %v327
      %372 = vmatprep.subr.bf16.mxu0 0
      %373 = vmatpush1.bf16.msra.mxu0 %v328
      %374 = vmatprep.subr.bf16.mxu0 0
      %375 = vmatpush1.bf16.msra.mxu0 %v329
      %376 = vmatprep.subr.bf16.mxu0 0
      %377 = vmatpush1.bf16.msra.mxu0 %v330
      %378 = vmatprep.subr.bf16.mxu0 0
      %379 = vmatpush1.bf16.msra.mxu0 %v331
      %380 = vmatprep.mubr.bf16.mxu0 %v245
      %381 = vmatmul.mubr.bf16.gmra.mrb[0].mxu0 %v244
      %v382 = vpop.f32.mrb[0].mxu0
      %v383 = vadd.f32 %v215, %v382
      %v384 = vpop.f32.mrb[0].mxu0
      %v385 = vpop.f32.mrb[0].mxu0
      %v386 = vadd.f32 %v220, %v385
      %v387 = vpop.f32.mrb[0].mxu0
      %388 = vmatprep.mubr.bf16.mxu0 %v247
      %389 = vmatmul.mubr.bf16.gmra.mrb[0].mxu0 %v246
      %v390 = vpop.f32.mrb[0].mxu0
      %v391 = vadd.f32 %v225, %v390
      %v392 = vpop.f32.mrb[0].mxu0
      %v393 = vpop.f32.mrb[0].mxu0
      %v394 = vadd.f32 %v230, %v393
      %v395 = vpop.f32.mrb[0].mxu0
      %396 = vdwg.mxu0
      %v397 = vmax.f32 %v383, 0.0
      %v398 = vmax.f32 %v386, 0.0
      %v399 = vmax.f32 %v391, 0.0
      %v400 = vmax.f32 %v394, 0.0
      %v401 = vpack.c.bf16 %v398, %v397
      %v402 = vpack.c.bf16 %v400, %v399
      %v405 = vunpack.c.l.b16 %v401
      %v406 = vunpack.c.h.b16 %v401
      %v407 = vunpack.c.l.b16 %v402
      %v408 = vunpack.c.h.b16 %v402
      %v409 = vpack.c.b16 %v405, %v405
      %v410 = vpack.c.b16 %v406, %v406
      %v411 = vpack.c.b16 %v407, %v407
      %v412 = vpack.c.b16 %v408, %v408
      %vm417 = vcmask 658432
      %418 = vst.msk [vmem:[%s170] sm:$0xf] %vm417, %v409
      %419 = vst.msk [vmem:[%s170 + $0x4] sm:$0xf] %vm417, %v410
      %420 = vst.msk [vmem:[%s170 + $0x8] sm:$0xf] %vm417, %v411
      %421 = vst.msk [vmem:[%s170 + $0xc] sm:$0xf] %vm417, %v412
      %p422 = scmp.lt.s32.totalorder %s14, 1
      %s423 = scalar_select %p422, %s14, 1
      %s424 = smul.addr %s423, 4
      %s425 = smul.addr %s424, 4
      %s426 = scalar_lea.vmem %s3, %s425
      // Predicated region
      $region33: #{ddqn_forward.4} parent=31 // pred_check
        %p427 = pneg %p100
      $region34: #{ddqn_forward.4} parent=31 // pred_check_branch
        %429 = sbr.rel (%p427) target = $region36
      $region35: #{ddqn_forward.4} parent=31 // pred_region
        _
      $region36: #{ddqn_forward.4} parent=31 // pred_fallthru
        _
    $region32: #{ddqn_forward.4} parent=5 // pred_fallthru
      _
    %p430 = scmp.le.s32.totalorder 2, %s9
    // Predicated region
    $region37: #{ddqn_forward.4} parent=5 // pred_check
      %p431 = pneg %p430
    $region38: #{ddqn_forward.4} parent=5 // pred_check_branch
      %433 = sbr.rel (%p431) target = $region40
    $region39: #{ddqn_forward.4} parent=5 // pred_region
      %s434 = ssub.s32 %s9, 2
      // Predicated region
      $region41: #{ddqn_forward.4} parent=39 // pred_check
        %p435 = pneg %p106
      $region42: #{ddqn_forward.4} parent=39 // pred_check_branch
        %437 = sbr.rel (%p435) target = $region44
      $region43: #{ddqn_forward.4} parent=39 // pred_region
        %p438 = scmp.lt.s32.totalorder %s15, 1
        %s439 = scalar_select %p438, %s15, 1
        %s440 = smul.addr %s439, 4
        %s441 = smul.addr %s440, 4
        %s442 = scalar_lea.vmem %s3, %s441
      $region44: #{ddqn_forward.4} parent=39 // pred_fallthru
        _
    $region40: #{ddqn_forward.4} parent=5 // pred_fallthru
      _
  $region6: #{ddqn_forward.4} parent=0 // loop_footer
    %s13 = sadd.s32 1, %s9
  $region7: #{ddqn_forward.4} parent=0 // loop_footer_branch
    %8 = sbr.rel target = $region3
  $region8: #{ddqn_forward.4} parent=0 // loop_exit
    _

// kernel: ddqn_forward.5
$region0: #{ddqn_forward.5}
  #allocation0 [shape = 'u32[]', space=smem, size = 0x4, offset = 0x4, fixed_abs, tag = 'smem constant byte address 0x4 - core index']
  #allocation1 [shape = 'u32[144,128]{1,0:T(1,128)}', space=vmem, size = 0x12000, scoped, tag = 'internal scratch']
  %s0 = inlined_call_operand.vmem [shape: bf16[2,2592], index: 0, kind: input, shape index: {}]
  %s1 = inlined_call_operand.vmem [shape: bf16[2592,256], index: 1, kind: input, shape index: {}]
  %s2 = inlined_call_operand.vmem [shape: f32[1,256], index: 2, kind: input, shape index: {}]
  %s3 = inlined_call_operand.vmem [shape: bf16[256,128], index: 3, kind: input, shape index: {}]
  %s4 = inlined_call_operand.vmem [shape: f32[1,128], index: 4, kind: input, shape index: {}]
  %s5 = inlined_call_operand.hbm [shape: f32[2,128], index: 5, kind: output, shape index: {}]
  %s6 = sld [smem:[#allocation0]]
  $region30: #{ddqn_forward.5} parent=0
    _
  %s8 = ssub.s32 1, %s6
  %s9 = scalar_select 0, %s8, %s6
  $region1: #{ddqn_forward.5} parent=0
    #allocation2 [shape = 'u8[1024]{0}', space=vmem, size = 0x400, scoped, tag = 'output window, operand 0, single buffered']
    #allocation3 [shape = 's32[1]{0}', space=sflag, size = 0x4, scoped, tag = 'scoped memory for ddqn_forward.5']
    %10 = vsyncpa [#allocation3], 0
    // Predicated region
    $region2: #{ddqn_forward.5} parent=1 // pred_check
      _
    $region3: #{ddqn_forward.5} parent=1 // pred_check_branch
      %12 = sbr.rel (0) target = $region5
    $region4: #{ddqn_forward.5} parent=1 // pred_region
      _
    $region5: #{ddqn_forward.5} parent=1 // pred_fallthru
      _
    // Predicated region
    $region6: #{ddqn_forward.5} parent=1 // pred_check
      _
    $region7: #{ddqn_forward.5} parent=1 // pred_check_branch
      %14 = sbr.rel (0) target = $region9
    $region8: #{ddqn_forward.5} parent=1 // pred_region
      _
    $region9: #{ddqn_forward.5} parent=1 // pred_fallthru
      _
    // Predicated region
    $region10: #{ddqn_forward.5} parent=1 // pred_check
      _
    $region11: #{ddqn_forward.5} parent=1 // pred_check_branch
      %16 = sbr.rel (0) target = $region13
    $region12: #{ddqn_forward.5} parent=1 // pred_region
      _
    $region13: #{ddqn_forward.5} parent=1 // pred_fallthru
      _
    // Predicated region
    $region14: #{ddqn_forward.5} parent=1 // pred_check
      _
    $region15: #{ddqn_forward.5} parent=1 // pred_check_branch
      %18 = sbr.rel (0) target = $region17
    $region16: #{ddqn_forward.5} parent=1 // pred_region
      _
    $region17: #{ddqn_forward.5} parent=1 // pred_fallthru
      _
    // Predicated region
    $region18: #{ddqn_forward.5} parent=1 // pred_check
      _
    $region19: #{ddqn_forward.5} parent=1 // pred_check_branch
      %20 = sbr.rel (0) target = $region21
    $region20: #{ddqn_forward.5} parent=1 // pred_region
      _
    $region21: #{ddqn_forward.5} parent=1 // pred_fallthru
      _
    %v22 = vld [vmem:[%s0] sm:$0xff]
    %v23 = vld [vmem:[%s0 + $0x8] sm:$0xff]
    %v24 = vld [vmem:[%s0 + $0x10] sm:$0x1f]
    %v25 = vld [vmem:[%s1] sm:$0xff]
    %v26 = vld [vmem:[%s1 + $0x8] sm:$0xff]
    %v27 = vld [vmem:[%s1 + $0x10] sm:$0xff]
    %v28 = vld [vmem:[%s1 + $0x18] sm:$0xff]
    %v29 = vld [vmem:[%s1 + $0x20] sm:$0xff]
    %v30 = vld [vmem:[%s1 + $0x28] sm:$0xff]
    %v31 = vld [vmem:[%s1 + $0x30] sm:$0xff]
    %v32 = vld [vmem:[%s1 + $0x38] sm:$0xff]
    %v33 = vld [vmem:[%s1 + $0x40] sm:$0xff]
    %v34 = vld [vmem:[%s1 + $0x48] sm:$0xff]
    %v35 = vld [vmem:[%s1 + $0x50] sm:$0xff]
    %v36 = vld [vmem:[%s1 + $0x58] sm:$0xff]
    %v37 = vld [vmem:[%s1 + $0x60] sm:$0xff]
    %v38 = vld [vmem:[%s1 + $0x68] sm:$0xff]
    %v39 = vld [vmem:[%s1 + $0x70] sm:$0xff]
    %v40 = vld [vmem:[%s1 + $0x78] sm:$0xff]
    %v41 = vld [vmem:[%s1 + $0x80] sm:$0xff]
    %v42 = vld [vmem:[%s1 + $0x88] sm:$0xff]
    %v43 = vld [vmem:[%s1 + $0x90] sm:$0xff]
    %v44 = vld [vmem:[%s1 + $0x98] sm:$0xff]
    %v45 = vld [vmem:[%s1 + $0xa0] sm:$0xff]
    %v46 = vld [vmem:[%s1 + $0xa8] sm:$0xff]
    %v47 = vld [vmem:[%s1 + $0xb0] sm:$0xff]
    %v48 = vld [vmem:[%s1 + $0xb8] sm:$0xff]
    %v49 = vld [vmem:[%s1 + $0xc0] sm:$0xff]
    %v50 = vld [vmem:[%s1 + $0xc8] sm:$0xff]
    %v51 = vld [vmem:[%s1 + $0xd0] sm:$0xff]
    %v52 = vld [vmem:[%s1 + $0xd8] sm:$0xff]
    %v53 = vld [vmem:[%s1 + $0xe0] sm:$0xff]
    %v54 = vld [vmem:[%s1 + $0xe8] sm:$0xff]
    %v55 = vld [vmem:[%s1 + $0xf0] sm:$0xff]
    %v56 = vld [vmem:[%s1 + $0xf8] sm:$0xff]
    %v57 = vld [vmem:[%s1 + $0x100] sm:$0xff]
    %v58 = vld [vmem:[%s1 + $0x108] sm:$0xff]
    %v59 = vld [vmem:[%s1 + $0x110] sm:$0xff]
    %v60 = vld [vmem:[%s1 + $0x118] sm:$0xff]
    %v61 = vld [vmem:[%s1 + $0x120] sm:$0xff]
    %v62 = vld [vmem:[%s1 + $0x128] sm:$0xff]
    %v63 = vld [vmem:[%s1 + $0x130] sm:$0xff]
    %v64 = vld [vmem:[%s1 + $0x138] sm:$0xff]
    %v65 = vld [vmem:[%s1 + $0x140] sm:$0xff]
    %v66 = vld [vmem:[%s1 + $0x148] sm:$0xff]
    %v67 = vld [vmem:[%s1 + $0x150] sm:$0xff]
    %v68 = vld [vmem:[%s1 + $0x158] sm:$0xff]
    %v69 = vld [vmem:[%s1 + $0x160] sm:$0xff]
    %v70 = vld [vmem:[%s1 + $0x168] sm:$0xff]
    %v71 = vld [vmem:[%s1 + $0x170] sm:$0xff]
    %v72 = vld [vmem:[%s1 + $0x178] sm:$0xff]
    %v73 = vld [vmem:[%s1 + $0x180] sm:$0xff]
    %v74 = vld [vmem:[%s1 + $0x188] sm:$0xff]
    %v75 = vld [vmem:[%s1 + $0x190] sm:$0xff]
    %v76 = vld [vmem:[%s1 + $0x198] sm:$0xff]
    %v77 = vld [vmem:[%s1 + $0x1a0] sm:$0xff]
    %v78 = vld [vmem:[%s1 + $0x1a8] sm:$0xff]
    %v79 = vld [vmem:[%s1 + $0x1b0] sm:$0xff]
    %v80 = vld [vmem:[%s1 + $0x1b8] sm:$0xff]
    %v81 = vld [vmem:[%s1 + $0x1c0] sm:$0xff]
    %v82 = vld [vmem:[%s1 + $0x1c8] sm:$0xff]
    %v83 = vld [vmem:[%s1 + $0x1d0] sm:$0xff]
    %v84 = vld [vmem:[%s1 + $0x1d8] sm:$0xff]
    %v85 = vld [vmem:[%s1 + $0x1e0] sm:$0xff]
    %v86 = vld [vmem:[%s1 + $0x1e8] sm:$0xff]
    %v87 = vld [vmem:[%s1 + $0x1f0] sm:$0xff]
    %v88 = vld [vmem:[%s1 + $0x1f8] sm:$0xff]
    %v89 = vld [vmem:[%s1 + $0x200] sm:$0xff]
    %v90 = vld [vmem:[%s1 + $0x208] sm:$0xff]
    %v91 = vld [vmem:[%s1 + $0x210] sm:$0xff]
    %v92 = vld [vmem:[%s1 + $0x218] sm:$0xff]
    %v93 = vld [vmem:[%s1 + $0x220] sm:$0xff]
    %v94 = vld [vmem:[%s1 + $0x228] sm:$0xff]
    %v95 = vld [vmem:[%s1 + $0x230] sm:$0xff]
    %v96 = vld [vmem:[%s1 + $0x238] sm:$0xff]
    %v97 = vld [vmem:[%s1 + $0x240] sm:$0xff]
    %v98 = vld [vmem:[%s1 + $0x248] sm:$0xff]
    %v99 = vld [vmem:[%s1 + $0x250] sm:$0xff]
    %v100 = vld [vmem:[%s1 + $0x258] sm:$0xff]
    %v101 = vld [vmem:[%s1 + $0x260] sm:$0xff]
    %v102 = vld [vmem:[%s1 + $0x268] sm:$0xff]
    %v103 = vld [vmem:[%s1 + $0x270] sm:$0xff]
    %v104 = vld [vmem:[%s1 + $0x278] sm:$0xff]
    %v105 = vld [vmem:[%s1 + $0x280] sm:$0xff]
    %v106 = vld [vmem:[%s1 + $0x288] sm:$0xff]
    %v107 = vld [vmem:[%s1 + $0x290] sm:$0xff]
    %v108 = vld [vmem:[%s1 + $0x298] sm:$0xff]
    %v109 = vld [vmem:[%s1 + $0x2a0] sm:$0xff]
    %v110 = vld [vmem:[%s1 + $0x2a8] sm:$0xff]
    %v111 = vld [vmem:[%s1 + $0x2b0] sm:$0xff]
    %v112 = vld [vmem:[%s1 + $0x2b8] sm:$0xff]
    %v113 = vld [vmem:[%s1 + $0x2c0] sm:$0xff]
    %v114 = vld [vmem:[%s1 + $0x2c8] sm:$0xff]
    %v115 = vld [vmem:[%s1 + $0x2d0] sm:$0xff]
    %v116 = vld [vmem:[%s1 + $0x2d8] sm:$0xff]
    %v117 = vld [vmem:[%s1 + $0x2e0] sm:$0xff]
    %v118 = vld [vmem:[%s1 + $0x2e8] sm:$0xff]
    %v119 = vld [vmem:[%s1 + $0x2f0] sm:$0xff]
    %v120 = vld [vmem:[%s1 + $0x2f8] sm:$0xff]
    %v121 = vld [vmem:[%s1 + $0x300] sm:$0xff]
    %v122 = vld [vmem:[%s1 + $0x308] sm:$0xff]
    %v123 = vld [vmem:[%s1 + $0x310] sm:$0xff]
    %v124 = vld [vmem:[%s1 + $0x318] sm:$0xff]
    %v125 = vld [vmem:[%s1 + $0x320] sm:$0xff]
    %v126 = vld [vmem:[%s1 + $0x328] sm:$0xff]
    %v127 = vld [vmem:[%s1 + $0x330] sm:$0xff]
    %v128 = vld [vmem:[%s1 + $0x338] sm:$0xff]
    %v129 = vld [vmem:[%s1 + $0x340] sm:$0xff]
    %v130 = vld [vmem:[%s1 + $0x348] sm:$0xff]
    %v131 = vld [vmem:[%s1 + $0x350] sm:$0xff]
    %v132 = vld [vmem:[%s1 + $0x358] sm:$0xff]
    %v133 = vld [vmem:[%s1 + $0x360] sm:$0xff]
    %v134 = vld [vmem:[%s1 + $0x368] sm:$0xff]
    %v135 = vld [vmem:[%s1 + $0x370] sm:$0xff]
    %v136 = vld [vmem:[%s1 + $0x378] sm:$0xff]
    %v137 = vld [vmem:[%s1 + $0x380] sm:$0xff]
    %v138 = vld [vmem:[%s1 + $0x388] sm:$0xff]
    %v139 = vld [vmem:[%s1 + $0x390] sm:$0xff]
    %v140 = vld [vmem:[%s1 + $0x398] sm:$0xff]
    %v141 = vld [vmem:[%s1 + $0x3a0] sm:$0xff]
    %v142 = vld [vmem:[%s1 + $0x3a8] sm:$0xff]
    %v143 = vld [vmem:[%s1 + $0x3b0] sm:$0xff]
    %v144 = vld [vmem:[%s1 + $0x3b8] sm:$0xff]
    %v145 = vld [vmem:[%s1 + $0x3c0] sm:$0xff]
    %v146 = vld [vmem:[%s1 + $0x3c8] sm:$0xff]
    %v147 = vld [vmem:[%s1 + $0x3d0] sm:$0xff]
    %v148 = vld [vmem:[%s1 + $0x3d8] sm:$0xff]
    %v149 = vld [vmem:[%s1 + $0x3e0] sm:$0xff]
    %v150 = vld [vmem:[%s1 + $0x3e8] sm:$0xff]
    %v151 = vld [vmem:[%s1 + $0x3f0] sm:$0xff]
    %v152 = vld [vmem:[%s1 + $0x3f8] sm:$0xff]
    %v153 = vld [vmem:[%s1 + $0x400] sm:$0xff]
    %v154 = vld [vmem:[%s1 + $0x408] sm:$0xff]
    %v155 = vld [vmem:[%s1 + $0x410] sm:$0xff]
    %v156 = vld [vmem:[%s1 + $0x418] sm:$0xff]
    %v157 = vld [vmem:[%s1 + $0x420] sm:$0xff]
    %v158 = vld [vmem:[%s1 + $0x428] sm:$0xff]
    %v159 = vld [vmem:[%s1 + $0x430] sm:$0xff]
    %v160 = vld [vmem:[%s1 + $0x438] sm:$0xff]
    %v161 = vld [vmem:[%s1 + $0x440] sm:$0xff]
    %v162 = vld [vmem:[%s1 + $0x448] sm:$0xff]
    %v163 = vld [vmem:[%s1 + $0x450] sm:$0xff]
    %v164 = vld [vmem:[%s1 + $0x458] sm:$0xff]
    %v165 = vld [vmem:[%s1 + $0x460] sm:$0xff]
    %v166 = vld [vmem:[%s1 + $0x468] sm:$0xff]
    %v167 = vld [vmem:[%s1 + $0x470] sm:$0xff]
    %v168 = vld [vmem:[%s1 + $0x478] sm:$0xff]
    %v169 = vld [vmem:[%s1 + $0x480] sm:$0xff]
    %v170 = vld [vmem:[%s1 + $0x488] sm:$0xff]
    %v171 = vld [vmem:[%s1 + $0x490] sm:$0xff]
    %v172 = vld [vmem:[%s1 + $0x498] sm:$0xff]
    %v173 = vld [vmem:[%s1 + $0x4a0] sm:$0xff]
    %v174 = vld [vmem:[%s1 + $0x4a8] sm:$0xff]
    %v175 = vld [vmem:[%s1 + $0x4b0] sm:$0xff]
    %v176 = vld [vmem:[%s1 + $0x4b8] sm:$0xff]
    %v177 = vld [vmem:[%s1 + $0x4c0] sm:$0xff]
    %v178 = vld [vmem:[%s1 + $0x4c8] sm:$0xff]
    %v179 = vld [vmem:[%s1 + $0x4d0] sm:$0xff]
    %v180 = vld [vmem:[%s1 + $0x4d8] sm:$0xff]
    %v181 = vld [vmem:[%s1 + $0x4e0] sm:$0xff]
    %v182 = vld [vmem:[%s1 + $0x4e8] sm:$0xff]
    %v183 = vld [vmem:[%s1 + $0x4f0] sm:$0xff]
    %v184 = vld [vmem:[%s1 + $0x4f8] sm:$0xff]
    %v185 = vld [vmem:[%s1 + $0x500] sm:$0xff]
    %v186 = vld [vmem:[%s1 + $0x508] sm:$0xff]
    %v187 = vld [vmem:[%s1 + $0x510] sm:$0xff]
    %v188 = vld [vmem:[%s1 + $0x518] sm:$0xff]
    %v189 = vld [vmem:[%s1 + $0x520] sm:$0xff]
    %v190 = vld [vmem:[%s1 + $0x528] sm:$0xff]
    %v191 = vld [vmem:[%s1 + $0x530] sm:$0xff]
    %v192 = vld [vmem:[%s1 + $0x538] sm:$0xff]
    %v193 = vld [vmem:[%s1 + $0x540] sm:$0xff]
    %v194 = vld [vmem:[%s1 + $0x548] sm:$0xff]
    %v195 = vld [vmem:[%s1 + $0x550] sm:$0xff]
    %v196 = vld [vmem:[%s1 + $0x558] sm:$0xff]
    %v197 = vld [vmem:[%s1 + $0x560] sm:$0xff]
    %v198 = vld [vmem:[%s1 + $0x568] sm:$0xff]
    %v199 = vld [vmem:[%s1 + $0x570] sm:$0xff]
    %v200 = vld [vmem:[%s1 + $0x578] sm:$0xff]
    %v201 = vld [vmem:[%s1 + $0x580] sm:$0xff]
    %v202 = vld [vmem:[%s1 + $0x588] sm:$0xff]
    %v203 = vld [vmem:[%s1 + $0x590] sm:$0xff]
    %v204 = vld [vmem:[%s1 + $0x598] sm:$0xff]
    %v205 = vld [vmem:[%s1 + $0x5a0] sm:$0xff]
    %v206 = vld [vmem:[%s1 + $0x5a8] sm:$0xff]
    %v207 = vld [vmem:[%s1 + $0x5b0] sm:$0xff]
    %v208 = vld [vmem:[%s1 + $0x5b8] sm:$0xff]
    %v209 = vld [vmem:[%s1 + $0x5c0] sm:$0xff]
    %v210 = vld [vmem:[%s1 + $0x5c8] sm:$0xff]
    %v211 = vld [vmem:[%s1 + $0x5d0] sm:$0xff]
    %v212 = vld [vmem:[%s1 + $0x5d8] sm:$0xff]
    %v213 = vld [vmem:[%s1 + $0x5e0] sm:$0xff]
    %v214 = vld [vmem:[%s1 + $0x5e8] sm:$0xff]
    %v215 = vld [vmem:[%s1 + $0x5f0] sm:$0xff]
    %v216 = vld [vmem:[%s1 + $0x5f8] sm:$0xff]
    %v217 = vld [vmem:[%s1 + $0x600] sm:$0xff]
    %v218 = vld [vmem:[%s1 + $0x608] sm:$0xff]
    %v219 = vld [vmem:[%s1 + $0x610] sm:$0xff]
    %v220 = vld [vmem:[%s1 + $0x618] sm:$0xff]
    %v221 = vld [vmem:[%s1 + $0x620] sm:$0xff]
    %v222 = vld [vmem:[%s1 + $0x628] sm:$0xff]
    %v223 = vld [vmem:[%s1 + $0x630] sm:$0xff]
    %v224 = vld [vmem:[%s1 + $0x638] sm:$0xff]
    %v225 = vld [vmem:[%s1 + $0x640] sm:$0xff]
    %v226 = vld [vmem:[%s1 + $0x648] sm:$0xff]
    %v227 = vld [vmem:[%s1 + $0x650] sm:$0xff]
    %v228 = vld [vmem:[%s1 + $0x658] sm:$0xff]
    %v229 = vld [vmem:[%s1 + $0x660] sm:$0xff]
    %v230 = vld [vmem:[%s1 + $0x668] sm:$0xff]
    %v231 = vld [vmem:[%s1 + $0x670] sm:$0xff]
    %v232 = vld [vmem:[%s1 + $0x678] sm:$0xff]
    %v233 = vld [vmem:[%s1 + $0x680] sm:$0xff]
    %v234 = vld [vmem:[%s1 + $0x688] sm:$0xff]
    %v235 = vld [vmem:[%s1 + $0x690] sm:$0xff]
    %v236 = vld [vmem:[%s1 + $0x698] sm:$0xff]
    %v237 = vld [vmem:[%s1 + $0x6a0] sm:$0xff]
    %v238 = vld [vmem:[%s1 + $0x6a8] sm:$0xff]
    %v239 = vld [vmem:[%s1 + $0x6b0] sm:$0xff]
    %v240 = vld [vmem:[%s1 + $0x6b8] sm:$0xff]
    %v241 = vld [vmem:[%s1 + $0x6c0] sm:$0xff]
    %v242 = vld [vmem:[%s1 + $0x6c8] sm:$0xff]
    %v243 = vld [vmem:[%s1 + $0x6d0] sm:$0xff]
    %v244 = vld [vmem:[%s1 + $0x6d8] sm:$0xff]
    %v245 = vld [vmem:[%s1 + $0x6e0] sm:$0xff]
    %v246 = vld [vmem:[%s1 + $0x6e8] sm:$0xff]
    %v247 = vld [vmem:[%s1 + $0x6f0] sm:$0xff]
    %v248 = vld [vmem:[%s1 + $0x6f8] sm:$0xff]
    %v249 = vld [vmem:[%s1 + $0x700] sm:$0xff]
    %v250 = vld [vmem:[%s1 + $0x708] sm:$0xff]
    %v251 = vld [vmem:[%s1 + $0x710] sm:$0xff]
    %v252 = vld [vmem:[%s1 + $0x718] sm:$0xff]
    %v253 = vld [vmem:[%s1 + $0x720] sm:$0xff]
    %v254 = vld [vmem:[%s1 + $0x728] sm:$0xff]
    %v255 = vld [vmem:[%s1 + $0x730] sm:$0xff]
    %v256 = vld [vmem:[%s1 + $0x738] sm:$0xff]
    %v257 = vld [vmem:[%s1 + $0x740] sm:$0xff]
    %v258 = vld [vmem:[%s1 + $0x748] sm:$0xff]
    %v259 = vld [vmem:[%s1 + $0x750] sm:$0xff]
    %v260 = vld [vmem:[%s1 + $0x758] sm:$0xff]
    %v261 = vld [vmem:[%s1 + $0x760] sm:$0xff]
    %v262 = vld [vmem:[%s1 + $0x768] sm:$0xff]
    %v263 = vld [vmem:[%s1 + $0x770] sm:$0xff]
    %v264 = vld [vmem:[%s1 + $0x778] sm:$0xff]
    %v265 = vld [vmem:[%s1 + $0x780] sm:$0xff]
    %v266 = vld [vmem:[%s1 + $0x788] sm:$0xff]
    %v267 = vld [vmem:[%s1 + $0x790] sm:$0xff]
    %v268 = vld [vmem:[%s1 + $0x798] sm:$0xff]
    %v269 = vld [vmem:[%s1 + $0x7a0] sm:$0xff]
    %v270 = vld [vmem:[%s1 + $0x7a8] sm:$0xff]
    %v271 = vld [vmem:[%s1 + $0x7b0] sm:$0xff]
    %v272 = vld [vmem:[%s1 + $0x7b8] sm:$0xff]
    %v273 = vld [vmem:[%s1 + $0x7c0] sm:$0xff]
    %v274 = vld [vmem:[%s1 + $0x7c8] sm:$0xff]
    %v275 = vld [vmem:[%s1 + $0x7d0] sm:$0xff]
    %v276 = vld [vmem:[%s1 + $0x7d8] sm:$0xff]
    %v277 = vld [vmem:[%s1 + $0x7e0] sm:$0xff]
    %v278 = vld [vmem:[%s1 + $0x7e8] sm:$0xff]
    %v279 = vld [vmem:[%s1 + $0x7f0] sm:$0xff]
    %v280 = vld [vmem:[%s1 + $0x7f8] sm:$0xff]
    %v281 = vld [vmem:[%s1 + $0x800] sm:$0xff]
    %v282 = vld [vmem:[%s1 + $0x808] sm:$0xff]
    %v283 = vld [vmem:[%s1 + $0x810] sm:$0xff]
    %v284 = vld [vmem:[%s1 + $0x818] sm:$0xff]
    %v285 = vld [vmem:[%s1 + $0x820] sm:$0xff]
    %v286 = vld [vmem:[%s1 + $0x828] sm:$0xff]
    %v287 = vld [vmem:[%s1 + $0x830] sm:$0xff]
    %v288 = vld [vmem:[%s1 + $0x838] sm:$0xff]
    %v289 = vld [vmem:[%s1 + $0x840] sm:$0xff]
    %v290 = vld [vmem:[%s1 + $0x848] sm:$0xff]
    %v291 = vld [vmem:[%s1 + $0x850] sm:$0xff]
    %v292 = vld [vmem:[%s1 + $0x858] sm:$0xff]
    %v293 = vld [vmem:[%s1 + $0x860] sm:$0xff]
    %v294 = vld [vmem:[%s1 + $0x868] sm:$0xff]
    %v295 = vld [vmem:[%s1 + $0x870] sm:$0xff]
    %v296 = vld [vmem:[%s1 + $0x878] sm:$0xff]
    %v297 = vld [vmem:[%s1 + $0x880] sm:$0xff]
    %v298 = vld [vmem:[%s1 + $0x888] sm:$0xff]
    %v299 = vld [vmem:[%s1 + $0x890] sm:$0xff]
    %v300 = vld [vmem:[%s1 + $0x898] sm:$0xff]
    %v301 = vld [vmem:[%s1 + $0x8a0] sm:$0xff]
    %v302 = vld [vmem:[%s1 + $0x8a8] sm:$0xff]
    %v303 = vld [vmem:[%s1 + $0x8b0] sm:$0xff]
    %v304 = vld [vmem:[%s1 + $0x8b8] sm:$0xff]
    %v305 = vld [vmem:[%s1 + $0x8c0] sm:$0xff]
    %v306 = vld [vmem:[%s1 + $0x8c8] sm:$0xff]
    %v307 = vld [vmem:[%s1 + $0x8d0] sm:$0xff]
    %v308 = vld [vmem:[%s1 + $0x8d8] sm:$0xff]
    %v309 = vld [vmem:[%s1 + $0x8e0] sm:$0xff]
    %v310 = vld [vmem:[%s1 + $0x8e8] sm:$0xff]
    %v311 = vld [vmem:[%s1 + $0x8f0] sm:$0xff]
    %v312 = vld [vmem:[%s1 + $0x8f8] sm:$0xff]
    %v313 = vld [vmem:[%s1 + $0x900] sm:$0xff]
    %v314 = vld [vmem:[%s1 + $0x908] sm:$0xff]
    %v315 = vld [vmem:[%s1 + $0x910] sm:$0xff]
    %v316 = vld [vmem:[%s1 + $0x918] sm:$0xff]
    %v317 = vld [vmem:[%s1 + $0x920] sm:$0xff]
    %v318 = vld [vmem:[%s1 + $0x928] sm:$0xff]
    %v319 = vld [vmem:[%s1 + $0x930] sm:$0xff]
    %v320 = vld [vmem:[%s1 + $0x938] sm:$0xff]
    %v321 = vld [vmem:[%s1 + $0x940] sm:$0xff]
    %v322 = vld [vmem:[%s1 + $0x948] sm:$0xff]
    %v323 = vld [vmem:[%s1 + $0x950] sm:$0xff]
    %v324 = vld [vmem:[%s1 + $0x958] sm:$0xff]
    %v325 = vld [vmem:[%s1 + $0x960] sm:$0xff]
    %v326 = vld [vmem:[%s1 + $0x968] sm:$0xff]
    %v327 = vld [vmem:[%s1 + $0x970] sm:$0xff]
    %v328 = vld [vmem:[%s1 + $0x978] sm:$0xff]
    %v329 = vld [vmem:[%s1 + $0x980] sm:$0xff]
    %v330 = vld [vmem:[%s1 + $0x988] sm:$0xff]
    %v331 = vld [vmem:[%s1 + $0x990] sm:$0xff]
    %v332 = vld [vmem:[%s1 + $0x998] sm:$0xff]
    %v333 = vld [vmem:[%s1 + $0x9a0] sm:$0xff]
    %v334 = vld [vmem:[%s1 + $0x9a8] sm:$0xff]
    %v335 = vld [vmem:[%s1 + $0x9b0] sm:$0xff]
    %v336 = vld [vmem:[%s1 + $0x9b8] sm:$0xff]
    %v337 = vld [vmem:[%s1 + $0x9c0] sm:$0xff]
    %v338 = vld [vmem:[%s1 + $0x9c8] sm:$0xff]
    %v339 = vld [vmem:[%s1 + $0x9d0] sm:$0xff]
    %v340 = vld [vmem:[%s1 + $0x9d8] sm:$0xff]
    %v341 = vld [vmem:[%s1 + $0x9e0] sm:$0xff]
    %v342 = vld [vmem:[%s1 + $0x9e8] sm:$0xff]
    %v343 = vld [vmem:[%s1 + $0x9f0] sm:$0xff]
    %v344 = vld [vmem:[%s1 + $0x9f8] sm:$0xff]
    %v345 = vld [vmem:[%s1 + $0xa00] sm:$0xff]
    %v346 = vld [vmem:[%s1 + $0xa08] sm:$0xff]
    %v347 = vld [vmem:[%s1 + $0xa10] sm:$0xff]
    %v348 = vld [vmem:[%s1 + $0xa18] sm:$0xff]
    %v349 = vld [vmem:[%s2] sm:$0x3]
    %v351 = vlaneseq
    %v352 = vshrl.u32 %v351, 7
    %v353 = vsub.s32 0, %v352
    %v354 = vrot.slane %v349, %v353
    %v355 = vlaneseq
    %v356 = vshrl.u32 %v355, 7
    %v357 = vsub.s32 1, %v356
    %v358 = vrot.slane %v349, %v357
    %v364 = vcombine.high %v22, %v22
    %v366 = vunpack.c.l.s4 1966171168
    %v367 = vunpack.c.0.s8 %v366
    %v368 = vlaneseq
    %v369 = vshrl.u32 %v368, 7
    %v370 = vsub.s32 %v367, %v369
    %v371 = vrot.slane %v22, %v370
    %v373 = vunpack.c.l.s4 1966171168
    %v374 = vunpack.c.0.s8 %v373
    %v375 = vlaneseq
    %v376 = vshrl.u32 %v375, 7
    %v377 = vsub.s32 %v374, %v376
    %v378 = vrot.slane %v364, %v377
    %v379 = vcombine.high %v371, %v371
    %v380 = vcombine.high %v378, %v378
    %v382 = vunpack.c.l.s4 1966171168
    %v383 = vunpack.c.0.s8 %v382
    %v384 = vlaneseq
    %v385 = vshrl.u32 %v384, 7
    %v386 = vsub.s32 %v383, %v385
    %v387 = vrot.slane %v371, %v386
    %v389 = vunpack.c.l.s4 1966171168
    %v390 = vunpack.c.0.s8 %v389
    %v391 = vlaneseq
    %v392 = vshrl.u32 %v391, 7
    %v393 = vsub.s32 %v390, %v392
    %v394 = vrot.slane %v378, %v393
    %v396 = vunpack.c.l.s4 1966171168
    %v397 = vunpack.c.0.s8 %v396
    %v398 = vlaneseq
    %v399 = vshrl.u32 %v398, 7
    %v400 = vsub.s32 %v397, %v399
    %v401 = vrot.slane %v379, %v400
    %v403 = vunpack.c.l.s4 1966171168
    %v404 = vunpack.c.0.s8 %v403
    %v405 = vlaneseq
    %v406 = vshrl.u32 %v405, 7
    %v407 = vsub.s32 %v404, %v406
    %v408 = vrot.slane %v380, %v407
    %v409 = vcombine.high %v387, %v387
    %v410 = vcombine.high %v394, %v394
    %v411 = vcombine.high %v401, %v401
    %v412 = vcombine.high %v408, %v408
    %v413 = vcombine.high %v23, %v23
    %v415 = vunpack.c.l.s4 1966171168
    %v416 = vunpack.c.0.s8 %v415
    %v417 = vlaneseq
    %v418 = vshrl.u32 %v417, 7
    %v419 = vsub.s32 %v416, %v418
    %v420 = vrot.slane %v23, %v419
    %v422 = vunpack.c.l.s4 1966171168
    %v423 = vunpack.c.0.s8 %v422
    %v424 = vlaneseq
    %v425 = vshrl.u32 %v424, 7
    %v426 = vsub.s32 %v423, %v425
    %v427 = vrot.slane %v413, %v426
    %v428 = vcombine.high %v420, %v420
    %v429 = vcombine.high %v427, %v427
    %v431 = vunpack.c.l.s4 1966171168
    %v432 = vunpack.c.0.s8 %v431
    %v433 = vlaneseq
    %v434 = vshrl.u32 %v433, 7
    %v435 = vsub.s32 %v432, %v434
    %v436 = vrot.slane %v420, %v435
    %v438 = vunpack.c.l.s4 1966171168
    %v439 = vunpack.c.0.s8 %v438
    %v440 = vlaneseq
    %v441 = vshrl.u32 %v440, 7
    %v442 = vsub.s32 %v439, %v441
    %v443 = vrot.slane %v427, %v442
    %v445 = vunpack.c.l.s4 1966171168
    %v446 = vunpack.c.0.s8 %v445
    %v447 = vlaneseq
    %v448 = vshrl.u32 %v447, 7
    %v449 = vsub.s32 %v446, %v448
    %v450 = vrot.slane %v428, %v449
    %v452 = vunpack.c.l.s4 1966171168
    %v453 = vunpack.c.0.s8 %v452
    %v454 = vlaneseq
    %v455 = vshrl.u32 %v454, 7
    %v456 = vsub.s32 %v453, %v455
    %v457 = vrot.slane %v429, %v456
    %v458 = vcombine.high %v436, %v436
    %v459 = vcombine.high %v443, %v443
    %v460 = vcombine.high %v450, %v450
    %v461 = vcombine.high %v457, %v457
    %v462 = vcombine.high %v24, %v24
    %v464 = vunpack.c.l.s4 1966171168
    %v465 = vunpack.c.0.s8 %v464
    %v466 = vlaneseq
    %v467 = vshrl.u32 %v466, 7
    %v468 = vsub.s32 %v465, %v467
    %v469 = vrot.slane %v24, %v468
    %v471 = vunpack.c.l.s4 1966171168
    %v472 = vunpack.c.0.s8 %v471
    %v473 = vlaneseq
    %v474 = vshrl.u32 %v473, 7
    %v475 = vsub.s32 %v472, %v474
    %v476 = vrot.slane %v462, %v475
    %v477 = vcombine.high %v469, %v469
    %v479 = vunpack.c.l.s4 1966171168
    %v480 = vunpack.c.0.s8 %v479
    %v481 = vlaneseq
    %v482 = vshrl.u32 %v481, 7
    %v483 = vsub.s32 %v480, %v482
    %v484 = vrot.slane %v469, %v483
    %v486 = vunpack.c.l.s4 1966171168
    %v487 = vunpack.c.0.s8 %v486
    %v488 = vlaneseq
    %v489 = vshrl.u32 %v488, 7
    %v490 = vsub.s32 %v487, %v489
    %v491 = vrot.slane %v476, %v490
    %v493 = vunpack.c.l.s4 1966171168
    %v494 = vunpack.c.0.s8 %v493
    %v495 = vlaneseq
    %v496 = vshrl.u32 %v495, 7
    %v497 = vsub.s32 %v494, %v496
    %v498 = vrot.slane %v477, %v497
    %v499 = vcombine.high %v484, %v484
    %v500 = vcombine.high %v498, %v498
    %v845 = vunpack.c.l.b16 %v25
    %v846 = vunpack.c.h.b16 %v25
    %v847 = vunpack.c.l.b16 %v26
    %v848 = vunpack.c.h.b16 %v26
    %v849 = vunpack.c.l.b16 %v27
    %v850 = vunpack.c.h.b16 %v27
    %v851 = vunpack.c.l.b16 %v28
    %v852 = vunpack.c.h.b16 %v28
    %v853 = vunpack.c.l.b16 %v29
    %v854 = vunpack.c.h.b16 %v29
    %v855 = vunpack.c.l.b16 %v30
    %v856 = vunpack.c.h.b16 %v30
    %v857 = vunpack.c.l.b16 %v31
    %v858 = vunpack.c.h.b16 %v31
    %v859 = vunpack.c.l.b16 %v32
    %v860 = vunpack.c.h.b16 %v32
    %v861 = vunpack.c.l.b16 %v33
    %v862 = vunpack.c.h.b16 %v33
    %v863 = vunpack.c.l.b16 %v34
    %v864 = vunpack.c.h.b16 %v34
    %v865 = vunpack.c.l.b16 %v35
    %v866 = vunpack.c.h.b16 %v35
    %v867 = vunpack.c.l.b16 %v36
    %v868 = vunpack.c.h.b16 %v36
    %v869 = vunpack.c.l.b16 %v37
    %v870 = vunpack.c.h.b16 %v37
    %v871 = vunpack.c.l.b16 %v38
    %v872 = vunpack.c.h.b16 %v38
    %v873 = vunpack.c.l.b16 %v39
    %v874 = vunpack.c.h.b16 %v39
    %v875 = vunpack.c.l.b16 %v40
    %v876 = vunpack.c.h.b16 %v40
    %v877 = vunpack.c.l.b16 %v41
    %v878 = vunpack.c.h.b16 %v41
    %v879 = vunpack.c.l.b16 %v42
    %v880 = vunpack.c.h.b16 %v42
    %v881 = vunpack.c.l.b16 %v43
    %v882 = vunpack.c.h.b16 %v43
    %v883 = vunpack.c.l.b16 %v44
    %v884 = vunpack.c.h.b16 %v44
    %v885 = vunpack.c.l.b16 %v45
    %v886 = vunpack.c.h.b16 %v45
    %v887 = vunpack.c.l.b16 %v46
    %v888 = vunpack.c.h.b16 %v46
    %v889 = vunpack.c.l.b16 %v47
    %v890 = vunpack.c.h.b16 %v47
    %v891 = vunpack.c.l.b16 %v48
    %v892 = vunpack.c.h.b16 %v48
    %v893 = vunpack.c.l.b16 %v49
    %v894 = vunpack.c.h.b16 %v49
    %v895 = vunpack.c.l.b16 %v50
    %v896 = vunpack.c.h.b16 %v50
    %v897 = vunpack.c.l.b16 %v51
    %v898 = vunpack.c.h.b16 %v51
    %v899 = vunpack.c.l.b16 %v52
    %v900 = vunpack.c.h.b16 %v52
    %v901 = vunpack.c.l.b16 %v53
    %v902 = vunpack.c.h.b16 %v53
    %v903 = vunpack.c.l.b16 %v54
    %v904 = vunpack.c.h.b16 %v54
    %v905 = vunpack.c.l.b16 %v55
    %v906 = vunpack.c.h.b16 %v55
    %v907 = vunpack.c.l.b16 %v56
    %v908 = vunpack.c.h.b16 %v56
    %v909 = vunpack.c.l.b16 %v57
    %v910 = vunpack.c.h.b16 %v57
    %v911 = vunpack.c.l.b16 %v58
    %v912 = vunpack.c.h.b16 %v58
    %v913 = vunpack.c.l.b16 %v59
    %v914 = vunpack.c.h.b16 %v59
    %v915 = vunpack.c.l.b16 %v60
    %v916 = vunpack.c.h.b16 %v60
    %v917 = vunpack.c.l.b16 %v61
    %v918 = vunpack.c.h.b16 %v61
    %v919 = vunpack.c.l.b16 %v62
    %v920 = vunpack.c.h.b16 %v62
    %v921 = vunpack.c.l.b16 %v63
    %v922 = vunpack.c.h.b16 %v63
    %v923 = vunpack.c.l.b16 %v64
    %v924 = vunpack.c.h.b16 %v64
    %v925 = vunpack.c.l.b16 %v65
    %v926 = vunpack.c.h.b16 %v65
    %v927 = vunpack.c.l.b16 %v66
    %v928 = vunpack.c.h.b16 %v66
    %v929 = vunpack.c.l.b16 %v67
    %v930 = vunpack.c.h.b16 %v67
    %v931 = vunpack.c.l.b16 %v68
    %v932 = vunpack.c.h.b16 %v68
    %v933 = vunpack.c.l.b16 %v69
    %v934 = vunpack.c.h.b16 %v69
    %v935 = vunpack.c.l.b16 %v70
    %v936 = vunpack.c.h.b16 %v70
    %v937 = vunpack.c.l.b16 %v71
    %v938 = vunpack.c.h.b16 %v71
    %v939 = vunpack.c.l.b16 %v72
    %v940 = vunpack.c.h.b16 %v72
    %v941 = vunpack.c.l.b16 %v73
    %v942 = vunpack.c.h.b16 %v73
    %v943 = vunpack.c.l.b16 %v74
    %v944 = vunpack.c.h.b16 %v74
    %v945 = vunpack.c.l.b16 %v75
    %v946 = vunpack.c.h.b16 %v75
    %v947 = vunpack.c.l.b16 %v76
    %v948 = vunpack.c.h.b16 %v76
    %v949 = vunpack.c.l.b16 %v77
    %v950 = vunpack.c.h.b16 %v77
    %v951 = vunpack.c.l.b16 %v78
    %v952 = vunpack.c.h.b16 %v78
    %v953 = vunpack.c.l.b16 %v79
    %v954 = vunpack.c.h.b16 %v79
    %v955 = vunpack.c.l.b16 %v80
    %v956 = vunpack.c.h.b16 %v80
    %v957 = vunpack.c.l.b16 %v81
    %v958 = vunpack.c.h.b16 %v81
    %v959 = vunpack.c.l.b16 %v82
    %v960 = vunpack.c.h.b16 %v82
    %v961 = vunpack.c.l.b16 %v83
    %v962 = vunpack.c.h.b16 %v83
    %v963 = vunpack.c.l.b16 %v84
    %v964 = vunpack.c.h.b16 %v84
    %v965 = vunpack.c.l.b16 %v85
    %v966 = vunpack.c.h.b16 %v85
    %v967 = vunpack.c.l.b16 %v86
    %v968 = vunpack.c.h.b16 %v86
    %v969 = vunpack.c.l.b16 %v87
    %v970 = vunpack.c.h.b16 %v87
    %v971 = vunpack.c.l.b16 %v88
    %v972 = vunpack.c.h.b16 %v88
    %v973 = vunpack.c.l.b16 %v89
    %v974 = vunpack.c.h.b16 %v89
    %v975 = vunpack.c.l.b16 %v90
    %v976 = vunpack.c.h.b16 %v90
    %v977 = vunpack.c.l.b16 %v91
    %v978 = vunpack.c.h.b16 %v91
    %v979 = vunpack.c.l.b16 %v92
    %v980 = vunpack.c.h.b16 %v92
    %v981 = vunpack.c.l.b16 %v93
    %v982 = vunpack.c.h.b16 %v93
    %v983 = vunpack.c.l.b16 %v94
    %v984 = vunpack.c.h.b16 %v94
    %v985 = vunpack.c.l.b16 %v95
    %v986 = vunpack.c.h.b16 %v95
    %v987 = vunpack.c.l.b16 %v96
    %v988 = vunpack.c.h.b16 %v96
    %v989 = vunpack.c.l.b16 %v97
    %v990 = vunpack.c.h.b16 %v97
    %v991 = vunpack.c.l.b16 %v98
    %v992 = vunpack.c.h.b16 %v98
    %v993 = vunpack.c.l.b16 %v99
    %v994 = vunpack.c.h.b16 %v99
    %v995 = vunpack.c.l.b16 %v100
    %v996 = vunpack.c.h.b16 %v100
    %v997 = vunpack.c.l.b16 %v101
    %v998 = vunpack.c.h.b16 %v101
    %v999 = vunpack.c.l.b16 %v102
    %v1000 = vunpack.c.h.b16 %v102
    %v1001 = vunpack.c.l.b16 %v103
    %v1002 = vunpack.c.h.b16 %v103
    %v1003 = vunpack.c.l.b16 %v104
    %v1004 = vunpack.c.h.b16 %v104
    %v1005 = vunpack.c.l.b16 %v105
    %v1006 = vunpack.c.h.b16 %v105
    %v1007 = vunpack.c.l.b16 %v106
    %v1008 = vunpack.c.h.b16 %v106
    %v1009 = vunpack.c.l.b16 %v107
    %v1010 = vunpack.c.h.b16 %v107
    %v1011 = vunpack.c.l.b16 %v108
    %v1012 = vunpack.c.h.b16 %v108
    %v1013 = vunpack.c.l.b16 %v109
    %v1014 = vunpack.c.h.b16 %v109
    %v1015 = vunpack.c.l.b16 %v110
    %v1016 = vunpack.c.h.b16 %v110
    %v1017 = vunpack.c.l.b16 %v111
    %v1018 = vunpack.c.h.b16 %v111
    %v1019 = vunpack.c.l.b16 %v112
    %v1020 = vunpack.c.h.b16 %v112
    %v1021 = vunpack.c.l.b16 %v113
    %v1022 = vunpack.c.h.b16 %v113
    %v1023 = vunpack.c.l.b16 %v114
    %v1024 = vunpack.c.h.b16 %v114
    %v1025 = vunpack.c.l.b16 %v115
    %v1026 = vunpack.c.h.b16 %v115
    %v1027 = vunpack.c.l.b16 %v116
    %v1028 = vunpack.c.h.b16 %v116
    %v1029 = vunpack.c.l.b16 %v117
    %v1030 = vunpack.c.h.b16 %v117
    %v1031 = vunpack.c.l.b16 %v118
    %v1032 = vunpack.c.h.b16 %v118
    %v1033 = vunpack.c.l.b16 %v119
    %v1034 = vunpack.c.h.b16 %v119
    %v1035 = vunpack.c.l.b16 %v120
    %v1036 = vunpack.c.h.b16 %v120
    %v1037 = vunpack.c.l.b16 %v121
    %v1038 = vunpack.c.h.b16 %v121
    %v1039 = vunpack.c.l.b16 %v122
    %v1040 = vunpack.c.h.b16 %v122
    %v1041 = vunpack.c.l.b16 %v123
    %v1042 = vunpack.c.h.b16 %v123
    %v1043 = vunpack.c.l.b16 %v124
    %v1044 = vunpack.c.h.b16 %v124
    %v1045 = vunpack.c.l.b16 %v125
    %v1046 = vunpack.c.h.b16 %v125
    %v1047 = vunpack.c.l.b16 %v126
    %v1048 = vunpack.c.h.b16 %v126
    %v1049 = vunpack.c.l.b16 %v127
    %v1050 = vunpack.c.h.b16 %v127
    %v1051 = vunpack.c.l.b16 %v128
    %v1052 = vunpack.c.h.b16 %v128
    %v1053 = vunpack.c.l.b16 %v129
    %v1054 = vunpack.c.h.b16 %v129
    %v1055 = vunpack.c.l.b16 %v130
    %v1056 = vunpack.c.h.b16 %v130
    %v1057 = vunpack.c.l.b16 %v131
    %v1058 = vunpack.c.h.b16 %v131
    %v1059 = vunpack.c.l.b16 %v132
    %v1060 = vunpack.c.h.b16 %v132
    %v1061 = vunpack.c.l.b16 %v133
    %v1062 = vunpack.c.h.b16 %v133
    %v1063 = vunpack.c.l.b16 %v134
    %v1064 = vunpack.c.h.b16 %v134
    %v1065 = vunpack.c.l.b16 %v135
    %v1066 = vunpack.c.h.b16 %v135
    %v1067 = vunpack.c.l.b16 %v136
    %v1068 = vunpack.c.h.b16 %v136
    %v1069 = vunpack.c.l.b16 %v137
    %v1070 = vunpack.c.h.b16 %v137
    %v1071 = vunpack.c.l.b16 %v138
    %v1072 = vunpack.c.h.b16 %v138
    %v1073 = vunpack.c.l.b16 %v139
    %v1074 = vunpack.c.h.b16 %v139
    %v1075 = vunpack.c.l.b16 %v140
    %v1076 = vunpack.c.h.b16 %v140
    %v1077 = vunpack.c.l.b16 %v141
    %v1078 = vunpack.c.h.b16 %v141
    %v1079 = vunpack.c.l.b16 %v142
    %v1080 = vunpack.c.h.b16 %v142
    %v1081 = vunpack.c.l.b16 %v143
    %v1082 = vunpack.c.h.b16 %v143
    %v1083 = vunpack.c.l.b16 %v144
    %v1084 = vunpack.c.h.b16 %v144
    %v1085 = vunpack.c.l.b16 %v145
    %v1086 = vunpack.c.h.b16 %v145
    %v1087 = vunpack.c.l.b16 %v146
    %v1088 = vunpack.c.h.b16 %v146
    %v1089 = vunpack.c.l.b16 %v147
    %v1090 = vunpack.c.h.b16 %v147
    %v1091 = vunpack.c.l.b16 %v148
    %v1092 = vunpack.c.h.b16 %v148
    %v1093 = vunpack.c.l.b16 %v149
    %v1094 = vunpack.c.h.b16 %v149
    %v1095 = vunpack.c.l.b16 %v150
    %v1096 = vunpack.c.h.b16 %v150
    %v1097 = vunpack.c.l.b16 %v151
    %v1098 = vunpack.c.h.b16 %v151
    %v1099 = vunpack.c.l.b16 %v152
    %v1100 = vunpack.c.h.b16 %v152
    %v1101 = vunpack.c.l.b16 %v153
    %v1102 = vunpack.c.h.b16 %v153
    %v1103 = vunpack.c.l.b16 %v154
    %v1104 = vunpack.c.h.b16 %v154
    %v1105 = vunpack.c.l.b16 %v155
    %v1106 = vunpack.c.h.b16 %v155
    %v1107 = vunpack.c.l.b16 %v156
    %v1108 = vunpack.c.h.b16 %v156
    %v1109 = vunpack.c.l.b16 %v157
    %v1110 = vunpack.c.h.b16 %v157
    %v1111 = vunpack.c.l.b16 %v158
    %v1112 = vunpack.c.h.b16 %v158
    %v1113 = vunpack.c.l.b16 %v159
    %v1114 = vunpack.c.h.b16 %v159
    %v1115 = vunpack.c.l.b16 %v160
    %v1116 = vunpack.c.h.b16 %v160
    %v1117 = vunpack.c.l.b16 %v161
    %v1118 = vunpack.c.h.b16 %v161
    %v1119 = vunpack.c.l.b16 %v162
    %v1120 = vunpack.c.h.b16 %v162
    %v1121 = vunpack.c.l.b16 %v163
    %v1122 = vunpack.c.h.b16 %v163
    %v1123 = vunpack.c.l.b16 %v164
    %v1124 = vunpack.c.h.b16 %v164
    %v1125 = vunpack.c.l.b16 %v165
    %v1126 = vunpack.c.h.b16 %v165
    %v1127 = vunpack.c.l.b16 %v166
    %v1128 = vunpack.c.h.b16 %v166
    %v1129 = vunpack.c.l.b16 %v167
    %v1130 = vunpack.c.h.b16 %v167
    %v1131 = vunpack.c.l.b16 %v168
    %v1132 = vunpack.c.h.b16 %v168
    %v1133 = vunpack.c.l.b16 %v169
    %v1134 = vunpack.c.h.b16 %v169
    %v1135 = vunpack.c.l.b16 %v170
    %v1136 = vunpack.c.h.b16 %v170
    %v1137 = vunpack.c.l.b16 %v171
    %v1138 = vunpack.c.h.b16 %v171
    %v1139 = vunpack.c.l.b16 %v172
    %v1140 = vunpack.c.h.b16 %v172
    %v1141 = vunpack.c.l.b16 %v173
    %v1142 = vunpack.c.h.b16 %v173
    %v1143 = vunpack.c.l.b16 %v174
    %v1144 = vunpack.c.h.b16 %v174
    %v1145 = vunpack.c.l.b16 %v175
    %v1146 = vunpack.c.h.b16 %v175
    %v1147 = vunpack.c.l.b16 %v176
    %v1148 = vunpack.c.h.b16 %v176
    %v1149 = vunpack.c.l.b16 %v177
    %v1150 = vunpack.c.h.b16 %v177
    %v1151 = vunpack.c.l.b16 %v178
    %v1152 = vunpack.c.h.b16 %v178
    %v1153 = vunpack.c.l.b16 %v179
    %v1154 = vunpack.c.h.b16 %v179
    %v1155 = vunpack.c.l.b16 %v180
    %v1156 = vunpack.c.h.b16 %v180
    %v1157 = vunpack.c.l.b16 %v181
    %v1158 = vunpack.c.h.b16 %v181
    %v1159 = vunpack.c.l.b16 %v182
    %v1160 = vunpack.c.h.b16 %v182
    %v1161 = vunpack.c.l.b16 %v183
    %v1162 = vunpack.c.h.b16 %v183
    %v1163 = vunpack.c.l.b16 %v184
    %v1164 = vunpack.c.h.b16 %v184
    %v1165 = vunpack.c.l.b16 %v185
    %v1166 = vunpack.c.h.b16 %v185
    %v1167 = vunpack.c.l.b16 %v186
    %v1168 = vunpack.c.h.b16 %v186
    %v1169 = vunpack.c.l.b16 %v187
    %v1170 = vunpack.c.h.b16 %v187
    %v1171 = vunpack.c.l.b16 %v188
    %v1172 = vunpack.c.h.b16 %v188
    %v1173 = vunpack.c.l.b16 %v189
    %v1174 = vunpack.c.h.b16 %v189
    %v1175 = vunpack.c.l.b16 %v190
    %v1176 = vunpack.c.h.b16 %v190
    %v1177 = vunpack.c.l.b16 %v191
    %v1178 = vunpack.c.h.b16 %v191
    %v1179 = vunpack.c.l.b16 %v192
    %v1180 = vunpack.c.h.b16 %v192
    %v1181 = vunpack.c.l.b16 %v193
    %v1182 = vunpack.c.h.b16 %v193
    %v1183 = vunpack.c.l.b16 %v194
    %v1184 = vunpack.c.h.b16 %v194
    %v1185 = vunpack.c.l.b16 %v195
    %v1186 = vunpack.c.h.b16 %v195
    %v1187 = vunpack.c.l.b16 %v196
    %v1188 = vunpack.c.h.b16 %v196
    %v1189 = vunpack.c.l.b16 %v197
    %v1190 = vunpack.c.h.b16 %v197
    %v1191 = vunpack.c.l.b16 %v198
    %v1192 = vunpack.c.h.b16 %v198
    %v1193 = vunpack.c.l.b16 %v199
    %v1194 = vunpack.c.h.b16 %v199
    %v1195 = vunpack.c.l.b16 %v200
    %v1196 = vunpack.c.h.b16 %v200
    %v1197 = vunpack.c.l.b16 %v201
    %v1198 = vunpack.c.h.b16 %v201
    %v1199 = vunpack.c.l.b16 %v202
    %v1200 = vunpack.c.h.b16 %v202
    %v1201 = vunpack.c.l.b16 %v203
    %v1202 = vunpack.c.h.b16 %v203
    %v1203 = vunpack.c.l.b16 %v204
    %v1204 = vunpack.c.h.b16 %v204
    %v1205 = vunpack.c.l.b16 %v205
    %v1206 = vunpack.c.h.b16 %v205
    %v1207 = vunpack.c.l.b16 %v206
    %v1208 = vunpack.c.h.b16 %v206
    %v1209 = vunpack.c.l.b16 %v207
    %v1210 = vunpack.c.h.b16 %v207
    %v1211 = vunpack.c.l.b16 %v208
    %v1212 = vunpack.c.h.b16 %v208
    %v1213 = vunpack.c.l.b16 %v209
    %v1214 = vunpack.c.h.b16 %v209
    %v1215 = vunpack.c.l.b16 %v210
    %v1216 = vunpack.c.h.b16 %v210
    %v1217 = vunpack.c.l.b16 %v211
    %v1218 = vunpack.c.h.b16 %v211
    %v1219 = vunpack.c.l.b16 %v212
    %v1220 = vunpack.c.h.b16 %v212
    %v1221 = vunpack.c.l.b16 %v213
    %v1222 = vunpack.c.h.b16 %v213
    %v1223 = vunpack.c.l.b16 %v214
    %v1224 = vunpack.c.h.b16 %v214
    %v1225 = vunpack.c.l.b16 %v215
    %v1226 = vunpack.c.h.b16 %v215
    %v1227 = vunpack.c.l.b16 %v216
    %v1228 = vunpack.c.h.b16 %v216
    %v1229 = vunpack.c.l.b16 %v217
    %v1230 = vunpack.c.h.b16 %v217
    %v1231 = vunpack.c.l.b16 %v218
    %v1232 = vunpack.c.h.b16 %v218
    %v1233 = vunpack.c.l.b16 %v219
    %v1234 = vunpack.c.h.b16 %v219
    %v1235 = vunpack.c.l.b16 %v220
    %v1236 = vunpack.c.h.b16 %v220
    %v1237 = vunpack.c.l.b16 %v221
    %v1238 = vunpack.c.h.b16 %v221
    %v1239 = vunpack.c.l.b16 %v222
    %v1240 = vunpack.c.h.b16 %v222
    %v1241 = vunpack.c.l.b16 %v223
    %v1242 = vunpack.c.h.b16 %v223
    %v1243 = vunpack.c.l.b16 %v224
    %v1244 = vunpack.c.h.b16 %v224
    %v1245 = vunpack.c.l.b16 %v225
    %v1246 = vunpack.c.h.b16 %v225
    %v1247 = vunpack.c.l.b16 %v226
    %v1248 = vunpack.c.h.b16 %v226
    %v1249 = vunpack.c.l.b16 %v227
    %v1250 = vunpack.c.h.b16 %v227
    %v1251 = vunpack.c.l.b16 %v228
    %v1252 = vunpack.c.h.b16 %v228
    %v1253 = vunpack.c.l.b16 %v229
    %v1254 = vunpack.c.h.b16 %v229
    %v1255 = vunpack.c.l.b16 %v230
    %v1256 = vunpack.c.h.b16 %v230
    %v1257 = vunpack.c.l.b16 %v231
    %v1258 = vunpack.c.h.b16 %v231
    %v1259 = vunpack.c.l.b16 %v232
    %v1260 = vunpack.c.h.b16 %v232
    %v1261 = vunpack.c.l.b16 %v233
    %v1262 = vunpack.c.h.b16 %v233
    %v1263 = vunpack.c.l.b16 %v234
    %v1264 = vunpack.c.h.b16 %v234
    %v1265 = vunpack.c.l.b16 %v235
    %v1266 = vunpack.c.h.b16 %v235
    %v1267 = vunpack.c.l.b16 %v236
    %v1268 = vunpack.c.h.b16 %v236
    %v1269 = vunpack.c.l.b16 %v237
    %v1270 = vunpack.c.h.b16 %v237
    %v1271 = vunpack.c.l.b16 %v238
    %v1272 = vunpack.c.h.b16 %v238
    %v1273 = vunpack.c.l.b16 %v239
    %v1274 = vunpack.c.h.b16 %v239
    %v1275 = vunpack.c.l.b16 %v240
    %v1276 = vunpack.c.h.b16 %v240
    %v1277 = vunpack.c.l.b16 %v241
    %v1278 = vunpack.c.h.b16 %v241
    %v1279 = vunpack.c.l.b16 %v242
    %v1280 = vunpack.c.h.b16 %v242
    %v1281 = vunpack.c.l.b16 %v243
    %v1282 = vunpack.c.h.b16 %v243
    %v1283 = vunpack.c.l.b16 %v244
    %v1284 = vunpack.c.h.b16 %v244
    %v1285 = vunpack.c.l.b16 %v245
    %v1286 = vunpack.c.h.b16 %v245
    %v1287 = vunpack.c.l.b16 %v246
    %v1288 = vunpack.c.h.b16 %v246
    %v1289 = vunpack.c.l.b16 %v247
    %v1290 = vunpack.c.h.b16 %v247
    %v1291 = vunpack.c.l.b16 %v248
    %v1292 = vunpack.c.h.b16 %v248
    %v1293 = vunpack.c.l.b16 %v249
    %v1294 = vunpack.c.h.b16 %v249
    %v1295 = vunpack.c.l.b16 %v250
    %v1296 = vunpack.c.h.b16 %v250
    %v1297 = vunpack.c.l.b16 %v251
    %v1298 = vunpack.c.h.b16 %v251
    %v1299 = vunpack.c.l.b16 %v252
    %v1300 = vunpack.c.h.b16 %v252
    %v1301 = vunpack.c.l.b16 %v253
    %v1302 = vunpack.c.h.b16 %v253
    %v1303 = vunpack.c.l.b16 %v254
    %v1304 = vunpack.c.h.b16 %v254
    %v1305 = vunpack.c.l.b16 %v255
    %v1306 = vunpack.c.h.b16 %v255
    %v1307 = vunpack.c.l.b16 %v256
    %v1308 = vunpack.c.h.b16 %v256
    %v1309 = vunpack.c.l.b16 %v257
    %v1310 = vunpack.c.h.b16 %v257
    %v1311 = vunpack.c.l.b16 %v258
    %v1312 = vunpack.c.h.b16 %v258
    %v1313 = vunpack.c.l.b16 %v259
    %v1314 = vunpack.c.h.b16 %v259
    %v1315 = vunpack.c.l.b16 %v260
    %v1316 = vunpack.c.h.b16 %v260
    %v1317 = vunpack.c.l.b16 %v261
    %v1318 = vunpack.c.h.b16 %v261
    %v1319 = vunpack.c.l.b16 %v262
    %v1320 = vunpack.c.h.b16 %v262
    %v1321 = vunpack.c.l.b16 %v263
    %v1322 = vunpack.c.h.b16 %v263
    %v1323 = vunpack.c.l.b16 %v264
    %v1324 = vunpack.c.h.b16 %v264
    %v1325 = vunpack.c.l.b16 %v265
    %v1326 = vunpack.c.h.b16 %v265
    %v1327 = vunpack.c.l.b16 %v266
    %v1328 = vunpack.c.h.b16 %v266
    %v1329 = vunpack.c.l.b16 %v267
    %v1330 = vunpack.c.h.b16 %v267
    %v1331 = vunpack.c.l.b16 %v268
    %v1332 = vunpack.c.h.b16 %v268
    %v1333 = vunpack.c.l.b16 %v269
    %v1334 = vunpack.c.h.b16 %v269
    %v1335 = vunpack.c.l.b16 %v270
    %v1336 = vunpack.c.h.b16 %v270
    %v1337 = vunpack.c.l.b16 %v271
    %v1338 = vunpack.c.h.b16 %v271
    %v1339 = vunpack.c.l.b16 %v272
    %v1340 = vunpack.c.h.b16 %v272
    %v1341 = vunpack.c.l.b16 %v273
    %v1342 = vunpack.c.h.b16 %v273
    %v1343 = vunpack.c.l.b16 %v274
    %v1344 = vunpack.c.h.b16 %v274
    %v1345 = vunpack.c.l.b16 %v275
    %v1346 = vunpack.c.h.b16 %v275
    %v1347 = vunpack.c.l.b16 %v276
    %v1348 = vunpack.c.h.b16 %v276
    %v1349 = vunpack.c.l.b16 %v277
    %v1350 = vunpack.c.h.b16 %v277
    %v1351 = vunpack.c.l.b16 %v278
    %v1352 = vunpack.c.h.b16 %v278
    %v1353 = vunpack.c.l.b16 %v279
    %v1354 = vunpack.c.h.b16 %v279
    %v1355 = vunpack.c.l.b16 %v280
    %v1356 = vunpack.c.h.b16 %v280
    %v1357 = vunpack.c.l.b16 %v281
    %v1358 = vunpack.c.h.b16 %v281
    %v1359 = vunpack.c.l.b16 %v282
    %v1360 = vunpack.c.h.b16 %v282
    %v1361 = vunpack.c.l.b16 %v283
    %v1362 = vunpack.c.h.b16 %v283
    %v1363 = vunpack.c.l.b16 %v284
    %v1364 = vunpack.c.h.b16 %v284
    %v1365 = vunpack.c.l.b16 %v285
    %v1366 = vunpack.c.h.b16 %v285
    %v1367 = vunpack.c.l.b16 %v286
    %v1368 = vunpack.c.h.b16 %v286
    %v1369 = vunpack.c.l.b16 %v287
    %v1370 = vunpack.c.h.b16 %v287
    %v1371 = vunpack.c.l.b16 %v288
    %v1372 = vunpack.c.h.b16 %v288
    %v1373 = vunpack.c.l.b16 %v289
    %v1374 = vunpack.c.h.b16 %v289
    %v1375 = vunpack.c.l.b16 %v290
    %v1376 = vunpack.c.h.b16 %v290
    %v1377 = vunpack.c.l.b16 %v291
    %v1378 = vunpack.c.h.b16 %v291
    %v1379 = vunpack.c.l.b16 %v292
    %v1380 = vunpack.c.h.b16 %v292
    %v1381 = vunpack.c.l.b16 %v293
    %v1382 = vunpack.c.h.b16 %v293
    %v1383 = vunpack.c.l.b16 %v294
    %v1384 = vunpack.c.h.b16 %v294
    %v1385 = vunpack.c.l.b16 %v295
    %v1386 = vunpack.c.h.b16 %v295
    %v1387 = vunpack.c.l.b16 %v296
    %v1388 = vunpack.c.h.b16 %v296
    %v1389 = vunpack.c.l.b16 %v297
    %v1390 = vunpack.c.h.b16 %v297
    %v1391 = vunpack.c.l.b16 %v298
    %v1392 = vunpack.c.h.b16 %v298
    %v1393 = vunpack.c.l.b16 %v299
    %v1394 = vunpack.c.h.b16 %v299
    %v1395 = vunpack.c.l.b16 %v300
    %v1396 = vunpack.c.h.b16 %v300
    %v1397 = vunpack.c.l.b16 %v301
    %v1398 = vunpack.c.h.b16 %v301
    %v1399 = vunpack.c.l.b16 %v302
    %v1400 = vunpack.c.h.b16 %v302
    %v1401 = vunpack.c.l.b16 %v303
    %v1402 = vunpack.c.h.b16 %v303
    %v1403 = vunpack.c.l.b16 %v304
    %v1404 = vunpack.c.h.b16 %v304
    %v1405 = vunpack.c.l.b16 %v305
    %v1406 = vunpack.c.h.b16 %v305
    %v1407 = vunpack.c.l.b16 %v306
    %v1408 = vunpack.c.h.b16 %v306
    %v1409 = vunpack.c.l.b16 %v307
    %v1410 = vunpack.c.h.b16 %v307
    %v1411 = vunpack.c.l.b16 %v308
    %v1412 = vunpack.c.h.b16 %v308
    %v1413 = vunpack.c.l.b16 %v309
    %v1414 = vunpack.c.h.b16 %v309
    %v1415 = vunpack.c.l.b16 %v310
    %v1416 = vunpack.c.h.b16 %v310
    %v1417 = vunpack.c.l.b16 %v311
    %v1418 = vunpack.c.h.b16 %v311
    %v1419 = vunpack.c.l.b16 %v312
    %v1420 = vunpack.c.h.b16 %v312
    %v1421 = vunpack.c.l.b16 %v313
    %v1422 = vunpack.c.h.b16 %v313
    %v1423 = vunpack.c.l.b16 %v314
    %v1424 = vunpack.c.h.b16 %v314
    %v1425 = vunpack.c.l.b16 %v315
    %v1426 = vunpack.c.h.b16 %v315
    %v1427 = vunpack.c.l.b16 %v316
    %v1428 = vunpack.c.h.b16 %v316
    %v1429 = vunpack.c.l.b16 %v317
    %v1430 = vunpack.c.h.b16 %v317
    %v1431 = vunpack.c.l.b16 %v318
    %v1432 = vunpack.c.h.b16 %v318
    %v1433 = vunpack.c.l.b16 %v319
    %v1434 = vunpack.c.h.b16 %v319
    %v1435 = vunpack.c.l.b16 %v320
    %v1436 = vunpack.c.h.b16 %v320
    %v1437 = vunpack.c.l.b16 %v321
    %v1438 = vunpack.c.h.b16 %v321
    %v1439 = vunpack.c.l.b16 %v322
    %v1440 = vunpack.c.h.b16 %v322
    %v1441 = vunpack.c.l.b16 %v323
    %v1442 = vunpack.c.h.b16 %v323
    %v1443 = vunpack.c.l.b16 %v324
    %v1444 = vunpack.c.h.b16 %v324
    %v1445 = vunpack.c.l.b16 %v325
    %v1446 = vunpack.c.h.b16 %v325
    %v1447 = vunpack.c.l.b16 %v326
    %v1448 = vunpack.c.h.b16 %v326
    %v1449 = vunpack.c.l.b16 %v327
    %v1450 = vunpack.c.h.b16 %v327
    %v1451 = vunpack.c.l.b16 %v328
    %v1452 = vunpack.c.h.b16 %v328
    %v1453 = vunpack.c.l.b16 %v329
    %v1454 = vunpack.c.h.b16 %v329
    %v1455 = vunpack.c.l.b16 %v330
    %v1456 = vunpack.c.h.b16 %v330
    %v1457 = vunpack.c.l.b16 %v331
    %v1458 = vunpack.c.h.b16 %v331
    %v1459 = vunpack.c.l.b16 %v332
    %v1460 = vunpack.c.h.b16 %v332
    %v1461 = vunpack.c.l.b16 %v333
    %v1462 = vunpack.c.h.b16 %v333
    %v1463 = vunpack.c.l.b16 %v334
    %v1464 = vunpack.c.h.b16 %v334
    %v1465 = vunpack.c.l.b16 %v335
    %v1466 = vunpack.c.h.b16 %v335
    %v1467 = vunpack.c.l.b16 %v336
    %v1468 = vunpack.c.h.b16 %v336
    %v1469 = vunpack.c.l.b16 %v337
    %v1470 = vunpack.c.h.b16 %v337
    %v1471 = vunpack.c.l.b16 %v338
    %v1472 = vunpack.c.h.b16 %v338
    %v1473 = vunpack.c.l.b16 %v339
    %v1474 = vunpack.c.h.b16 %v339
    %v1475 = vunpack.c.l.b16 %v340
    %v1476 = vunpack.c.h.b16 %v340
    %v1477 = vunpack.c.l.b16 %v341
    %v1478 = vunpack.c.h.b16 %v341
    %v1479 = vunpack.c.l.b16 %v342
    %v1480 = vunpack.c.h.b16 %v342
    %v1481 = vunpack.c.l.b16 %v343
    %v1482 = vunpack.c.h.b16 %v343
    %v1483 = vunpack.c.l.b16 %v344
    %v1484 = vunpack.c.h.b16 %v344
    %v1485 = vunpack.c.l.b16 %v345
    %v1486 = vunpack.c.h.b16 %v345
    %v1487 = vunpack.c.l.b16 %v346
    %v1488 = vunpack.c.h.b16 %v346
    %v1489 = vunpack.c.l.b16 %v347
    %v1490 = vunpack.c.h.b16 %v347
    %v1491 = vunpack.c.l.b16 %v348
    %v1492 = vunpack.c.h.b16 %v348
    %v1493 = vpack.c.b16 %v847, %v845
    %v1494 = vpack.c.b16 %v848, %v846
    %v1495 = vpack.c.b16 %v851, %v849
    %v1496 = vpack.c.b16 %v852, %v850
    %v1497 = vpack.c.b16 %v855, %v853
    %v1498 = vpack.c.b16 %v856, %v854
    %v1499 = vpack.c.b16 %v859, %v857
    %v1500 = vpack.c.b16 %v860, %v858
    %v1501 = vpack.c.b16 %v863, %v861
    %v1502 = vpack.c.b16 %v864, %v862
    %v1503 = vpack.c.b16 %v867, %v865
    %v1504 = vpack.c.b16 %v868, %v866
    %v1505 = vpack.c.b16 %v871, %v869
    %v1506 = vpack.c.b16 %v872, %v870
    %v1507 = vpack.c.b16 %v875, %v873
    %v1508 = vpack.c.b16 %v876, %v874
    %v1509 = vpack.c.b16 %v879, %v877
    %v1510 = vpack.c.b16 %v880, %v878
    %v1511 = vpack.c.b16 %v883, %v881
    %v1512 = vpack.c.b16 %v884, %v882
    %v1513 = vpack.c.b16 %v887, %v885
    %v1514 = vpack.c.b16 %v888, %v886
    %v1515 = vpack.c.b16 %v891, %v889
    %v1516 = vpack.c.b16 %v892, %v890
    %v1517 = vpack.c.b16 %v895, %v893
    %v1518 = vpack.c.b16 %v896, %v894
    %v1519 = vpack.c.b16 %v899, %v897
    %v1520 = vpack.c.b16 %v900, %v898
    %v1521 = vpack.c.b16 %v903, %v901
    %v1522 = vpack.c.b16 %v904, %v902
    %v1523 = vpack.c.b16 %v907, %v905
    %v1524 = vpack.c.b16 %v908, %v906
    %v1525 = vpack.c.b16 %v911, %v909
    %v1526 = vpack.c.b16 %v912, %v910
    %v1527 = vpack.c.b16 %v915, %v913
    %v1528 = vpack.c.b16 %v916, %v914
    %v1529 = vpack.c.b16 %v919, %v917
    %v1530 = vpack.c.b16 %v920, %v918
    %v1531 = vpack.c.b16 %v923, %v921
    %v1532 = vpack.c.b16 %v924, %v922
    %v1533 = vpack.c.b16 %v927, %v925
    %v1534 = vpack.c.b16 %v928, %v926
    %v1535 = vpack.c.b16 %v931, %v929
    %v1536 = vpack.c.b16 %v932, %v930
    %v1537 = vpack.c.b16 %v935, %v933
    %v1538 = vpack.c.b16 %v936, %v934
    %v1539 = vpack.c.b16 %v939, %v937
    %v1540 = vpack.c.b16 %v940, %v938
    %v1541 = vpack.c.b16 %v943, %v941
    %v1542 = vpack.c.b16 %v944, %v942
    %v1543 = vpack.c.b16 %v947, %v945
    %v1544 = vpack.c.b16 %v948, %v946
    %v1545 = vpack.c.b16 %v951, %v949
    %v1546 = vpack.c.b16 %v952, %v950
    %v1547 = vpack.c.b16 %v955, %v953
    %v1548 = vpack.c.b16 %v956, %v954
    %v1549 = vpack.c.b16 %v959, %v957
    %v1550 = vpack.c.b16 %v960, %v958
    %v1551 = vpack.c.b16 %v963, %v961
    %v1552 = vpack.c.b16 %v964, %v962
    %v1553 = vpack.c.b16 %v967, %v965
    %v1554 = vpack.c.b16 %v968, %v966
    %v1555 = vpack.c.b16 %v971, %v969
    %v1556 = vpack.c.b16 %v972, %v970
    %v1557 = vpack.c.b16 %v975, %v973
    %v1558 = vpack.c.b16 %v976, %v974
    %v1559 = vpack.c.b16 %v979, %v977
    %v1560 = vpack.c.b16 %v980, %v978
    %v1561 = vpack.c.b16 %v983, %v981
    %v1562 = vpack.c.b16 %v984, %v982
    %v1563 = vpack.c.b16 %v987, %v985
    %v1564 = vpack.c.b16 %v988, %v986
    %v1565 = vpack.c.b16 %v991, %v989
    %v1566 = vpack.c.b16 %v992, %v990
    %v1567 = vpack.c.b16 %v995, %v993
    %v1568 = vpack.c.b16 %v996, %v994
    %v1569 = vpack.c.b16 %v999, %v997
    %v1570 = vpack.c.b16 %v1000, %v998
    %v1571 = vpack.c.b16 %v1003, %v1001
    %v1572 = vpack.c.b16 %v1004, %v1002
    %v1573 = vpack.c.b16 %v1007, %v1005
    %v1574 = vpack.c.b16 %v1008, %v1006
    %v1575 = vpack.c.b16 %v1011, %v1009
    %v1576 = vpack.c.b16 %v1012, %v1010
    %v1577 = vpack.c.b16 %v1015, %v1013
    %v1578 = vpack.c.b16 %v1016, %v1014
    %v1579 = vpack.c.b16 %v1019, %v1017
    %v1580 = vpack.c.b16 %v1020, %v1018
    %v1581 = vpack.c.b16 %v1023, %v1021
    %v1582 = vpack.c.b16 %v1024, %v1022
    %v1583 = vpack.c.b16 %v1027, %v1025
    %v1584 = vpack.c.b16 %v1028, %v1026
    %v1585 = vpack.c.b16 %v1031, %v1029
    %v1586 = vpack.c.b16 %v1032, %v1030
    %v1587 = vpack.c.b16 %v1035, %v1033
    %v1588 = vpack.c.b16 %v1036, %v1034
    %v1589 = vpack.c.b16 %v1039, %v1037
    %v1590 = vpack.c.b16 %v1040, %v1038
    %v1591 = vpack.c.b16 %v1043, %v1041
    %v1592 = vpack.c.b16 %v1044, %v1042
    %v1593 = vpack.c.b16 %v1047, %v1045
    %v1594 = vpack.c.b16 %v1048, %v1046
    %v1595 = vpack.c.b16 %v1051, %v1049
    %v1596 = vpack.c.b16 %v1052, %v1050
    %v1597 = vpack.c.b16 %v1055, %v1053
    %v1598 = vpack.c.b16 %v1056, %v1054
    %v1599 = vpack.c.b16 %v1059, %v1057
    %v1600 = vpack.c.b16 %v1060, %v1058
    %v1601 = vpack.c.b16 %v1063, %v1061
    %v1602 = vpack.c.b16 %v1064, %v1062
    %v1603 = vpack.c.b16 %v1067, %v1065
    %v1604 = vpack.c.b16 %v1068, %v1066
    %v1605 = vpack.c.b16 %v1071, %v1069
    %v1606 = vpack.c.b16 %v1072, %v1070
    %v1607 = vpack.c.b16 %v1075, %v1073
    %v1608 = vpack.c.b16 %v1076, %v1074
    %v1609 = vpack.c.b16 %v1079, %v1077
    %v1610 = vpack.c.b16 %v1080, %v1078
    %v1611 = vpack.c.b16 %v1083, %v1081
    %v1612 = vpack.c.b16 %v1084, %v1082
    %v1613 = vpack.c.b16 %v1087, %v1085
    %v1614 = vpack.c.b16 %v1088, %v1086
    %v1615 = vpack.c.b16 %v1091, %v1089
    %v1616 = vpack.c.b16 %v1092, %v1090
    %v1617 = vpack.c.b16 %v1095, %v1093
    %v1618 = vpack.c.b16 %v1096, %v1094
    %v1619 = vpack.c.b16 %v1099, %v1097
    %v1620 = vpack.c.b16 %v1100, %v1098
    %v1621 = vpack.c.b16 %v1103, %v1101
    %v1622 = vpack.c.b16 %v1104, %v1102
    %v1623 = vpack.c.b16 %v1107, %v1105
    %v1624 = vpack.c.b16 %v1108, %v1106
    %v1625 = vpack.c.b16 %v1111, %v1109
    %v1626 = vpack.c.b16 %v1112, %v1110
    %v1627 = vpack.c.b16 %v1115, %v1113
    %v1628 = vpack.c.b16 %v1116, %v1114
    %v1629 = vpack.c.b16 %v1119, %v1117
    %v1630 = vpack.c.b16 %v1120, %v1118
    %v1631 = vpack.c.b16 %v1123, %v1121
    %v1632 = vpack.c.b16 %v1124, %v1122
    %v1633 = vpack.c.b16 %v1127, %v1125
    %v1634 = vpack.c.b16 %v1128, %v1126
    %v1635 = vpack.c.b16 %v1131, %v1129
    %v1636 = vpack.c.b16 %v1132, %v1130
    %v1637 = vpack.c.b16 %v1135, %v1133
    %v1638 = vpack.c.b16 %v1136, %v1134
    %v1639 = vpack.c.b16 %v1139, %v1137
    %v1640 = vpack.c.b16 %v1140, %v1138
    %v1641 = vpack.c.b16 %v1143, %v1141
    %v1642 = vpack.c.b16 %v1144, %v1142
    %v1643 = vpack.c.b16 %v1147, %v1145
    %v1644 = vpack.c.b16 %v1148, %v1146
    %v1645 = vpack.c.b16 %v1151, %v1149
    %v1646 = vpack.c.b16 %v1152, %v1150
    %v1647 = vpack.c.b16 %v1155, %v1153
    %v1648 = vpack.c.b16 %v1156, %v1154
    %v1649 = vpack.c.b16 %v1159, %v1157
    %v1650 = vpack.c.b16 %v1160, %v1158
    %v1651 = vpack.c.b16 %v1163, %v1161
    %v1652 = vpack.c.b16 %v1164, %v1162
    %v1653 = vpack.c.b16 %v1167, %v1165
    %v1654 = vpack.c.b16 %v1168, %v1166
    %v1655 = vpack.c.b16 %v1171, %v1169
    %v1656 = vpack.c.b16 %v1172, %v1170
    %v1657 = vpack.c.b16 %v1175, %v1173
    %v1658 = vpack.c.b16 %v1176, %v1174
    %v1659 = vpack.c.b16 %v1179, %v1177
    %v1660 = vpack.c.b16 %v1180, %v1178
    %v1661 = vpack.c.b16 %v1183, %v1181
    %v1662 = vpack.c.b16 %v1184, %v1182
    %v1663 = vpack.c.b16 %v1187, %v1185
    %v1664 = vpack.c.b16 %v1188, %v1186
    %v1665 = vpack.c.b16 %v1191, %v1189
    %v1666 = vpack.c.b16 %v1192, %v1190
    %v1667 = vpack.c.b16 %v1195, %v1193
    %v1668 = vpack.c.b16 %v1196, %v1194
    %v1669 = vpack.c.b16 %v1199, %v1197
    %v1670 = vpack.c.b16 %v1200, %v1198
    %v1671 = vpack.c.b16 %v1203, %v1201
    %v1672 = vpack.c.b16 %v1204, %v1202
    %v1673 = vpack.c.b16 %v1207, %v1205
    %v1674 = vpack.c.b16 %v1208, %v1206
    %v1675 = vpack.c.b16 %v1211, %v1209
    %v1676 = vpack.c.b16 %v1212, %v1210
    %v1677 = vpack.c.b16 %v1215, %v1213
    %v1678 = vpack.c.b16 %v1216, %v1214
    %v1679 = vpack.c.b16 %v1219, %v1217
    %v1680 = vpack.c.b16 %v1220, %v1218
    %v1681 = vpack.c.b16 %v1223, %v1221
    %v1682 = vpack.c.b16 %v1224, %v1222
    %v1683 = vpack.c.b16 %v1227, %v1225
    %v1684 = vpack.c.b16 %v1228, %v1226
    %v1685 = vpack.c.b16 %v1231, %v1229
    %v1686 = vpack.c.b16 %v1232, %v1230
    %v1687 = vpack.c.b16 %v1235, %v1233
    %v1688 = vpack.c.b16 %v1236, %v1234
    %v1689 = vpack.c.b16 %v1239, %v1237
    %v1690 = vpack.c.b16 %v1240, %v1238
    %v1691 = vpack.c.b16 %v1243, %v1241
    %v1692 = vpack.c.b16 %v1244, %v1242
    %v1693 = vpack.c.b16 %v1247, %v1245
    %v1694 = vpack.c.b16 %v1248, %v1246
    %v1695 = vpack.c.b16 %v1251, %v1249
    %v1696 = vpack.c.b16 %v1252, %v1250
    %v1697 = vpack.c.b16 %v1255, %v1253
    %v1698 = vpack.c.b16 %v1256, %v1254
    %v1699 = vpack.c.b16 %v1259, %v1257
    %v1700 = vpack.c.b16 %v1260, %v1258
    %v1701 = vpack.c.b16 %v1263, %v1261
    %v1702 = vpack.c.b16 %v1264, %v1262
    %v1703 = vpack.c.b16 %v1267, %v1265
    %v1704 = vpack.c.b16 %v1268, %v1266
    %v1705 = vpack.c.b16 %v1271, %v1269
    %v1706 = vpack.c.b16 %v1272, %v1270
    %v1707 = vpack.c.b16 %v1275, %v1273
    %v1708 = vpack.c.b16 %v1276, %v1274
    %v1709 = vpack.c.b16 %v1279, %v1277
    %v1710 = vpack.c.b16 %v1280, %v1278
    %v1711 = vpack.c.b16 %v1283, %v1281
    %v1712 = vpack.c.b16 %v1284, %v1282
    %v1713 = vpack.c.b16 %v1287, %v1285
    %v1714 = vpack.c.b16 %v1288, %v1286
    %v1715 = vpack.c.b16 %v1291, %v1289
    %v1716 = vpack.c.b16 %v1292, %v1290
    %v1717 = vpack.c.b16 %v1295, %v1293
    %v1718 = vpack.c.b16 %v1296, %v1294
    %v1719 = vpack.c.b16 %v1299, %v1297
    %v1720 = vpack.c.b16 %v1300, %v1298
    %v1721 = vpack.c.b16 %v1303, %v1301
    %v1722 = vpack.c.b16 %v1304, %v1302
    %v1723 = vpack.c.b16 %v1307, %v1305
    %v1724 = vpack.c.b16 %v1308, %v1306
    %v1725 = vpack.c.b16 %v1311, %v1309
    %v1726 = vpack.c.b16 %v1312, %v1310
    %v1727 = vpack.c.b16 %v1315, %v1313
    %v1728 = vpack.c.b16 %v1316, %v1314
    %v1729 = vpack.c.b16 %v1319, %v1317
    %v1730 = vpack.c.b16 %v1320, %v1318
    %v1731 = vpack.c.b16 %v1323, %v1321
    %v1732 = vpack.c.b16 %v1324, %v1322
    %v1733 = vpack.c.b16 %v1327, %v1325
    %v1734 = vpack.c.b16 %v1328, %v1326
    %v1735 = vpack.c.b16 %v1331, %v1329
    %v1736 = vpack.c.b16 %v1332, %v1330
    %v1737 = vpack.c.b16 %v1335, %v1333
    %v1738 = vpack.c.b16 %v1336, %v1334
    %v1739 = vpack.c.b16 %v1339, %v1337
    %v1740 = vpack.c.b16 %v1340, %v1338
    %v1741 = vpack.c.b16 %v1343, %v1341
    %v1742 = vpack.c.b16 %v1344, %v1342
    %v1743 = vpack.c.b16 %v1347, %v1345
    %v1744 = vpack.c.b16 %v1348, %v1346
    %v1745 = vpack.c.b16 %v1351, %v1349
    %v1746 = vpack.c.b16 %v1352, %v1350
    %v1747 = vpack.c.b16 %v1355, %v1353
    %v1748 = vpack.c.b16 %v1356, %v1354
    %v1749 = vpack.c.b16 %v1359, %v1357
    %v1750 = vpack.c.b16 %v1360, %v1358
    %v1751 = vpack.c.b16 %v1363, %v1361
    %v1752 = vpack.c.b16 %v1364, %v1362
    %v1753 = vpack.c.b16 %v1367, %v1365
    %v1754 = vpack.c.b16 %v1368, %v1366
    %v1755 = vpack.c.b16 %v1371, %v1369
    %v1756 = vpack.c.b16 %v1372, %v1370
    %v1757 = vpack.c.b16 %v1375, %v1373
    %v1758 = vpack.c.b16 %v1376, %v1374
    %v1759 = vpack.c.b16 %v1379, %v1377
    %v1760 = vpack.c.b16 %v1380, %v1378
    %v1761 = vpack.c.b16 %v1383, %v1381
    %v1762 = vpack.c.b16 %v1384, %v1382
    %v1763 = vpack.c.b16 %v1387, %v1385
    %v1764 = vpack.c.b16 %v1388, %v1386
    %v1765 = vpack.c.b16 %v1391, %v1389
    %v1766 = vpack.c.b16 %v1392, %v1390
    %v1767 = vpack.c.b16 %v1395, %v1393
    %v1768 = vpack.c.b16 %v1396, %v1394
    %v1769 = vpack.c.b16 %v1399, %v1397
    %v1770 = vpack.c.b16 %v1400, %v1398
    %v1771 = vpack.c.b16 %v1403, %v1401
    %v1772 = vpack.c.b16 %v1404, %v1402
    %v1773 = vpack.c.b16 %v1407, %v1405
    %v1774 = vpack.c.b16 %v1408, %v1406
    %v1775 = vpack.c.b16 %v1411, %v1409
    %v1776 = vpack.c.b16 %v1412, %v1410
    %v1777 = vpack.c.b16 %v1415, %v1413
    %v1778 = vpack.c.b16 %v1416, %v1414
    %v1779 = vpack.c.b16 %v1419, %v1417
    %v1780 = vpack.c.b16 %v1420, %v1418
    %v1781 = vpack.c.b16 %v1423, %v1421
    %v1782 = vpack.c.b16 %v1424, %v1422
    %v1783 = vpack.c.b16 %v1427, %v1425
    %v1784 = vpack.c.b16 %v1428, %v1426
    %v1785 = vpack.c.b16 %v1431, %v1429
    %v1786 = vpack.c.b16 %v1432, %v1430
    %v1787 = vpack.c.b16 %v1435, %v1433
    %v1788 = vpack.c.b16 %v1436, %v1434
    %v1789 = vpack.c.b16 %v1439, %v1437
    %v1790 = vpack.c.b16 %v1440, %v1438
    %v1791 = vpack.c.b16 %v1443, %v1441
    %v1792 = vpack.c.b16 %v1444, %v1442
    %v1793 = vpack.c.b16 %v1447, %v1445
    %v1794 = vpack.c.b16 %v1448, %v1446
    %v1795 = vpack.c.b16 %v1451, %v1449
    %v1796 = vpack.c.b16 %v1452, %v1450
    %v1797 = vpack.c.b16 %v1455, %v1453
    %v1798 = vpack.c.b16 %v1456, %v1454
    %v1799 = vpack.c.b16 %v1459, %v1457
    %v1800 = vpack.c.b16 %v1460, %v1458
    %v1801 = vpack.c.b16 %v1463, %v1461
    %v1802 = vpack.c.b16 %v1464, %v1462
    %v1803 = vpack.c.b16 %v1467, %v1465
    %v1804 = vpack.c.b16 %v1468, %v1466
    %v1805 = vpack.c.b16 %v1471, %v1469
    %v1806 = vpack.c.b16 %v1472, %v1470
    %v1807 = vpack.c.b16 %v1475, %v1473
    %v1808 = vpack.c.b16 %v1476, %v1474
    %v1809 = vpack.c.b16 %v1479, %v1477
    %v1810 = vpack.c.b16 %v1480, %v1478
    %v1811 = vpack.c.b16 %v1483, %v1481
    %v1812 = vpack.c.b16 %v1484, %v1482
    %v1813 = vpack.c.b16 %v1487, %v1485
    %v1814 = vpack.c.b16 %v1488, %v1486
    %v1815 = vpack.c.b16 %v1491, %v1489
    %v1816 = vpack.c.b16 %v1492, %v1490
    %vm2141 = vcmask 261120
    %v2143 = vsel %vm2141, %v491, 0
    %2145 = vmatprep.subr.bf16.mxu0 %v1494
    %2146 = vmatpush1.bf16.msra.mxu0 %v1493
    %2147 = vmatprep.subr.bf16.mxu0 %v1496
    %2148 = vmatpush1.bf16.msra.mxu0 %v1495
    %2149 = vmatprep.subr.bf16.mxu0 %v1498
    %2150 = vmatpush1.bf16.msra.mxu0 %v1497
    %2151 = vmatprep.subr.bf16.mxu0 %v1500
    %2152 = vmatpush1.bf16.msra.mxu0 %v1499
    %2153 = vmatprep.subr.bf16.mxu0 %v1502
    %2154 = vmatpush1.bf16.msra.mxu0 %v1501
    %2155 = vmatprep.subr.bf16.mxu0 %v1504
    %2156 = vmatpush1.bf16.msra.mxu0 %v1503
    %2157 = vmatprep.subr.bf16.mxu0 %v1506
    %2158 = vmatpush1.bf16.msra.mxu0 %v1505
    %2159 = vmatprep.subr.bf16.mxu0 %v1508
    %2160 = vmatpush1.bf16.msra.mxu0 %v1507
    %2161 = vmatprep.subr.bf16.mxu0 %v1510
    %2162 = vmatpush1.bf16.msra.mxu0 %v1509
    %2163 = vmatprep.subr.bf16.mxu0 %v1512
    %2164 = vmatpush1.bf16.msra.mxu0 %v1511
    %2165 = vmatprep.subr.bf16.mxu0 %v1514
    %2166 = vmatpush1.bf16.msra.mxu0 %v1513
    %2167 = vmatprep.subr.bf16.mxu0 %v1516
    %2168 = vmatpush1.bf16.msra.mxu0 %v1515
    %2169 = vmatprep.subr.bf16.mxu0 %v1518
    %2170 = vmatpush1.bf16.msra.mxu0 %v1517
    %2171 = vmatprep.subr.bf16.mxu0 %v1520
    %2172 = vmatpush1.bf16.msra.mxu0 %v1519
    %2173 = vmatprep.subr.bf16.mxu0 %v1522
    %2174 = vmatpush1.bf16.msra.mxu0 %v1521
    %2175 = vmatprep.subr.bf16.mxu0 %v1524
    %2176 = vmatpush1.bf16.msra.mxu0 %v1523
    %2177 = vmatprep.mubr.bf16.mxu0 %v401
    %2178 = vmatmul.mubr.bf16.gmra.mrb[0].mxu0 %v387
    %v2179 = vpop.f32.mrb[0].mxu0
    %v2180 = vadd.f32 %v354, %v2179
    %v2181 = vpop.f32.mrb[0].mxu0
    %v2182 = vadd.f32 %v358, %v2181
    %v2183 = vpop.f32.mrb[0].mxu0
    %v2184 = vpop.f32.mrb[0].mxu0
    %2185 = vdwg.mxu0
    %2186 = vmatprep.subr.bf16.mxu0 %v1526
    %2187 = vmatpush1.bf16.msra.mxu0 %v1525
    %2188 = vmatprep.subr.bf16.mxu0 %v1528
    %2189 = vmatpush1.bf16.msra.mxu0 %v1527
    %2190 = vmatprep.subr.bf16.mxu0 %v1530
    %2191 = vmatpush1.bf16.msra.mxu0 %v1529
    %2192 = vmatprep.subr.bf16.mxu0 %v1532
    %2193 = vmatpush1.bf16.msra.mxu0 %v1531
    %2194 = vmatprep.subr.bf16.mxu0 %v1534
    %2195 = vmatpush1.bf16.msra.mxu0 %v1533
    %2196 = vmatprep.subr.bf16.mxu0 %v1536
    %2197 = vmatpush1.bf16.msra.mxu0 %v1535
    %2198 = vmatprep.subr.bf16.mxu0 %v1538
    %2199 = vmatpush1.bf16.msra.mxu0 %v1537
    %2200 = vmatprep.subr.bf16.mxu0 %v1540
    %2201 = vmatpush1.bf16.msra.mxu0 %v1539
    %2202 = vmatprep.subr.bf16.mxu0 %v1542
    %2203 = vmatpush1.bf16.msra.mxu0 %v1541
    %2204 = vmatprep.subr.bf16.mxu0 %v1544
    %2205 = vmatpush1.bf16.msra.mxu0 %v1543
    %2206 = vmatprep.subr.bf16.mxu0 %v1546
    %2207 = vmatpush1.bf16.msra.mxu0 %v1545
    %2208 = vmatprep.subr.bf16.mxu0 %v1548
    %2209 = vmatpush1.bf16.msra.mxu0 %v1547
    %2210 = vmatprep.subr.bf16.mxu0 %v1550
    %2211 = vmatpush1.bf16.msra.mxu0 %v1549
    %2212 = vmatprep.subr.bf16.mxu0 %v1552
    %2213 = vmatpush1.bf16.msra.mxu0 %v1551
    %2214 = vmatprep.subr.bf16.mxu0 %v1554
    %2215 = vmatpush1.bf16.msra.mxu0 %v1553
    %2216 = vmatprep.subr.bf16.mxu0 %v1556
    %2217 = vmatpush1.bf16.msra.mxu0 %v1555
    %2218 = vmatprep.mubr.bf16.mxu0 %v411
    %2219 = vmatmul.mubr.bf16.gmra.mrb[0].mxu0 %v409
    %v2220 = vpop.f32.mrb[0].mxu0
    %v2221 = vadd.f32 %v2180, %v2220
    %v2222 = vpop.f32.mrb[0].mxu0
    %v2223 = vadd.f32 %v2182, %v2222
    %v2224 = vpop.f32.mrb[0].mxu0
    %v2225 = vpop.f32.mrb[0].mxu0
    %2226 = vdwg.mxu0
    %2227 = vmatprep.subr.bf16.mxu0 %v1558
    %2228 = vmatpush1.bf16.msra.mxu0 %v1557
    %2229 = vmatprep.subr.bf16.mxu0 %v1560
    %2230 = vmatpush1.bf16.msra.mxu0 %v1559
    %2231 = vmatprep.subr.bf16.mxu0 %v1562
    %2232 = vmatpush1.bf16.msra.mxu0 %v1561
    %2233 = vmatprep.subr.bf16.mxu0 %v1564
    %2234 = vmatpush1.bf16.msra.mxu0 %v1563
    %2235 = vmatprep.subr.bf16.mxu0 %v1566
    %2236 = vmatpush1.bf16.msra.mxu0 %v1565
    %2237 = vmatprep.subr.bf16.mxu0 %v1568
    %2238 = vmatpush1.bf16.msra.mxu0 %v1567
    %2239 = vmatprep.subr.bf16.mxu0 %v1570
    %2240 = vmatpush1.bf16.msra.mxu0 %v1569
    %2241 = vmatprep.subr.bf16.mxu0 %v1572
    %2242 = vmatpush1.bf16.msra.mxu0 %v1571
    %2243 = vmatprep.subr.bf16.mxu0 %v1574
    %2244 = vmatpush1.bf16.msra.mxu0 %v1573
    %2245 = vmatprep.subr.bf16.mxu0 %v1576
    %2246 = vmatpush1.bf16.msra.mxu0 %v1575
    %2247 = vmatprep.subr.bf16.mxu0 %v1578
    %2248 = vmatpush1.bf16.msra.mxu0 %v1577
    %2249 = vmatprep.subr.bf16.mxu0 %v1580
    %2250 = vmatpush1.bf16.msra.mxu0 %v1579
    %2251 = vmatprep.subr.bf16.mxu0 %v1582
    %2252 = vmatpush1.bf16.msra.mxu0 %v1581
    %2253 = vmatprep.subr.bf16.mxu0 %v1584
    %2254 = vmatpush1.bf16.msra.mxu0 %v1583
    %2255 = vmatprep.subr.bf16.mxu0 %v1586
    %2256 = vmatpush1.bf16.msra.mxu0 %v1585
    %2257 = vmatprep.subr.bf16.mxu0 %v1588
    %2258 = vmatpush1.bf16.msra.mxu0 %v1587
    %2259 = vmatprep.mubr.bf16.mxu0 %v408
    %2260 = vmatmul.mubr.bf16.gmra.mrb[0].mxu0 %v394
    %v2261 = vpop.f32.mrb[0].mxu0
    %v2262 = vadd.f32 %v2221, %v2261
    %v2263 = vpop.f32.mrb[0].mxu0
    %v2264 = vadd.f32 %v2223, %v2263
    %v2265 = vpop.f32.mrb[0].mxu0
    %v2266 = vpop.f32.mrb[0].mxu0
    %2267 = vdwg.mxu0
    %2268 = vmatprep.subr.bf16.mxu0 %v1590
    %2269 = vmatpush1.bf16.msra.mxu0 %v1589
    %2270 = vmatprep.subr.bf16.mxu0 %v1592
    %2271 = vmatpush1.bf16.msra.mxu0 %v1591
    %2272 = vmatprep.subr.bf16.mxu0 %v1594
    %2273 = vmatpush1.bf16.msra.mxu0 %v1593
    %2274 = vmatprep.subr.bf16.mxu0 %v1596
    %2275 = vmatpush1.bf16.msra.mxu0 %v1595
    %2276 = vmatprep.subr.bf16.mxu0 %v1598
    %2277 = vmatpush1.bf16.msra.mxu0 %v1597
    %2278 = vmatprep.subr.bf16.mxu0 %v1600
    %2279 = vmatpush1.bf16.msra.mxu0 %v1599
    %2280 = vmatprep.subr.bf16.mxu0 %v1602
    %2281 = vmatpush1.bf16.msra.mxu0 %v1601
    %2282 = vmatprep.subr.bf16.mxu0 %v1604
    %2283 = vmatpush1.bf16.msra.mxu0 %v1603
    %2284 = vmatprep.subr.bf16.mxu0 %v1606
    %2285 = vmatpush1.bf16.msra.mxu0 %v1605
    %2286 = vmatprep.subr.bf16.mxu0 %v1608
    %2287 = vmatpush1.bf16.msra.mxu0 %v1607
    %2288 = vmatprep.subr.bf16.mxu0 %v1610
    %2289 = vmatpush1.bf16.msra.mxu0 %v1609
    %2290 = vmatprep.subr.bf16.mxu0 %v1612
    %2291 = vmatpush1.bf16.msra.mxu0 %v1611
    %2292 = vmatprep.subr.bf16.mxu0 %v1614
    %2293 = vmatpush1.bf16.msra.mxu0 %v1613
    %2294 = vmatprep.subr.bf16.mxu0 %v1616
    %2295 = vmatpush1.bf16.msra.mxu0 %v1615
    %2296 = vmatprep.subr.bf16.mxu0 %v1618
    %2297 = vmatpush1.bf16.msra.mxu0 %v1617
    %2298 = vmatprep.subr.bf16.mxu0 %v1620
    %2299 = vmatpush1.bf16.msra.mxu0 %v1619
    %2300 = vmatprep.mubr.bf16.mxu0 %v412
    %2301 = vmatmul.mubr.bf16.gmra.mrb[0].mxu0 %v410
    %v2302 = vpop.f32.mrb[0].mxu0
    %v2303 = vadd.f32 %v2262, %v2302
    %v2304 = vpop.f32.mrb[0].mxu0
    %v2305 = vadd.f32 %v2264, %v2304
    %v2306 = vpop.f32.mrb[0].mxu0
    %v2307 = vpop.f32.mrb[0].mxu0
    %2308 = vdwg.mxu0
    %2309 = vmatprep.subr.bf16.mxu0 %v1622
    %2310 = vmatpush1.bf16.msra.mxu0 %v1621
    %2311 = vmatprep.subr.bf16.mxu0 %v1624
    %2312 = vmatpush1.bf16.msra.mxu0 %v1623
    %2313 = vmatprep.subr.bf16.mxu0 %v1626
    %2314 = vmatpush1.bf16.msra.mxu0 %v1625
    %2315 = vmatprep.subr.bf16.mxu0 %v1628
    %2316 = vmatpush1.bf16.msra.mxu0 %v1627
    %2317 = vmatprep.subr.bf16.mxu0 %v1630
    %2318 = vmatpush1.bf16.msra.mxu0 %v1629
    %2319 = vmatprep.subr.bf16.mxu0 %v1632
    %2320 = vmatpush1.bf16.msra.mxu0 %v1631
    %2321 = vmatprep.subr.bf16.mxu0 %v1634
    %2322 = vmatpush1.bf16.msra.mxu0 %v1633
    %2323 = vmatprep.subr.bf16.mxu0 %v1636
    %2324 = vmatpush1.bf16.msra.mxu0 %v1635
    %2325 = vmatprep.subr.bf16.mxu0 %v1638
    %2326 = vmatpush1.bf16.msra.mxu0 %v1637
    %2327 = vmatprep.subr.bf16.mxu0 %v1640
    %2328 = vmatpush1.bf16.msra.mxu0 %v1639
    %2329 = vmatprep.subr.bf16.mxu0 %v1642
    %2330 = vmatpush1.bf16.msra.mxu0 %v1641
    %2331 = vmatprep.subr.bf16.mxu0 %v1644
    %2332 = vmatpush1.bf16.msra.mxu0 %v1643
    %2333 = vmatprep.subr.bf16.mxu0 %v1646
    %2334 = vmatpush1.bf16.msra.mxu0 %v1645
    %2335 = vmatprep.subr.bf16.mxu0 %v1648
    %2336 = vmatpush1.bf16.msra.mxu0 %v1647
    %2337 = vmatprep.subr.bf16.mxu0 %v1650
    %2338 = vmatpush1.bf16.msra.mxu0 %v1649
    %2339 = vmatprep.subr.bf16.mxu0 %v1652
    %2340 = vmatpush1.bf16.msra.mxu0 %v1651
    %2341 = vmatprep.mubr.bf16.mxu0 %v450
    %2342 = vmatmul.mubr.bf16.gmra.mrb[0].mxu0 %v436
    %v2343 = vpop.f32.mrb[0].mxu0
    %v2344 = vadd.f32 %v2303, %v2343
    %v2345 = vpop.f32.mrb[0].mxu0
    %v2346 = vadd.f32 %v2305, %v2345
    %v2347 = vpop.f32.mrb[0].mxu0
    %v2348 = vpop.f32.mrb[0].mxu0
    %2349 = vdwg.mxu0
    %2350 = vmatprep.subr.bf16.mxu0 %v1654
    %2351 = vmatpush1.bf16.msra.mxu0 %v1653
    %2352 = vmatprep.subr.bf16.mxu0 %v1656
    %2353 = vmatpush1.bf16.msra.mxu0 %v1655
    %2354 = vmatprep.subr.bf16.mxu0 %v1658
    %2355 = vmatpush1.bf16.msra.mxu0 %v1657
    %2356 = vmatprep.subr.bf16.mxu0 %v1660
    %2357 = vmatpush1.bf16.msra.mxu0 %v1659
    %2358 = vmatprep.subr.bf16.mxu0 %v1662
    %2359 = vmatpush1.bf16.msra.mxu0 %v1661
    %2360 = vmatprep.subr.bf16.mxu0 %v1664
    %2361 = vmatpush1.bf16.msra.mxu0 %v1663
    %2362 = vmatprep.subr.bf16.mxu0 %v1666
    %2363 = vmatpush1.bf16.msra.mxu0 %v1665
    %2364 = vmatprep.subr.bf16.mxu0 %v1668
    %2365 = vmatpush1.bf16.msra.mxu0 %v1667
    %2366 = vmatprep.subr.bf16.mxu0 %v1670
    %2367 = vmatpush1.bf16.msra.mxu0 %v1669
    %2368 = vmatprep.subr.bf16.mxu0 %v1672
    %2369 = vmatpush1.bf16.msra.mxu0 %v1671
    %2370 = vmatprep.subr.bf16.mxu0 %v1674
    %2371 = vmatpush1.bf16.msra.mxu0 %v1673
    %2372 = vmatprep.subr.bf16.mxu0 %v1676
    %2373 = vmatpush1.bf16.msra.mxu0 %v1675
    %2374 = vmatprep.subr.bf16.mxu0 %v1678
    %2375 = vmatpush1.bf16.msra.mxu0 %v1677
    %2376 = vmatprep.subr.bf16.mxu0 %v1680
    %2377 = vmatpush1.bf16.msra.mxu0 %v1679
    %2378 = vmatprep.subr.bf16.mxu0 %v1682
    %2379 = vmatpush1.bf16.msra.mxu0 %v1681
    %2380 = vmatprep.subr.bf16.mxu0 %v1684
    %2381 = vmatpush1.bf16.msra.mxu0 %v1683
    %2382 = vmatprep.mubr.bf16.mxu0 %v460
    %2383 = vmatmul.mubr.bf16.gmra.mrb[0].mxu0 %v458
    %v2384 = vpop.f32.mrb[0].mxu0
    %v2385 = vadd.f32 %v2344, %v2384
    %v2386 = vpop.f32.mrb[0].mxu0
    %v2387 = vadd.f32 %v2346, %v2386
    %v2388 = vpop.f32.mrb[0].mxu0
    %v2389 = vpop.f32.mrb[0].mxu0
    %2390 = vdwg.mxu0
    %2391 = vmatprep.subr.bf16.mxu0 %v1686
    %2392 = vmatpush1.bf16.msra.mxu0 %v1685
    %2393 = vmatprep.subr.bf16.mxu0 %v1688
    %2394 = vmatpush1.bf16.msra.mxu0 %v1687
    %2395 = vmatprep.subr.bf16.mxu0 %v1690
    %2396 = vmatpush1.bf16.msra.mxu0 %v1689
    %2397 = vmatprep.subr.bf16.mxu0 %v1692
    %2398 = vmatpush1.bf16.msra.mxu0 %v1691
    %2399 = vmatprep.subr.bf16.mxu0 %v1694
    %2400 = vmatpush1.bf16.msra.mxu0 %v1693
    %2401 = vmatprep.subr.bf16.mxu0 %v1696
    %2402 = vmatpush1.bf16.msra.mxu0 %v1695
    %2403 = vmatprep.subr.bf16.mxu0 %v1698
    %2404 = vmatpush1.bf16.msra.mxu0 %v1697
    %2405 = vmatprep.subr.bf16.mxu0 %v1700
    %2406 = vmatpush1.bf16.msra.mxu0 %v1699
    %2407 = vmatprep.subr.bf16.mxu0 %v1702
    %2408 = vmatpush1.bf16.msra.mxu0 %v1701
    %2409 = vmatprep.subr.bf16.mxu0 %v1704
    %2410 = vmatpush1.bf16.msra.mxu0 %v1703
    %2411 = vmatprep.subr.bf16.mxu0 %v1706
    %2412 = vmatpush1.bf16.msra.mxu0 %v1705
    %2413 = vmatprep.subr.bf16.mxu0 %v1708
    %2414 = vmatpush1.bf16.msra.mxu0 %v1707
    %2415 = vmatprep.subr.bf16.mxu0 %v1710
    %2416 = vmatpush1.bf16.msra.mxu0 %v1709
    %2417 = vmatprep.subr.bf16.mxu0 %v1712
    %2418 = vmatpush1.bf16.msra.mxu0 %v1711
    %2419 = vmatprep.subr.bf16.mxu0 %v1714
    %2420 = vmatpush1.bf16.msra.mxu0 %v1713
    %2421 = vmatprep.subr.bf16.mxu0 %v1716
    %2422 = vmatpush1.bf16.msra.mxu0 %v1715
    %2423 = vmatprep.mubr.bf16.mxu0 %v457
    %2424 = vmatmul.mubr.bf16.gmra.mrb[0].mxu0 %v443
    %v2425 = vpop.f32.mrb[0].mxu0
    %v2426 = vadd.f32 %v2385, %v2425
    %v2427 = vpop.f32.mrb[0].mxu0
    %v2428 = vadd.f32 %v2387, %v2427
    %v2429 = vpop.f32.mrb[0].mxu0
    %v2430 = vpop.f32.mrb[0].mxu0
    %2431 = vdwg.mxu0
    %2432 = vmatprep.subr.bf16.mxu0 %v1718
    %2433 = vmatpush1.bf16.msra.mxu0 %v1717
    %2434 = vmatprep.subr.bf16.mxu0 %v1720
    %2435 = vmatpush1.bf16.msra.mxu0 %v1719
    %2436 = vmatprep.subr.bf16.mxu0 %v1722
    %2437 = vmatpush1.bf16.msra.mxu0 %v1721
    %2438 = vmatprep.subr.bf16.mxu0 %v1724
    %2439 = vmatpush1.bf16.msra.mxu0 %v1723
    %2440 = vmatprep.subr.bf16.mxu0 %v1726
    %2441 = vmatpush1.bf16.msra.mxu0 %v1725
    %2442 = vmatprep.subr.bf16.mxu0 %v1728
    %2443 = vmatpush1.bf16.msra.mxu0 %v1727
    %2444 = vmatprep.subr.bf16.mxu0 %v1730
    %2445 = vmatpush1.bf16.msra.mxu0 %v1729
    %2446 = vmatprep.subr.bf16.mxu0 %v1732
    %2447 = vmatpush1.bf16.msra.mxu0 %v1731
    %2448 = vmatprep.subr.bf16.mxu0 %v1734
    %2449 = vmatpush1.bf16.msra.mxu0 %v1733
    %2450 = vmatprep.subr.bf16.mxu0 %v1736
    %2451 = vmatpush1.bf16.msra.mxu0 %v1735
    %2452 = vmatprep.subr.bf16.mxu0 %v1738
    %2453 = vmatpush1.bf16.msra.mxu0 %v1737
    %2454 = vmatprep.subr.bf16.mxu0 %v1740
    %2455 = vmatpush1.bf16.msra.mxu0 %v1739
    %2456 = vmatprep.subr.bf16.mxu0 %v1742
    %2457 = vmatpush1.bf16.msra.mxu0 %v1741
    %2458 = vmatprep.subr.bf16.mxu0 %v1744
    %2459 = vmatpush1.bf16.msra.mxu0 %v1743
    %2460 = vmatprep.subr.bf16.mxu0 %v1746
    %2461 = vmatpush1.bf16.msra.mxu0 %v1745
    %2462 = vmatprep.subr.bf16.mxu0 %v1748
    %2463 = vmatpush1.bf16.msra.mxu0 %v1747
    %2464 = vmatprep.mubr.bf16.mxu0 %v461
    %2465 = vmatmul.mubr.bf16.gmra.mrb[0].mxu0 %v459
    %v2466 = vpop.f32.mrb[0].mxu0
    %v2467 = vadd.f32 %v2426, %v2466
    %v2468 = vpop.f32.mrb[0].mxu0
    %v2469 = vadd.f32 %v2428, %v2468
    %v2470 = vpop.f32.mrb[0].mxu0
    %v2471 = vpop.f32.mrb[0].mxu0
    %2472 = vdwg.mxu0
    %2473 = vmatprep.subr.bf16.mxu0 %v1750
    %2474 = vmatpush1.bf16.msra.mxu0 %v1749
    %2475 = vmatprep.subr.bf16.mxu0 %v1752
    %2476 = vmatpush1.bf16.msra.mxu0 %v1751
    %2477 = vmatprep.subr.bf16.mxu0 %v1754
    %2478 = vmatpush1.bf16.msra.mxu0 %v1753
    %2479 = vmatprep.subr.bf16.mxu0 %v1756
    %2480 = vmatpush1.bf16.msra.mxu0 %v1755
    %2481 = vmatprep.subr.bf16.mxu0 %v1758
    %2482 = vmatpush1.bf16.msra.mxu0 %v1757
    %2483 = vmatprep.subr.bf16.mxu0 %v1760
    %2484 = vmatpush1.bf16.msra.mxu0 %v1759
    %2485 = vmatprep.subr.bf16.mxu0 %v1762
    %2486 = vmatpush1.bf16.msra.mxu0 %v1761
    %2487 = vmatprep.subr.bf16.mxu0 %v1764
    %2488 = vmatpush1.bf16.msra.mxu0 %v1763
    %2489 = vmatprep.subr.bf16.mxu0 %v1766
    %2490 = vmatpush1.bf16.msra.mxu0 %v1765
    %2491 = vmatprep.subr.bf16.mxu0 %v1768
    %2492 = vmatpush1.bf16.msra.mxu0 %v1767
    %2493 = vmatprep.subr.bf16.mxu0 %v1770
    %2494 = vmatpush1.bf16.msra.mxu0 %v1769
    %2495 = vmatprep.subr.bf16.mxu0 %v1772
    %2496 = vmatpush1.bf16.msra.mxu0 %v1771
    %2497 = vmatprep.subr.bf16.mxu0 %v1774
    %2498 = vmatpush1.bf16.msra.mxu0 %v1773
    %2499 = vmatprep.subr.bf16.mxu0 %v1776
    %2500 = vmatpush1.bf16.msra.mxu0 %v1775
    %2501 = vmatprep.subr.bf16.mxu0 %v1778
    %2502 = vmatpush1.bf16.msra.mxu0 %v1777
    %2503 = vmatprep.subr.bf16.mxu0 %v1780
    %2504 = vmatpush1.bf16.msra.mxu0 %v1779
    %2505 = vmatprep.mubr.bf16.mxu0 %v498
    %2506 = vmatmul.mubr.bf16.gmra.mrb[0].mxu0 %v484
    %v2507 = vpop.f32.mrb[0].mxu0
    %v2508 = vadd.f32 %v2467, %v2507
    %v2509 = vpop.f32.mrb[0].mxu0
    %v2510 = vadd.f32 %v2469, %v2509
    %v2511 = vpop.f32.mrb[0].mxu0
    %v2512 = vpop.f32.mrb[0].mxu0
    %2513 = vdwg.mxu0
    %2514 = vmatprep.subr.bf16.mxu0 %v1782
    %2515 = vmatpush1.bf16.msra.mxu0 %v1781
    %2516 = vmatprep.subr.bf16.mxu0 %v1784
    %2517 = vmatpush1.bf16.msra.mxu0 %v1783
    %2518 = vmatprep.subr.bf16.mxu0 %v1786
    %2519 = vmatpush1.bf16.msra.mxu0 %v1785
    %2520 = vmatprep.subr.bf16.mxu0 %v1788
    %2521 = vmatpush1.bf16.msra.mxu0 %v1787
    %2522 = vmatprep.subr.bf16.mxu0 %v1790
    %2523 = vmatpush1.bf16.msra.mxu0 %v1789
    %2524 = vmatprep.subr.bf16.mxu0 %v1792
    %2525 = vmatpush1.bf16.msra.mxu0 %v1791
    %2526 = vmatprep.subr.bf16.mxu0 %v1794
    %2527 = vmatpush1.bf16.msra.mxu0 %v1793
    %2528 = vmatprep.subr.bf16.mxu0 %v1796
    %2529 = vmatpush1.bf16.msra.mxu0 %v1795
    %2530 = vmatprep.subr.bf16.mxu0 %v1798
    %2531 = vmatpush1.bf16.msra.mxu0 %v1797
    %2532 = vmatprep.subr.bf16.mxu0 %v1800
    %2533 = vmatpush1.bf16.msra.mxu0 %v1799
    %2534 = vmatprep.subr.bf16.mxu0 %v1802
    %2535 = vmatpush1.bf16.msra.mxu0 %v1801
    %2536 = vmatprep.subr.bf16.mxu0 %v1804
    %2537 = vmatpush1.bf16.msra.mxu0 %v1803
    %2538 = vmatprep.subr.bf16.mxu0 %v1806
    %2539 = vmatpush1.bf16.msra.mxu0 %v1805
    %2540 = vmatprep.subr.bf16.mxu0 %v1808
    %2541 = vmatpush1.bf16.msra.mxu0 %v1807
    %2542 = vmatprep.subr.bf16.mxu0 %v1810
    %2543 = vmatpush1.bf16.msra.mxu0 %v1809
    %2544 = vmatprep.subr.bf16.mxu0 %v1812
    %2545 = vmatpush1.bf16.msra.mxu0 %v1811
    %2546 = vmatprep.mubr.bf16.mxu0 %v500
    %2547 = vmatmul.mubr.bf16.gmra.mrb[0].mxu0 %v499
    %v2548 = vpop.f32.mrb[0].mxu0
    %v2549 = vadd.f32 %v2508, %v2548
    %v2550 = vpop.f32.mrb[0].mxu0
    %v2551 = vadd.f32 %v2510, %v2550
    %v2552 = vpop.f32.mrb[0].mxu0
    %v2553 = vpop.f32.mrb[0].mxu0
    %2554 = vdwg.mxu0
    %2555 = vmatprep.subr.bf16.mxu0 %v1814
    %2556 = vmatpush1.bf16.msra.mxu0 %v1813
    %2557 = vmatprep.subr.bf16.mxu0 %v1816
    %2558 = vmatpush1.bf16.msra.mxu0 %v1815
    %2559 = vmatprep.subr.bf16.mxu0 0
    %2560 = vmatpush1.bf16.msra.mxu0 0
    %2561 = vmatprep.subr.bf16.mxu0 0
    %2562 = vmatpush1.bf16.msra.mxu0 0
    %2563 = vmatprep.subr.bf16.mxu0 0
    %2564 = vmatpush1.bf16.msra.mxu0 0
    %2565 = vmatprep.subr.bf16.mxu0 0
    %2566 = vmatpush1.bf16.msra.mxu0 0
    %2567 = vmatprep.subr.bf16.mxu0 0
    %2568 = vmatpush1.bf16.msra.mxu0 0
    %2569 = vmatprep.subr.bf16.mxu0 0
    %2570 = vmatpush1.bf16.msra.mxu0 0
    %2571 = vmatprep.subr.bf16.mxu0 0
    %2572 = vmatpush1.bf16.msra.mxu0 0
    %2573 = vmatprep.subr.bf16.mxu0 0
    %2574 = vmatpush1.bf16.msra.mxu0 0
    %2575 = vmatprep.subr.bf16.mxu0 0
    %2576 = vmatpush1.bf16.msra.mxu0 0
    %2577 = vmatprep.subr.bf16.mxu0 0
    %2578 = vmatpush1.bf16.msra.mxu0 0
    %2579 = vmatprep.subr.bf16.mxu0 0
    %2580 = vmatpush1.bf16.msra.mxu0 0
    %2581 = vmatprep.subr.bf16.mxu0 0
    %2582 = vmatpush1.bf16.msra.mxu0 0
    %2583 = vmatprep.subr.bf16.mxu0 0
    %2584 = vmatpush1.bf16.msra.mxu0 0
    %2585 = vmatprep.subr.bf16.mxu0 0
    %2586 = vmatpush1.bf16.msra.mxu0 0
    %2587 = vmatprep.mubr.bf16.mxu0 0
    %2588 = vmatmul.mubr.bf16.gmra.mrb[0].mxu0 %v2143
    %v2589 = vpop.f32.mrb[0].mxu0
    %v2590 = vadd.f32 %v2549, %v2589
    %v2591 = vpop.f32.mrb[0].mxu0
    %v2592 = vadd.f32 %v2551, %v2591
    %v2593 = vpop.f32.mrb[0].mxu0
    %v2594 = vpop.f32.mrb[0].mxu0
    %2595 = vdwg.mxu0
    %v2596 = vmax.f32 %v2590, 0.0
    %v2597 = vmax.f32 %v2592, 0.0
    %v2598 = vpack.c.bf16 %v2596, %v2596
    %v2599 = vpack.c.bf16 %v2597, %v2597
    %v2600 = vld [vmem:[%s3] sm:$0xf]
    %v2601 = vld [vmem:[%s3 + $0x4] sm:$0xf]
    %v2602 = vld [vmem:[%s3 + $0x8] sm:$0xf]
    %v2603 = vld [vmem:[%s3 + $0xc] sm:$0xf]
    %v2604 = vld [vmem:[%s3 + $0x10] sm:$0xf]
    %v2605 = vld [vmem:[%s3 + $0x14] sm:$0xf]
    %v2606 = vld [vmem:[%s3 + $0x18] sm:$0xf]
    %v2607 = vld [vmem:[%s3 + $0x1c] sm:$0xf]
    %v2608 = vld [vmem:[%s3 + $0x20] sm:$0xf]
    %v2609 = vld [vmem:[%s3 + $0x24] sm:$0xf]
    %v2610 = vld [vmem:[%s3 + $0x28] sm:$0xf]
    %v2611 = vld [vmem:[%s3 + $0x2c] sm:$0xf]
    %v2612 = vld [vmem:[%s3 + $0x30] sm:$0xf]
    %v2613 = vld [vmem:[%s3 + $0x34] sm:$0xf]
    %v2614 = vld [vmem:[%s3 + $0x38] sm:$0xf]
    %v2615 = vld [vmem:[%s3 + $0x3c] sm:$0xf]
    %v2616 = vld [vmem:[%s3 + $0x40] sm:$0xf]
    %v2617 = vld [vmem:[%s3 + $0x44] sm:$0xf]
    %v2618 = vld [vmem:[%s3 + $0x48] sm:$0xf]
    %v2619 = vld [vmem:[%s3 + $0x4c] sm:$0xf]
    %v2620 = vld [vmem:[%s3 + $0x50] sm:$0xf]
    %v2621 = vld [vmem:[%s3 + $0x54] sm:$0xf]
    %v2622 = vld [vmem:[%s3 + $0x58] sm:$0xf]
    %v2623 = vld [vmem:[%s3 + $0x5c] sm:$0xf]
    %v2624 = vld [vmem:[%s3 + $0x60] sm:$0xf]
    %v2625 = vld [vmem:[%s3 + $0x64] sm:$0xf]
    %v2626 = vld [vmem:[%s3 + $0x68] sm:$0xf]
    %v2627 = vld [vmem:[%s3 + $0x6c] sm:$0xf]
    %v2628 = vld [vmem:[%s3 + $0x70] sm:$0xf]
    %v2629 = vld [vmem:[%s3 + $0x74] sm:$0xf]
    %v2630 = vld [vmem:[%s3 + $0x78] sm:$0xf]
    %v2631 = vld [vmem:[%s3 + $0x7c] sm:$0xf]
    %v2632 = vld [vmem:[%s4] sm:$0x1]
    %v2634 = vlaneseq
    %v2635 = vshrl.u32 %v2634, 7
    %v2636 = vsub.s32 0, %v2635
    %v2637 = vrot.slane %v2632, %v2636
    %v2671 = vunpack.c.l.b16 %v2600
    %v2672 = vunpack.c.l.b16 %v2601
    %v2673 = vunpack.c.l.b16 %v2602
    %v2674 = vunpack.c.l.b16 %v2603
    %v2675 = vunpack.c.l.b16 %v2604
    %v2676 = vunpack.c.l.b16 %v2605
    %v2677 = vunpack.c.l.b16 %v2606
    %v2678 = vunpack.c.l.b16 %v2607
    %v2679 = vunpack.c.l.b16 %v2608
    %v2680 = vunpack.c.l.b16 %v2609
    %v2681 = vunpack.c.l.b16 %v2610
    %v2682 = vunpack.c.l.b16 %v2611
    %v2683 = vunpack.c.l.b16 %v2612
    %v2684 = vunpack.c.l.b16 %v2613
    %v2685 = vunpack.c.l.b16 %v2614
    %v2686 = vunpack.c.l.b16 %v2615
    %v2687 = vunpack.c.l.b16 %v2616
    %v2688 = vunpack.c.l.b16 %v2617
    %v2689 = vunpack.c.l.b16 %v2618
    %v2690 = vunpack.c.l.b16 %v2619
    %v2691 = vunpack.c.l.b16 %v2620
    %v2692 = vunpack.c.l.b16 %v2621
    %v2693 = vunpack.c.l.b16 %v2622
    %v2694 = vunpack.c.l.b16 %v2623
    %v2695 = vunpack.c.l.b16 %v2624
    %v2696 = vunpack.c.l.b16 %v2625
    %v2697 = vunpack.c.l.b16 %v2626
    %v2698 = vunpack.c.l.b16 %v2627
    %v2699 = vunpack.c.l.b16 %v2628
    %v2700 = vunpack.c.l.b16 %v2629
    %v2701 = vunpack.c.l.b16 %v2630
    %v2702 = vunpack.c.l.b16 %v2631
    %v2703 = vpack.c.b16 %v2672, %v2671
    %v2704 = vpack.c.b16 %v2674, %v2673
    %v2705 = vpack.c.b16 %v2676, %v2675
    %v2706 = vpack.c.b16 %v2678, %v2677
    %v2707 = vpack.c.b16 %v2680, %v2679
    %v2708 = vpack.c.b16 %v2682, %v2681
    %v2709 = vpack.c.b16 %v2684, %v2683
    %v2710 = vpack.c.b16 %v2686, %v2685
    %v2711 = vpack.c.b16 %v2688, %v2687
    %v2712 = vpack.c.b16 %v2690, %v2689
    %v2713 = vpack.c.b16 %v2692, %v2691
    %v2714 = vpack.c.b16 %v2694, %v2693
    %v2715 = vpack.c.b16 %v2696, %v2695
    %v2716 = vpack.c.b16 %v2698, %v2697
    %v2717 = vpack.c.b16 %v2700, %v2699
    %v2718 = vpack.c.b16 %v2702, %v2701
    %2735 = vmatprep.subr.bf16.mxu0 0
    %2736 = vmatpush1.bf16.msra.mxu0 %v2703
    %2737 = vmatprep.subr.bf16.mxu0 0
    %2738 = vmatpush1.bf16.msra.mxu0 %v2704
    %2739 = vmatprep.subr.bf16.mxu0 0
    %2740 = vmatpush1.bf16.msra.mxu0 %v2705
    %2741 = vmatprep.subr.bf16.mxu0 0
    %2742 = vmatpush1.bf16.msra.mxu0 %v2706
    %2743 = vmatprep.subr.bf16.mxu0 0
    %2744 = vmatpush1.bf16.msra.mxu0 %v2707
    %2745 = vmatprep.subr.bf16.mxu0 0
    %2746 = vmatpush1.bf16.msra.mxu0 %v2708
    %2747 = vmatprep.subr.bf16.mxu0 0
    %2748 = vmatpush1.bf16.msra.mxu0 %v2709
    %2749 = vmatprep.subr.bf16.mxu0 0
    %2750 = vmatpush1.bf16.msra.mxu0 %v2710
    %2751 = vmatprep.subr.bf16.mxu0 0
    %2752 = vmatpush1.bf16.msra.mxu0 %v2711
    %2753 = vmatprep.subr.bf16.mxu0 0
    %2754 = vmatpush1.bf16.msra.mxu0 %v2712
    %2755 = vmatprep.subr.bf16.mxu0 0
    %2756 = vmatpush1.bf16.msra.mxu0 %v2713
    %2757 = vmatprep.subr.bf16.mxu0 0
    %2758 = vmatpush1.bf16.msra.mxu0 %v2714
    %2759 = vmatprep.subr.bf16.mxu0 0
    %2760 = vmatpush1.bf16.msra.mxu0 %v2715
    %2761 = vmatprep.subr.bf16.mxu0 0
    %2762 = vmatpush1.bf16.msra.mxu0 %v2716
    %2763 = vmatprep.subr.bf16.mxu0 0
    %2764 = vmatpush1.bf16.msra.mxu0 %v2717
    %2765 = vmatprep.subr.bf16.mxu0 0
    %2766 = vmatpush1.bf16.msra.mxu0 %v2718
    %2767 = vmatprep.mubr.bf16.mxu0 %v2599
    %2768 = vmatmul.mubr.bf16.gmra.mrb[0].mxu0 %v2598
    %v2769 = vpop.f32.mrb[0].mxu0
    %v2770 = vadd.f32 %v2637, %v2769
    %v2771 = vpop.f32.mrb[0].mxu0
    %v2772 = vpop.f32.mrb[0].mxu0
    %v2773 = vpop.f32.mrb[0].mxu0
    %2774 = vdwg.mxu0
    %2775 = vst [vmem:[#allocation2] sm:$0x3] %v2770
    // Predicated region
    $region22: #{ddqn_forward.5} parent=1 // pred_check
      _
    $region23: #{ddqn_forward.5} parent=1 // pred_check_branch
      %2777 = sbr.rel (0) target = $region25
    $region24: #{ddqn_forward.5} parent=1 // pred_region
      %s2779 = ssub.s32 32, 32
      %2780 = vsyncadd [#allocation3], %s2779
      %s2782 = sshll.u32 [#allocation2], 4
      %s2783 = int_to_ptr.vmem [resolvable:$true] %s2782
      %2785 = dma.vmem_to_hbm [thread:$0]  %s2783, 32, %s5, [#allocation3]
    $region25: #{ddqn_forward.5} parent=1 // pred_fallthru
      _
    // Predicated region
    $region26: #{ddqn_forward.5} parent=1 // pred_check
      _
    $region27: #{ddqn_forward.5} parent=1 // pred_check_branch
      %2787 = sbr.rel (0) target = $region29
    $region28: #{ddqn_forward.5} parent=1 // pred_region
      %2788 = dma.done [#allocation3], 32
    $region29: #{ddqn_forward.5} parent=1 // pred_fallthru
      _
    %2789 = vsyncpa [#allocation3], 1

</llo_original>
